<compile_context>
chip_gen: v7x
topology: tpu7x:2x2x1
jax: 0.10.0
libtpu: 0.0.40
codegen_flags: <defaults>
</compile_context>

<pallas_src>
import math

import jax
import jax.numpy as jnp
from jax.experimental import pallas as pl
from jax.experimental.pallas import tpu as pltpu

NOISE_DIM = 68 * 3   # 204
AUDIO_DIM = 768
OUT_DIM = 204
LANE = 128
SUBLANE = 8


def _round_up(x, m):
    return ((x + m - 1) // m) * m


# ------------------------- fused whole-forward kernel ------------------------

def bilstm_diffusion_pallas(prep, audio2d, noise2d, te2d, T, Bp):
    """One Pallas kernel: embeddings -> stacked BiLSTM -> output head.

    audio2d/noise2d/te2d are time-major, batch padded to Bp (multiple of 8),
    rows ordered (t, b).  Returns (T*Bp, OUT_PAD) with OUT_PAD = 256.
    """
    H = prep["t1_W"].shape[0]
    G = 4 * H                       # one direction's dense gate slab (=128 for H=32)
    n_layers = len(prep["lstm"])
    TBp = T * Bp
    outp = prep["out_W"].shape[1]

    flat_layers = [w for layer in prep["lstm"] for w in layer]   # 4 arrays / layer
    inputs = [audio2d, noise2d, te2d,
              prep["audio_W"], prep["audio_b"], prep["noise_W"], prep["noise_b"],
              *flat_layers,
              prep["out_W"], prep["out_b"]]

    def kernel(*refs):
        audio_ref, noise_ref, te_ref, wa_ref, ba_ref, wn_ref, bn_ref = refs[:7]
        layer_refs = refs[7:7 + 4 * n_layers]
        out_w_ref, out_b_ref, o_ref = refs[7 + 4 * n_layers:]

        def dot(a, b):
            return jnp.dot(a, b, preferred_element_type=jnp.float32)

        # Input embeddings (same operand structure as the reference).
        audio_emb = dot(audio_ref[...], wa_ref[...]) + ba_ref[...]     # (TBp, H)
        noise_emb = dot(noise_ref[...], wn_ref[...]) + bn_ref[...]     # (TBp, H)
        te_emb = te_ref[...]                                           # (TBp, H)

        # Static lane mask selecting the "g" (tanh) slot inside one direction's
        # dense i|f|g|o gate slab.
        lane = jax.lax.broadcasted_iota(jnp.int32, (Bp, G), 1)
        g_slot = (lane >= 2 * H) & (lane < 3 * H)

        hf_all = None
        hb_all = None
        for l in range(n_layers):
            wih_ref, b_ref, whhf_ref, whhb_ref = layer_refs[4 * l:4 * (l + 1)]

            # Hoisted input projection for all T steps and both directions,
            # done as row-block matmuls (all slices 8-sublane aligned).
            if l == 0:
                gx = (dot(audio_emb, wih_ref[0:H, :])
                      + dot(te_emb, wih_ref[H:2 * H, :])
                      + dot(noise_emb, wih_ref[2 * H:3 * H, :])
                      + b_ref[...])                                    # (TBp, 2G)
            else:
                gx = (dot(hf_all, wih_ref[0:H, :])
                      + dot(hb_all, wih_ref[H:2 * H, :])
                      + b_ref[...])                                    # (TBp, 2G)

            whh_f = whhf_ref[...]                                      # (H, G)
            whh_b = whhb_ref[...]                                      # (H, G)

            zero = jnp.zeros((Bp, H), jnp.float32)
            h_f = zero
            c_f = zero
            h_b = zero
            c_b = zero
            hf_at = [None] * T
            hb_at = [None] * T

            # Fully-unrolled time recurrence; the backward cell reads its gates
            # at T-1-t and emits its output at T-1-t (reversed-sequence LSTM).
            for t in range(T):
                rec_f = dot(h_f, whh_f)                                # (Bp, G)
                rec_b = dot(h_b, whh_b)                                # (Bp, G)
                pre_f = gx[t * Bp:(t + 1) * Bp, 0:G] + rec_f
                pre_b = gx[(T - 1 - t) * Bp:(T - t) * Bp, G:2 * G] + rec_b

                act_f = jnp.where(g_slot, jnp.tanh(pre_f), jax.nn.sigmoid(pre_f))
                act_b = jnp.where(g_slot, jnp.tanh(pre_b), jax.nn.sigmoid(pre_b))

                c_f = act_f[:, H:2 * H] * c_f + act_f[:, 0:H] * act_f[:, 2 * H:3 * H]
                c_b = act_b[:, H:2 * H] * c_b + act_b[:, 0:H] * act_b[:, 2 * H:3 * H]
                h_f = act_f[:, 3 * H:4 * H] * jnp.tanh(c_f)
                h_b = act_b[:, 3 * H:4 * H] * jnp.tanh(c_b)

                hf_at[t] = h_f
                hb_at[T - 1 - t] = h_b

            hf_all = jnp.concatenate(hf_at, axis=0)                    # (TBp, H)
            hb_all = jnp.concatenate(hb_at, axis=0)                    # (TBp, H)

        # Output head (lane-dense 256-wide store).
        o_ref[...] = (dot(hf_all, out_w_ref[0:H, :])
                      + dot(hb_all, out_w_ref[H:2 * H, :])
                      + out_b_ref[...])

    return pl.pallas_call(
        kernel,
        out_shape=jax.ShapeDtypeStruct((TBp, outp), jnp.float32),
        grid=(1,),
        in_specs=[pl.BlockSpec(x.shape, lambda i: (0, 0)) for x in inputs],
        out_specs=pl.BlockSpec((TBp, outp), lambda i: (0, 0)),
        compiler_params=pltpu.CompilerParams(
            dimension_semantics=("arbitrary",)),
    )(*inputs)


# --------------------- weight preparation (once, outside jit) ----------------

def prepare_params(params):
    """Reformat weights once at load time (review item 2): dense gate packing,
    per-direction W_hh, lane-padded output head, 2-D biases."""
    H = params["t1_W"].shape[0]
    G = 4 * H
    layers = []
    for (wih_f, whh_f, b_f, wih_b, whh_b, b_b) in params["lstm"]:
        wih_all = jnp.concatenate([wih_f, wih_b], axis=1)              # (D, 2G)
        b_all = jnp.concatenate([b_f, b_b]).reshape(1, 2 * G)
        layers.append((wih_all, b_all, whh_f, whh_b))
    outp = _round_up(OUT_DIM, LANE)
    return {
        "audio_W": params["audio_W"],
        "audio_b": params["audio_b"].reshape(1, -1),
        "noise_W": params["noise_W"],
        "noise_b": params["noise_b"].reshape(1, -1),
        "t1_W": params["t1_W"], "t1_b": params["t1_b"],
        "t2_W": params["t2_W"], "t2_b": params["t2_b"],
        "lstm": layers,
        "out_W": jnp.pad(params["out_W"], ((0, 0), (0, outp - OUT_DIM))),
        "out_b": jnp.pad(params["out_b"], (0, outp - OUT_DIM)).reshape(1, outp),
    }


# --------------------------- pure-JAX reference -------------------------------

def linear_ref(x, w, b, act=None):
    y = x @ w + b
    if act == "silu":
        y = y * jax.nn.sigmoid(y)
    return y


def lstm_dir_ref(x_tbd, w_ih, w_hh, b):
    T, B, _ = x_tbd.shape
    H = w_hh.shape[0]

    def step(carry, x_t):
        h, c = carry
        gates = x_t @ w_ih + h @ w_hh + b
        i = jax.nn.sigmoid(gates[:, :H])
        f = jax.nn.sigmoid(gates[:, H:2 * H])
        g = jnp.tanh(gates[:, 2 * H:3 * H])
        o = jax.nn.sigmoid(gates[:, 3 * H:])
        c = f * c + i * g
        h = o * jnp.tanh(c)
        return (h, c), h

    (_, _), hs = jax.lax.scan(
        step, (jnp.zeros((B, H), jnp.float32), jnp.zeros((B, H), jnp.float32)),
        x_tbd)
    return hs


# ------------------------------ model forward --------------------------------

def positional_encoding(positions, d_model):
    """Rows pe[positions] of the PyTorch PositionalEncoding buffer; (B, d_model)."""
    pos = positions.astype(jnp.float32)[:, None]
    div = jnp.exp(jnp.arange(0, d_model, 2, dtype=jnp.float32)
                  * (-math.log(10000.0) / d_model))
    ang = pos * div[None, :]
    pe = jnp.zeros((positions.shape[0], d_model), jnp.float32)
    pe = pe.at[:, 0::2].set(jnp.sin(ang))
    pe = pe.at[:, 1::2].set(jnp.cos(ang))
    return pe


def forward_pallas(prep, noise_lands, audio, template, t):
    B, T, _ = noise_lands.shape
    H = prep["t1_W"].shape[0]
    Bp = _round_up(B, SUBLANE)     # sublane-align the batch inside the kernel

    # Timestep embedding MLP: tiny (B, H) work, stays in XLA (per perf review).
    pe_t = positional_encoding(t, H)
    te = pe_t @ prep["t1_W"] + prep["t1_b"]
    te = te * jax.nn.sigmoid(te)                 # SiLU
    te = te @ prep["t2_W"] + prep["t2_b"]        # (B, H)

    pad3 = ((0, Bp - B), (0, 0), (0, 0))
    audio2d = jnp.transpose(jnp.pad(audio, pad3), (1, 0, 2)).reshape(T * Bp, AUDIO_DIM)
    noise2d = jnp.transpose(jnp.pad(noise_lands, pad3), (1, 0, 2)).reshape(T * Bp, NOISE_DIM)
    te2d = jnp.broadcast_to(
        jnp.pad(te, ((0, Bp - B), (0, 0)))[None], (T, Bp, H)).reshape(T * Bp, H)

    y = bilstm_diffusion_pallas(prep, audio2d, noise2d, te2d, T, Bp)   # (T*Bp, 256)
    y = y.reshape(T, Bp, -1)[:, :B, :OUT_DIM]
    return jnp.transpose(y, (1, 0, 2)) + template


def forward_ref(params, noise_lands, audio, template, t):
    B, T, _ = noise_lands.shape
    H = params["t1_W"].shape[0]

    noise_emb = linear_ref(noise_lands.reshape(B * T, NOISE_DIM),
                           params["noise_W"], params["noise_b"]).reshape(B, T, H)
    audio_emb = linear_ref(audio.reshape(B * T, AUDIO_DIM),
                           params["audio_W"], params["audio_b"]).reshape(B, T, H)

    pe_t = positional_encoding(t, H)
    te = linear_ref(pe_t, params["t1_W"], params["t1_b"], act="silu")
    te = linear_ref(te, params["t2_W"], params["t2_b"])
    time_emb = jnp.broadcast_to(te[:, None, :], (B, T, H))

    x = jnp.concatenate([audio_emb, time_emb, noise_emb], axis=2)
    h = jnp.transpose(x, (1, 0, 2))
    for (wih_f, whh_f, b_f, wih_b, whh_b, b_b) in params["lstm"]:
        fwd = lstm_dir_ref(h, wih_f, whh_f, b_f)
        bwd = jnp.flip(lstm_dir_ref(jnp.flip(h, axis=0), wih_b, whh_b, b_b), axis=0)
        h = jnp.concatenate([fwd, bwd], axis=-1)
    lstm_out = jnp.transpose(h, (1, 0, 2)).reshape(B * T, 2 * H)
    out = lstm_out @ params["out_W"] + params["out_b"] + template.reshape(B * T, OUT_DIM)
    return out.reshape(B, T, OUT_DIM)


# ------------------------------ param init -----------------------------------

def init_params(key, hidden_size, n_layers):
    H = hidden_size
    ks = iter(jax.random.split(key, 16 + 8 * n_layers))

    def u(k, shape, scale):
        return jax.random.uniform(k, shape, jnp.float32, -scale, scale)

    p = {}
    p["noise_W"] = u(next(ks), (NOISE_DIM, H), 1 / math.sqrt(NOISE_DIM))
    p["noise_b"] = u(next(ks), (H,), 1 / math.sqrt(NOISE_DIM))
    p["audio_W"] = u(next(ks), (AUDIO_DIM, H), 1 / math.sqrt(AUDIO_DIM))
    p["audio_b"] = u(next(ks), (H,), 1 / math.sqrt(AUDIO_DIM))
    p["t1_W"] = u(next(ks), (H, H), 1 / math.sqrt(H))
    p["t1_b"] = u(next(ks), (H,), 1 / math.sqrt(H))
    p["t2_W"] = u(next(ks), (H, H), 1 / math.sqrt(H))
    p["t2_b"] = u(next(ks), (H,), 1 / math.sqrt(H))

    s = 1 / math.sqrt(H)
    lstm = []
    for layer in range(n_layers):
        D = 3 * H if layer == 0 else 2 * H
        layer_params = []
        for _direction in range(2):
            w_ih = u(next(ks), (D, 4 * H), s)
            w_hh = u(next(ks), (H, 4 * H), s)
            # b_ih + b_hh combined (PyTorch keeps them separate; sum is equivalent)
            b = u(next(ks), (4 * H,), s) + u(next(ks), (4 * H,), s)
            layer_params += [w_ih, w_hh, b]
        lstm.append(tuple(layer_params))
    p["lstm"] = lstm

    # NOTE: the PyTorch __init__ zero-inits output_mapper (output == template at
    # init). Use small nonzero deterministic values here so the output matmul
    # path is actually exercised and checkable.
    p["out_W"] = u(next(ks), (2 * H, OUT_DIM), 0.05)
    p["out_b"] = u(next(ks), (OUT_DIM,), 0.05)
    return p


# ---------------------------------- main --------------------------------------

if __name__ == "__main__":
    hidden_size, n_layers = 32, 2
    B, T = 2, 8

    key = jax.random.PRNGKey(0)
    kp, k1, k2, k3 = jax.random.split(key, 4)
    params = init_params(kp, hidden_size, n_layers)
    prep = prepare_params(params)        # weight reformat ONCE, outside jit

    noise_lands = jax.random.normal(k1, (B, T, NOISE_DIM), jnp.float32)
    audio = jax.random.normal(k2, (B, T, AUDIO_DIM), jnp.float32)
    template = jax.random.normal(k3, (B, T, OUT_DIM), jnp.float32)
    t = jnp.array([5, 17], dtype=jnp.int32)

    out = jax.block_until_ready(
        jax.jit(forward_pallas)(prep, noise_lands, audio, template, t))
    ref = jax.block_until_ready(
        jax.jit(forward_ref)(params, noise_lands, audio, template, t))

    assert out.shape == (B, T, OUT_DIM), out.shape
    max_err = float(jnp.max(jnp.abs(out - ref)))
    assert jnp.allclose(out, ref, atol=1e-4, rtol=1e-4), f"max_err={max_err}"
    print("KERNEL_OK")
</pallas_src>

<mosaic_0001>
module attributes {stable_mosaic.version = 11 : i64} {
  func.func @kernel(%arg0: i32, %arg1: memref<64x768xf32, #tpu.memory_space<vmem>>, %arg2: memref<64x204xf32, #tpu.memory_space<vmem>>, %arg3: memref<64x32xf32, #tpu.memory_space<vmem>>, %arg4: memref<768x32xf32, #tpu.memory_space<vmem>>, %arg5: memref<1x32xf32, #tpu.memory_space<vmem>>, %arg6: memref<204x32xf32, #tpu.memory_space<vmem>>, %arg7: memref<1x32xf32, #tpu.memory_space<vmem>>, %arg8: memref<96x256xf32, #tpu.memory_space<vmem>>, %arg9: memref<1x256xf32, #tpu.memory_space<vmem>>, %arg10: memref<32x128xf32, #tpu.memory_space<vmem>>, %arg11: memref<32x128xf32, #tpu.memory_space<vmem>>, %arg12: memref<64x256xf32, #tpu.memory_space<vmem>>, %arg13: memref<1x256xf32, #tpu.memory_space<vmem>>, %arg14: memref<32x128xf32, #tpu.memory_space<vmem>>, %arg15: memref<32x128xf32, #tpu.memory_space<vmem>>, %arg16: memref<64x256xf32, #tpu.memory_space<vmem>>, %arg17: memref<1x256xf32, #tpu.memory_space<vmem>>, %arg18: memref<64x256xf32, #tpu.memory_space<vmem>>) attributes {dimension_semantics = [#tpu.dimension_semantics<arbitrary>], iteration_bounds = array<i64: 1>, scalar_prefetch = 0 : i64, scratch_operands = 0 : i64, tpu.core_type = #tpu.core_type<tc>, window_params = [{pipeline_mode = #tpu.pipeline_mode<synchronous>, transform_indices = @transform_0, window_bounds = array<i64: 64, 768>}, {pipeline_mode = #tpu.pipeline_mode<synchronous>, transform_indices = @transform_1, window_bounds = array<i64: 64, 204>}, {pipeline_mode = #tpu.pipeline_mode<synchronous>, transform_indices = @transform_2, window_bounds = array<i64: 64, 32>}, {pipeline_mode = #tpu.pipeline_mode<synchronous>, transform_indices = @transform_3, window_bounds = array<i64: 768, 32>}, {pipeline_mode = #tpu.pipeline_mode<synchronous>, transform_indices = @transform_4, window_bounds = array<i64: 1, 32>}, {pipeline_mode = #tpu.pipeline_mode<synchronous>, transform_indices = @transform_5, window_bounds = array<i64: 204, 32>}, {pipeline_mode = #tpu.pipeline_mode<synchronous>, transform_indices = @transform_6, window_bounds = array<i64: 1, 32>}, {pipeline_mode = #tpu.pipeline_mode<synchronous>, transform_indices = @transform_7, window_bounds = array<i64: 96, 256>}, {pipeline_mode = #tpu.pipeline_mode<synchronous>, transform_indices = @transform_8, window_bounds = array<i64: 1, 256>}, {pipeline_mode = #tpu.pipeline_mode<synchronous>, transform_indices = @transform_9, window_bounds = array<i64: 32, 128>}, {pipeline_mode = #tpu.pipeline_mode<synchronous>, transform_indices = @transform_10, window_bounds = array<i64: 32, 128>}, {pipeline_mode = #tpu.pipeline_mode<synchronous>, transform_indices = @transform_11, window_bounds = array<i64: 64, 256>}, {pipeline_mode = #tpu.pipeline_mode<synchronous>, transform_indices = @transform_12, window_bounds = array<i64: 1, 256>}, {pipeline_mode = #tpu.pipeline_mode<synchronous>, transform_indices = @transform_13, window_bounds = array<i64: 32, 128>}, {pipeline_mode = #tpu.pipeline_mode<synchronous>, transform_indices = @transform_14, window_bounds = array<i64: 32, 128>}, {pipeline_mode = #tpu.pipeline_mode<synchronous>, transform_indices = @transform_15, window_bounds = array<i64: 64, 256>}, {pipeline_mode = #tpu.pipeline_mode<synchronous>, transform_indices = @transform_16, window_bounds = array<i64: 1, 256>}, {pipeline_mode = #tpu.pipeline_mode<synchronous>, transform_indices = @transform_17, window_bounds = array<i64: 64, 256>}]} {
    %c0 = arith.constant 0 : index
    %c0_0 = arith.constant 0 : index
    %0 = vector.load %arg1[%c0, %c0_0] : memref<64x768xf32, #tpu.memory_space<vmem>>, vector<64x768xf32>
    %c0_1 = arith.constant 0 : index
    %c0_2 = arith.constant 0 : index
    %1 = vector.load %arg4[%c0_1, %c0_2] : memref<768x32xf32, #tpu.memory_space<vmem>>, vector<768x32xf32>
    %cst = arith.constant dense<0.000000e+00> : vector<64x32xf32>
    %2 = tpu.matmul %0, %1, %cst {dimension_numbers = #tpu.dot_dimension_numbers<[1], [0], [0], [1], [0, 0, 1, 1], [], []>} : vector<64x768xf32>, vector<768x32xf32>, vector<64x32xf32> -> vector<64x32xf32>
    %c0_3 = arith.constant 0 : index
    %c0_4 = arith.constant 0 : index
    %3 = vector.load %arg5[%c0_3, %c0_4] : memref<1x32xf32, #tpu.memory_space<vmem>>, vector<1x32xf32>
    %4 = vector.broadcast %3 : vector<1x32xf32> to vector<64x32xf32>
    %5 = arith.addf %2, %4 : vector<64x32xf32>
    %c0_5 = arith.constant 0 : index
    %c0_6 = arith.constant 0 : index
    %6 = vector.load %arg2[%c0_5, %c0_6] : memref<64x204xf32, #tpu.memory_space<vmem>>, vector<64x204xf32>
    %c0_7 = arith.constant 0 : index
    %c0_8 = arith.constant 0 : index
    %7 = vector.load %arg6[%c0_7, %c0_8] : memref<204x32xf32, #tpu.memory_space<vmem>>, vector<204x32xf32>
    %cst_9 = arith.constant dense<0.000000e+00> : vector<64x32xf32>
    %8 = tpu.matmul %6, %7, %cst_9 {dimension_numbers = #tpu.dot_dimension_numbers<[1], [0], [0], [1], [0, 0, 1, 1], [], []>} : vector<64x204xf32>, vector<204x32xf32>, vector<64x32xf32> -> vector<64x32xf32>
    %c0_10 = arith.constant 0 : index
    %c0_11 = arith.constant 0 : index
    %9 = vector.load %arg7[%c0_10, %c0_11] : memref<1x32xf32, #tpu.memory_space<vmem>>, vector<1x32xf32>
    %10 = vector.broadcast %9 : vector<1x32xf32> to vector<64x32xf32>
    %11 = arith.addf %8, %10 : vector<64x32xf32>
    %c0_12 = arith.constant 0 : index
    %c0_13 = arith.constant 0 : index
    %12 = vector.load %arg3[%c0_12, %c0_13] : memref<64x32xf32, #tpu.memory_space<vmem>>, vector<64x32xf32>
    %13 = tpu.iota {dimensions = array<i32: 1>} : vector<8x128xi32>
    %c64_i32 = arith.constant 64 : i32
    %14 = vector.broadcast %c64_i32 : i32 to vector<8x128xi32>
    %15 = arith.cmpi sge, %13, %14 : vector<8x128xi32>
    %c96_i32 = arith.constant 96 : i32
    %16 = vector.broadcast %c96_i32 : i32 to vector<8x128xi32>
    %17 = arith.cmpi slt, %13, %16 : vector<8x128xi32>
    %18 = arith.andi %15, %17 : vector<8x128xi1>
    %c0_14 = arith.constant 0 : index
    %c0_15 = arith.constant 0 : index
    %19 = vector.load %arg8[%c0_14, %c0_15] : memref<96x256xf32, #tpu.memory_space<vmem>>, vector<32x256xf32>
    %cst_16 = arith.constant dense<0.000000e+00> : vector<64x256xf32>
    %20 = tpu.matmul %5, %19, %cst_16 {dimension_numbers = #tpu.dot_dimension_numbers<[1], [0], [0], [1], [0, 0, 1, 1], [], []>} : vector<64x32xf32>, vector<32x256xf32>, vector<64x256xf32> -> vector<64x256xf32>
    %c32 = arith.constant 32 : index
    %c0_17 = arith.constant 0 : index
    %21 = vector.load %arg8[%c32, %c0_17] : memref<96x256xf32, #tpu.memory_space<vmem>>, vector<32x256xf32>
    %cst_18 = arith.constant dense<0.000000e+00> : vector<64x256xf32>
    %22 = tpu.matmul %12, %21, %cst_18 {dimension_numbers = #tpu.dot_dimension_numbers<[1], [0], [0], [1], [0, 0, 1, 1], [], []>} : vector<64x32xf32>, vector<32x256xf32>, vector<64x256xf32> -> vector<64x256xf32>
    %23 = arith.addf %20, %22 : vector<64x256xf32>
    %c64 = arith.constant 64 : index
    %c0_19 = arith.constant 0 : index
    %24 = vector.load %arg8[%c64, %c0_19] : memref<96x256xf32, #tpu.memory_space<vmem>>, vector<32x256xf32>
    %cst_20 = arith.constant dense<0.000000e+00> : vector<64x256xf32>
    %25 = tpu.matmul %11, %24, %cst_20 {dimension_numbers = #tpu.dot_dimension_numbers<[1], [0], [0], [1], [0, 0, 1, 1], [], []>} : vector<64x32xf32>, vector<32x256xf32>, vector<64x256xf32> -> vector<64x256xf32>
    %26 = arith.addf %23, %25 : vector<64x256xf32>
    %c0_21 = arith.constant 0 : index
    %c0_22 = arith.constant 0 : index
    %27 = vector.load %arg9[%c0_21, %c0_22] : memref<1x256xf32, #tpu.memory_space<vmem>>, vector<1x256xf32>
    %28 = vector.broadcast %27 : vector<1x256xf32> to vector<64x256xf32>
    %29 = arith.addf %26, %28 : vector<64x256xf32>
    %c0_23 = arith.constant 0 : index
    %c0_24 = arith.constant 0 : index
    %30 = vector.load %arg10[%c0_23, %c0_24] : memref<32x128xf32, #tpu.memory_space<vmem>>, vector<32x128xf32>
    %c0_25 = arith.constant 0 : index
    %c0_26 = arith.constant 0 : index
    %31 = vector.load %arg11[%c0_25, %c0_26] : memref<32x128xf32, #tpu.memory_space<vmem>>, vector<32x128xf32>
    %cst_27 = arith.constant 0.000000e+00 : f32
    %32 = vector.broadcast %cst_27 : f32 to vector<8x32xf32>
    %cst_28 = arith.constant dense<0.000000e+00> : vector<8x128xf32>
    %33 = tpu.matmul %32, %30, %cst_28 {dimension_numbers = #tpu.dot_dimension_numbers<[1], [0], [0], [1], [0, 0, 1, 1], [], []>} : vector<8x32xf32>, vector<32x128xf32>, vector<8x128xf32> -> vector<8x128xf32>
    %cst_29 = arith.constant dense<0.000000e+00> : vector<8x128xf32>
    %34 = tpu.matmul %32, %31, %cst_29 {dimension_numbers = #tpu.dot_dimension_numbers<[1], [0], [0], [1], [0, 0, 1, 1], [], []>} : vector<8x32xf32>, vector<32x128xf32>, vector<8x128xf32> -> vector<8x128xf32>
    %35 = vector.extract_strided_slice %29 {offsets = [0, 0], sizes = [8, 128], strides = [1, 1]} : vector<64x256xf32> to vector<8x128xf32>
    %36 = arith.addf %35, %33 : vector<8x128xf32>
    %37 = vector.extract_strided_slice %29 {offsets = [56, 128], sizes = [8, 128], strides = [1, 1]} : vector<64x256xf32> to vector<8x128xf32>
    %38 = arith.addf %37, %34 : vector<8x128xf32>
    %39 = math.tanh %36 : vector<8x128xf32>
    %40 = arith.negf %36 : vector<8x128xf32>
    %41 = math.exp %40 : vector<8x128xf32>
    %cst_30 = arith.constant 1.000000e+00 : f32
    %42 = vector.broadcast %cst_30 : f32 to vector<8x128xf32>
    %43 = arith.addf %42, %41 : vector<8x128xf32>
    %44 = arith.divf %42, %43 : vector<8x128xf32>
    %45 = arith.select %18, %39, %44 : vector<8x128xi1>, vector<8x128xf32>
    %46 = math.tanh %38 : vector<8x128xf32>
    %47 = arith.negf %38 : vector<8x128xf32>
    %48 = math.exp %47 : vector<8x128xf32>
    %cst_31 = arith.constant 1.000000e+00 : f32
    %49 = vector.broadcast %cst_31 : f32 to vector<8x128xf32>
    %50 = arith.addf %49, %48 : vector<8x128xf32>
    %51 = arith.divf %49, %50 : vector<8x128xf32>
    %52 = arith.select %18, %46, %51 : vector<8x128xi1>, vector<8x128xf32>
    %53 = vector.extract_strided_slice %45 {offsets = [0, 32], sizes = [8, 32], strides = [1, 1]} : vector<8x128xf32> to vector<8x32xf32>
    %54 = arith.mulf %53, %32 : vector<8x32xf32>
    %55 = vector.extract_strided_slice %45 {offsets = [0, 0], sizes = [8, 32], strides = [1, 1]} : vector<8x128xf32> to vector<8x32xf32>
    %56 = vector.extract_strided_slice %45 {offsets = [0, 64], sizes = [8, 32], strides = [1, 1]} : vector<8x128xf32> to vector<8x32xf32>
    %57 = arith.mulf %55, %56 : vector<8x32xf32>
    %58 = arith.addf %54, %57 : vector<8x32xf32>
    %59 = vector.extract_strided_slice %52 {offsets = [0, 32], sizes = [8, 32], strides = [1, 1]} : vector<8x128xf32> to vector<8x32xf32>
    %60 = arith.mulf %59, %32 : vector<8x32xf32>
    %61 = vector.extract_strided_slice %52 {offsets = [0, 0], sizes = [8, 32], strides = [1, 1]} : vector<8x128xf32> to vector<8x32xf32>
    %62 = vector.extract_strided_slice %52 {offsets = [0, 64], sizes = [8, 32], strides = [1, 1]} : vector<8x128xf32> to vector<8x32xf32>
    %63 = arith.mulf %61, %62 : vector<8x32xf32>
    %64 = arith.addf %60, %63 : vector<8x32xf32>
    %65 = vector.extract_strided_slice %45 {offsets = [0, 96], sizes = [8, 32], strides = [1, 1]} : vector<8x128xf32> to vector<8x32xf32>
    %66 = math.tanh %58 : vector<8x32xf32>
    %67 = arith.mulf %65, %66 : vector<8x32xf32>
    %68 = vector.extract_strided_slice %52 {offsets = [0, 96], sizes = [8, 32], strides = [1, 1]} : vector<8x128xf32> to vector<8x32xf32>
    %69 = math.tanh %64 : vector<8x32xf32>
    %70 = arith.mulf %68, %69 : vector<8x32xf32>
    %cst_32 = arith.constant dense<0.000000e+00> : vector<8x128xf32>
    %71 = tpu.matmul %67, %30, %cst_32 {dimension_numbers = #tpu.dot_dimension_numbers<[1], [0], [0], [1], [0, 0, 1, 1], [], []>} : vector<8x32xf32>, vector<32x128xf32>, vector<8x128xf32> -> vector<8x128xf32>
    %cst_33 = arith.constant dense<0.000000e+00> : vector<8x128xf32>
    %72 = tpu.matmul %70, %31, %cst_33 {dimension_numbers = #tpu.dot_dimension_numbers<[1], [0], [0], [1], [0, 0, 1, 1], [], []>} : vector<8x32xf32>, vector<32x128xf32>, vector<8x128xf32> -> vector<8x128xf32>
    %73 = vector.extract_strided_slice %29 {offsets = [8, 0], sizes = [8, 128], strides = [1, 1]} : vector<64x256xf32> to vector<8x128xf32>
    %74 = arith.addf %73, %71 : vector<8x128xf32>
    %75 = vector.extract_strided_slice %29 {offsets = [48, 128], sizes = [8, 128], strides = [1, 1]} : vector<64x256xf32> to vector<8x128xf32>
    %76 = arith.addf %75, %72 : vector<8x128xf32>
    %77 = math.tanh %74 : vector<8x128xf32>
    %78 = arith.negf %74 : vector<8x128xf32>
    %79 = math.exp %78 : vector<8x128xf32>
    %cst_34 = arith.constant 1.000000e+00 : f32
    %80 = vector.broadcast %cst_34 : f32 to vector<8x128xf32>
    %81 = arith.addf %80, %79 : vector<8x128xf32>
    %82 = arith.divf %80, %81 : vector<8x128xf32>
    %83 = arith.select %18, %77, %82 : vector<8x128xi1>, vector<8x128xf32>
    %84 = math.tanh %76 : vector<8x128xf32>
    %85 = arith.negf %76 : vector<8x128xf32>
    %86 = math.exp %85 : vector<8x128xf32>
    %cst_35 = arith.constant 1.000000e+00 : f32
    %87 = vector.broadcast %cst_35 : f32 to vector<8x128xf32>
    %88 = arith.addf %87, %86 : vector<8x128xf32>
    %89 = arith.divf %87, %88 : vector<8x128xf32>
    %90 = arith.select %18, %84, %89 : vector<8x128xi1>, vector<8x128xf32>
    %91 = vector.extract_strided_slice %83 {offsets = [0, 32], sizes = [8, 32], strides = [1, 1]} : vector<8x128xf32> to vector<8x32xf32>
    %92 = arith.mulf %91, %58 : vector<8x32xf32>
    %93 = vector.extract_strided_slice %83 {offsets = [0, 0], sizes = [8, 32], strides = [1, 1]} : vector<8x128xf32> to vector<8x32xf32>
    %94 = vector.extract_strided_slice %83 {offsets = [0, 64], sizes = [8, 32], strides = [1, 1]} : vector<8x128xf32> to vector<8x32xf32>
    %95 = arith.mulf %93, %94 : vector<8x32xf32>
    %96 = arith.addf %92, %95 : vector<8x32xf32>
    %97 = vector.extract_strided_slice %90 {offsets = [0, 32], sizes = [8, 32], strides = [1, 1]} : vector<8x128xf32> to vector<8x32xf32>
    %98 = arith.mulf %97, %64 : vector<8x32xf32>
    %99 = vector.extract_strided_slice %90 {offsets = [0, 0], sizes = [8, 32], strides = [1, 1]} : vector<8x128xf32> to vector<8x32xf32>
    %100 = vector.extract_strided_slice %90 {offsets = [0, 64], sizes = [8, 32], strides = [1, 1]} : vector<8x128xf32> to vector<8x32xf32>
    %101 = arith.mulf %99, %100 : vector<8x32xf32>
    %102 = arith.addf %98, %101 : vector<8x32xf32>
    %103 = vector.extract_strided_slice %83 {offsets = [0, 96], sizes = [8, 32], strides = [1, 1]} : vector<8x128xf32> to vector<8x32xf32>
    %104 = math.tanh %96 : vector<8x32xf32>
    %105 = arith.mulf %103, %104 : vector<8x32xf32>
    %106 = vector.extract_strided_slice %90 {offsets = [0, 96], sizes = [8, 32], strides = [1, 1]} : vector<8x128xf32> to vector<8x32xf32>
    %107 = math.tanh %102 : vector<8x32xf32>
    %108 = arith.mulf %106, %107 : vector<8x32xf32>
    %cst_36 = arith.constant dense<0.000000e+00> : vector<8x128xf32>
    %109 = tpu.matmul %105, %30, %cst_36 {dimension_numbers = #tpu.dot_dimension_numbers<[1], [0], [0], [1], [0, 0, 1, 1], [], []>} : vector<8x32xf32>, vector<32x128xf32>, vector<8x128xf32> -> vector<8x128xf32>
    %cst_37 = arith.constant dense<0.000000e+00> : vector<8x128xf32>
    %110 = tpu.matmul %108, %31, %cst_37 {dimension_numbers = #tpu.dot_dimension_numbers<[1], [0], [0], [1], [0, 0, 1, 1], [], []>} : vector<8x32xf32>, vector<32x128xf32>, vector<8x128xf32> -> vector<8x128xf32>
    %111 = vector.extract_strided_slice %29 {offsets = [16, 0], sizes = [8, 128], strides = [1, 1]} : vector<64x256xf32> to vector<8x128xf32>
    %112 = arith.addf %111, %109 : vector<8x128xf32>
    %113 = vector.extract_strided_slice %29 {offsets = [40, 128], sizes = [8, 128], strides = [1, 1]} : vector<64x256xf32> to vector<8x128xf32>
    %114 = arith.addf %113, %110 : vector<8x128xf32>
    %115 = math.tanh %112 : vector<8x128xf32>
    %116 = arith.negf %112 : vector<8x128xf32>
    %117 = math.exp %116 : vector<8x128xf32>
    %cst_38 = arith.constant 1.000000e+00 : f32
    %118 = vector.broadcast %cst_38 : f32 to vector<8x128xf32>
    %119 = arith.addf %118, %117 : vector<8x128xf32>
    %120 = arith.divf %118, %119 : vector<8x128xf32>
    %121 = arith.select %18, %115, %120 : vector<8x128xi1>, vector<8x128xf32>
    %122 = math.tanh %114 : vector<8x128xf32>
    %123 = arith.negf %114 : vector<8x128xf32>
    %124 = math.exp %123 : vector<8x128xf32>
    %cst_39 = arith.constant 1.000000e+00 : f32
    %125 = vector.broadcast %cst_39 : f32 to vector<8x128xf32>
    %126 = arith.addf %125, %124 : vector<8x128xf32>
    %127 = arith.divf %125, %126 : vector<8x128xf32>
    %128 = arith.select %18, %122, %127 : vector<8x128xi1>, vector<8x128xf32>
    %129 = vector.extract_strided_slice %121 {offsets = [0, 32], sizes = [8, 32], strides = [1, 1]} : vector<8x128xf32> to vector<8x32xf32>
    %130 = arith.mulf %129, %96 : vector<8x32xf32>
    %131 = vector.extract_strided_slice %121 {offsets = [0, 0], sizes = [8, 32], strides = [1, 1]} : vector<8x128xf32> to vector<8x32xf32>
    %132 = vector.extract_strided_slice %121 {offsets = [0, 64], sizes = [8, 32], strides = [1, 1]} : vector<8x128xf32> to vector<8x32xf32>
    %133 = arith.mulf %131, %132 : vector<8x32xf32>
    %134 = arith.addf %130, %133 : vector<8x32xf32>
    %135 = vector.extract_strided_slice %128 {offsets = [0, 32], sizes = [8, 32], strides = [1, 1]} : vector<8x128xf32> to vector<8x32xf32>
    %136 = arith.mulf %135, %102 : vector<8x32xf32>
    %137 = vector.extract_strided_slice %128 {offsets = [0, 0], sizes = [8, 32], strides = [1, 1]} : vector<8x128xf32> to vector<8x32xf32>
    %138 = vector.extract_strided_slice %128 {offsets = [0, 64], sizes = [8, 32], strides = [1, 1]} : vector<8x128xf32> to vector<8x32xf32>
    %139 = arith.mulf %137, %138 : vector<8x32xf32>
    %140 = arith.addf %136, %139 : vector<8x32xf32>
    %141 = vector.extract_strided_slice %121 {offsets = [0, 96], sizes = [8, 32], strides = [1, 1]} : vector<8x128xf32> to vector<8x32xf32>
    %142 = math.tanh %134 : vector<8x32xf32>
    %143 = arith.mulf %141, %142 : vector<8x32xf32>
    %144 = vector.extract_strided_slice %128 {offsets = [0, 96], sizes = [8, 32], strides = [1, 1]} : vector<8x128xf32> to vector<8x32xf32>
    %145 = math.tanh %140 : vector<8x32xf32>
    %146 = arith.mulf %144, %145 : vector<8x32xf32>
    %cst_40 = arith.constant dense<0.000000e+00> : vector<8x128xf32>
    %147 = tpu.matmul %143, %30, %cst_40 {dimension_numbers = #tpu.dot_dimension_numbers<[1], [0], [0], [1], [0, 0, 1, 1], [], []>} : vector<8x32xf32>, vector<32x128xf32>, vector<8x128xf32> -> vector<8x128xf32>
    %cst_41 = arith.constant dense<0.000000e+00> : vector<8x128xf32>
    %148 = tpu.matmul %146, %31, %cst_41 {dimension_numbers = #tpu.dot_dimension_numbers<[1], [0], [0], [1], [0, 0, 1, 1], [], []>} : vector<8x32xf32>, vector<32x128xf32>, vector<8x128xf32> -> vector<8x128xf32>
    %149 = vector.extract_strided_slice %29 {offsets = [24, 0], sizes = [8, 128], strides = [1, 1]} : vector<64x256xf32> to vector<8x128xf32>
    %150 = arith.addf %149, %147 : vector<8x128xf32>
    %151 = vector.extract_strided_slice %29 {offsets = [32, 128], sizes = [8, 128], strides = [1, 1]} : vector<64x256xf32> to vector<8x128xf32>
    %152 = arith.addf %151, %148 : vector<8x128xf32>
    %153 = math.tanh %150 : vector<8x128xf32>
    %154 = arith.negf %150 : vector<8x128xf32>
    %155 = math.exp %154 : vector<8x128xf32>
    %cst_42 = arith.constant 1.000000e+00 : f32
    %156 = vector.broadcast %cst_42 : f32 to vector<8x128xf32>
    %157 = arith.addf %156, %155 : vector<8x128xf32>
    %158 = arith.divf %156, %157 : vector<8x128xf32>
    %159 = arith.select %18, %153, %158 : vector<8x128xi1>, vector<8x128xf32>
    %160 = math.tanh %152 : vector<8x128xf32>
    %161 = arith.negf %152 : vector<8x128xf32>
    %162 = math.exp %161 : vector<8x128xf32>
    %cst_43 = arith.constant 1.000000e+00 : f32
    %163 = vector.broadcast %cst_43 : f32 to vector<8x128xf32>
    %164 = arith.addf %163, %162 : vector<8x128xf32>
    %165 = arith.divf %163, %164 : vector<8x128xf32>
    %166 = arith.select %18, %160, %165 : vector<8x128xi1>, vector<8x128xf32>
    %167 = vector.extract_strided_slice %159 {offsets = [0, 32], sizes = [8, 32], strides = [1, 1]} : vector<8x128xf32> to vector<8x32xf32>
    %168 = arith.mulf %167, %134 : vector<8x32xf32>
    %169 = vector.extract_strided_slice %159 {offsets = [0, 0], sizes = [8, 32], strides = [1, 1]} : vector<8x128xf32> to vector<8x32xf32>
    %170 = vector.extract_strided_slice %159 {offsets = [0, 64], sizes = [8, 32], strides = [1, 1]} : vector<8x128xf32> to vector<8x32xf32>
    %171 = arith.mulf %169, %170 : vector<8x32xf32>
    %172 = arith.addf %168, %171 : vector<8x32xf32>
    %173 = vector.extract_strided_slice %166 {offsets = [0, 32], sizes = [8, 32], strides = [1, 1]} : vector<8x128xf32> to vector<8x32xf32>
    %174 = arith.mulf %173, %140 : vector<8x32xf32>
    %175 = vector.extract_strided_slice %166 {offsets = [0, 0], sizes = [8, 32], strides = [1, 1]} : vector<8x128xf32> to vector<8x32xf32>
    %176 = vector.extract_strided_slice %166 {offsets = [0, 64], sizes = [8, 32], strides = [1, 1]} : vector<8x128xf32> to vector<8x32xf32>
    %177 = arith.mulf %175, %176 : vector<8x32xf32>
    %178 = arith.addf %174, %177 : vector<8x32xf32>
    %179 = vector.extract_strided_slice %159 {offsets = [0, 96], sizes = [8, 32], strides = [1, 1]} : vector<8x128xf32> to vector<8x32xf32>
    %180 = math.tanh %172 : vector<8x32xf32>
    %181 = arith.mulf %179, %180 : vector<8x32xf32>
    %182 = vector.extract_strided_slice %166 {offsets = [0, 96], sizes = [8, 32], strides = [1, 1]} : vector<8x128xf32> to vector<8x32xf32>
    %183 = math.tanh %178 : vector<8x32xf32>
    %184 = arith.mulf %182, %183 : vector<8x32xf32>
    %cst_44 = arith.constant dense<0.000000e+00> : vector<8x128xf32>
    %185 = tpu.matmul %181, %30, %cst_44 {dimension_numbers = #tpu.dot_dimension_numbers<[1], [0], [0], [1], [0, 0, 1, 1], [], []>} : vector<8x32xf32>, vector<32x128xf32>, vector<8x128xf32> -> vector<8x128xf32>
    %cst_45 = arith.constant dense<0.000000e+00> : vector<8x128xf32>
    %186 = tpu.matmul %184, %31, %cst_45 {dimension_numbers = #tpu.dot_dimension_numbers<[1], [0], [0], [1], [0, 0, 1, 1], [], []>} : vector<8x32xf32>, vector<32x128xf32>, vector<8x128xf32> -> vector<8x128xf32>
    %187 = vector.extract_strided_slice %29 {offsets = [32, 0], sizes = [8, 128], strides = [1, 1]} : vector<64x256xf32> to vector<8x128xf32>
    %188 = arith.addf %187, %185 : vector<8x128xf32>
    %189 = vector.extract_strided_slice %29 {offsets = [24, 128], sizes = [8, 128], strides = [1, 1]} : vector<64x256xf32> to vector<8x128xf32>
    %190 = arith.addf %189, %186 : vector<8x128xf32>
    %191 = math.tanh %188 : vector<8x128xf32>
    %192 = arith.negf %188 : vector<8x128xf32>
    %193 = math.exp %192 : vector<8x128xf32>
    %cst_46 = arith.constant 1.000000e+00 : f32
    %194 = vector.broadcast %cst_46 : f32 to vector<8x128xf32>
    %195 = arith.addf %194, %193 : vector<8x128xf32>
    %196 = arith.divf %194, %195 : vector<8x128xf32>
    %197 = arith.select %18, %191, %196 : vector<8x128xi1>, vector<8x128xf32>
    %198 = math.tanh %190 : vector<8x128xf32>
    %199 = arith.negf %190 : vector<8x128xf32>
    %200 = math.exp %199 : vector<8x128xf32>
    %cst_47 = arith.constant 1.000000e+00 : f32
    %201 = vector.broadcast %cst_47 : f32 to vector<8x128xf32>
    %202 = arith.addf %201, %200 : vector<8x128xf32>
    %203 = arith.divf %201, %202 : vector<8x128xf32>
    %204 = arith.select %18, %198, %203 : vector<8x128xi1>, vector<8x128xf32>
    %205 = vector.extract_strided_slice %197 {offsets = [0, 32], sizes = [8, 32], strides = [1, 1]} : vector<8x128xf32> to vector<8x32xf32>
    %206 = arith.mulf %205, %172 : vector<8x32xf32>
    %207 = vector.extract_strided_slice %197 {offsets = [0, 0], sizes = [8, 32], strides = [1, 1]} : vector<8x128xf32> to vector<8x32xf32>
    %208 = vector.extract_strided_slice %197 {offsets = [0, 64], sizes = [8, 32], strides = [1, 1]} : vector<8x128xf32> to vector<8x32xf32>
    %209 = arith.mulf %207, %208 : vector<8x32xf32>
    %210 = arith.addf %206, %209 : vector<8x32xf32>
    %211 = vector.extract_strided_slice %204 {offsets = [0, 32], sizes = [8, 32], strides = [1, 1]} : vector<8x128xf32> to vector<8x32xf32>
    %212 = arith.mulf %211, %178 : vector<8x32xf32>
    %213 = vector.extract_strided_slice %204 {offsets = [0, 0], sizes = [8, 32], strides = [1, 1]} : vector<8x128xf32> to vector<8x32xf32>
    %214 = vector.extract_strided_slice %204 {offsets = [0, 64], sizes = [8, 32], strides = [1, 1]} : vector<8x128xf32> to vector<8x32xf32>
    %215 = arith.mulf %213, %214 : vector<8x32xf32>
    %216 = arith.addf %212, %215 : vector<8x32xf32>
    %217 = vector.extract_strided_slice %197 {offsets = [0, 96], sizes = [8, 32], strides = [1, 1]} : vector<8x128xf32> to vector<8x32xf32>
    %218 = math.tanh %210 : vector<8x32xf32>
    %219 = arith.mulf %217, %218 : vector<8x32xf32>
    %220 = vector.extract_strided_slice %204 {offsets = [0, 96], sizes = [8, 32], strides = [1, 1]} : vector<8x128xf32> to vector<8x32xf32>
    %221 = math.tanh %216 : vector<8x32xf32>
    %222 = arith.mulf %220, %221 : vector<8x32xf32>
    %cst_48 = arith.constant dense<0.000000e+00> : vector<8x128xf32>
    %223 = tpu.matmul %219, %30, %cst_48 {dimension_numbers = #tpu.dot_dimension_numbers<[1], [0], [0], [1], [0, 0, 1, 1], [], []>} : vector<8x32xf32>, vector<32x128xf32>, vector<8x128xf32> -> vector<8x128xf32>
    %cst_49 = arith.constant dense<0.000000e+00> : vector<8x128xf32>
    %224 = tpu.matmul %222, %31, %cst_49 {dimension_numbers = #tpu.dot_dimension_numbers<[1], [0], [0], [1], [0, 0, 1, 1], [], []>} : vector<8x32xf32>, vector<32x128xf32>, vector<8x128xf32> -> vector<8x128xf32>
    %225 = vector.extract_strided_slice %29 {offsets = [40, 0], sizes = [8, 128], strides = [1, 1]} : vector<64x256xf32> to vector<8x128xf32>
    %226 = arith.addf %225, %223 : vector<8x128xf32>
    %227 = vector.extract_strided_slice %29 {offsets = [16, 128], sizes = [8, 128], strides = [1, 1]} : vector<64x256xf32> to vector<8x128xf32>
    %228 = arith.addf %227, %224 : vector<8x128xf32>
    %229 = math.tanh %226 : vector<8x128xf32>
    %230 = arith.negf %226 : vector<8x128xf32>
    %231 = math.exp %230 : vector<8x128xf32>
    %cst_50 = arith.constant 1.000000e+00 : f32
    %232 = vector.broadcast %cst_50 : f32 to vector<8x128xf32>
    %233 = arith.addf %232, %231 : vector<8x128xf32>
    %234 = arith.divf %232, %233 : vector<8x128xf32>
    %235 = arith.select %18, %229, %234 : vector<8x128xi1>, vector<8x128xf32>
    %236 = math.tanh %228 : vector<8x128xf32>
    %237 = arith.negf %228 : vector<8x128xf32>
    %238 = math.exp %237 : vector<8x128xf32>
    %cst_51 = arith.constant 1.000000e+00 : f32
    %239 = vector.broadcast %cst_51 : f32 to vector<8x128xf32>
    %240 = arith.addf %239, %238 : vector<8x128xf32>
    %241 = arith.divf %239, %240 : vector<8x128xf32>
    %242 = arith.select %18, %236, %241 : vector<8x128xi1>, vector<8x128xf32>
    %243 = vector.extract_strided_slice %235 {offsets = [0, 32], sizes = [8, 32], strides = [1, 1]} : vector<8x128xf32> to vector<8x32xf32>
    %244 = arith.mulf %243, %210 : vector<8x32xf32>
    %245 = vector.extract_strided_slice %235 {offsets = [0, 0], sizes = [8, 32], strides = [1, 1]} : vector<8x128xf32> to vector<8x32xf32>
    %246 = vector.extract_strided_slice %235 {offsets = [0, 64], sizes = [8, 32], strides = [1, 1]} : vector<8x128xf32> to vector<8x32xf32>
    %247 = arith.mulf %245, %246 : vector<8x32xf32>
    %248 = arith.addf %244, %247 : vector<8x32xf32>
    %249 = vector.extract_strided_slice %242 {offsets = [0, 32], sizes = [8, 32], strides = [1, 1]} : vector<8x128xf32> to vector<8x32xf32>
    %250 = arith.mulf %249, %216 : vector<8x32xf32>
    %251 = vector.extract_strided_slice %242 {offsets = [0, 0], sizes = [8, 32], strides = [1, 1]} : vector<8x128xf32> to vector<8x32xf32>
    %252 = vector.extract_strided_slice %242 {offsets = [0, 64], sizes = [8, 32], strides = [1, 1]} : vector<8x128xf32> to vector<8x32xf32>
    %253 = arith.mulf %251, %252 : vector<8x32xf32>
    %254 = arith.addf %250, %253 : vector<8x32xf32>
    %255 = vector.extract_strided_slice %235 {offsets = [0, 96], sizes = [8, 32], strides = [1, 1]} : vector<8x128xf32> to vector<8x32xf32>
    %256 = math.tanh %248 : vector<8x32xf32>
    %257 = arith.mulf %255, %256 : vector<8x32xf32>
    %258 = vector.extract_strided_slice %242 {offsets = [0, 96], sizes = [8, 32], strides = [1, 1]} : vector<8x128xf32> to vector<8x32xf32>
    %259 = math.tanh %254 : vector<8x32xf32>
    %260 = arith.mulf %258, %259 : vector<8x32xf32>
    %cst_52 = arith.constant dense<0.000000e+00> : vector<8x128xf32>
    %261 = tpu.matmul %257, %30, %cst_52 {dimension_numbers = #tpu.dot_dimension_numbers<[1], [0], [0], [1], [0, 0, 1, 1], [], []>} : vector<8x32xf32>, vector<32x128xf32>, vector<8x128xf32> -> vector<8x128xf32>
    %cst_53 = arith.constant dense<0.000000e+00> : vector<8x128xf32>
    %262 = tpu.matmul %260, %31, %cst_53 {dimension_numbers = #tpu.dot_dimension_numbers<[1], [0], [0], [1], [0, 0, 1, 1], [], []>} : vector<8x32xf32>, vector<32x128xf32>, vector<8x128xf32> -> vector<8x128xf32>
    %263 = vector.extract_strided_slice %29 {offsets = [48, 0], sizes = [8, 128], strides = [1, 1]} : vector<64x256xf32> to vector<8x128xf32>
    %264 = arith.addf %263, %261 : vector<8x128xf32>
    %265 = vector.extract_strided_slice %29 {offsets = [8, 128], sizes = [8, 128], strides = [1, 1]} : vector<64x256xf32> to vector<8x128xf32>
    %266 = arith.addf %265, %262 : vector<8x128xf32>
    %267 = math.tanh %264 : vector<8x128xf32>
    %268 = arith.negf %264 : vector<8x128xf32>
    %269 = math.exp %268 : vector<8x128xf32>
    %cst_54 = arith.constant 1.000000e+00 : f32
    %270 = vector.broadcast %cst_54 : f32 to vector<8x128xf32>
    %271 = arith.addf %270, %269 : vector<8x128xf32>
    %272 = arith.divf %270, %271 : vector<8x128xf32>
    %273 = arith.select %18, %267, %272 : vector<8x128xi1>, vector<8x128xf32>
    %274 = math.tanh %266 : vector<8x128xf32>
    %275 = arith.negf %266 : vector<8x128xf32>
    %276 = math.exp %275 : vector<8x128xf32>
    %cst_55 = arith.constant 1.000000e+00 : f32
    %277 = vector.broadcast %cst_55 : f32 to vector<8x128xf32>
    %278 = arith.addf %277, %276 : vector<8x128xf32>
    %279 = arith.divf %277, %278 : vector<8x128xf32>
    %280 = arith.select %18, %274, %279 : vector<8x128xi1>, vector<8x128xf32>
    %281 = vector.extract_strided_slice %273 {offsets = [0, 32], sizes = [8, 32], strides = [1, 1]} : vector<8x128xf32> to vector<8x32xf32>
    %282 = arith.mulf %281, %248 : vector<8x32xf32>
    %283 = vector.extract_strided_slice %273 {offsets = [0, 0], sizes = [8, 32], strides = [1, 1]} : vector<8x128xf32> to vector<8x32xf32>
    %284 = vector.extract_strided_slice %273 {offsets = [0, 64], sizes = [8, 32], strides = [1, 1]} : vector<8x128xf32> to vector<8x32xf32>
    %285 = arith.mulf %283, %284 : vector<8x32xf32>
    %286 = arith.addf %282, %285 : vector<8x32xf32>
    %287 = vector.extract_strided_slice %280 {offsets = [0, 32], sizes = [8, 32], strides = [1, 1]} : vector<8x128xf32> to vector<8x32xf32>
    %288 = arith.mulf %287, %254 : vector<8x32xf32>
    %289 = vector.extract_strided_slice %280 {offsets = [0, 0], sizes = [8, 32], strides = [1, 1]} : vector<8x128xf32> to vector<8x32xf32>
    %290 = vector.extract_strided_slice %280 {offsets = [0, 64], sizes = [8, 32], strides = [1, 1]} : vector<8x128xf32> to vector<8x32xf32>
    %291 = arith.mulf %289, %290 : vector<8x32xf32>
    %292 = arith.addf %288, %291 : vector<8x32xf32>
    %293 = vector.extract_strided_slice %273 {offsets = [0, 96], sizes = [8, 32], strides = [1, 1]} : vector<8x128xf32> to vector<8x32xf32>
    %294 = math.tanh %286 : vector<8x32xf32>
    %295 = arith.mulf %293, %294 : vector<8x32xf32>
    %296 = vector.extract_strided_slice %280 {offsets = [0, 96], sizes = [8, 32], strides = [1, 1]} : vector<8x128xf32> to vector<8x32xf32>
    %297 = math.tanh %292 : vector<8x32xf32>
    %298 = arith.mulf %296, %297 : vector<8x32xf32>
    %cst_56 = arith.constant dense<0.000000e+00> : vector<8x128xf32>
    %299 = tpu.matmul %295, %30, %cst_56 {dimension_numbers = #tpu.dot_dimension_numbers<[1], [0], [0], [1], [0, 0, 1, 1], [], []>} : vector<8x32xf32>, vector<32x128xf32>, vector<8x128xf32> -> vector<8x128xf32>
    %cst_57 = arith.constant dense<0.000000e+00> : vector<8x128xf32>
    %300 = tpu.matmul %298, %31, %cst_57 {dimension_numbers = #tpu.dot_dimension_numbers<[1], [0], [0], [1], [0, 0, 1, 1], [], []>} : vector<8x32xf32>, vector<32x128xf32>, vector<8x128xf32> -> vector<8x128xf32>
    %301 = vector.extract_strided_slice %29 {offsets = [56, 0], sizes = [8, 128], strides = [1, 1]} : vector<64x256xf32> to vector<8x128xf32>
    %302 = arith.addf %301, %299 : vector<8x128xf32>
    %303 = vector.extract_strided_slice %29 {offsets = [0, 128], sizes = [8, 128], strides = [1, 1]} : vector<64x256xf32> to vector<8x128xf32>
    %304 = arith.addf %303, %300 : vector<8x128xf32>
    %305 = math.tanh %302 : vector<8x128xf32>
    %306 = arith.negf %302 : vector<8x128xf32>
    %307 = math.exp %306 : vector<8x128xf32>
    %cst_58 = arith.constant 1.000000e+00 : f32
    %308 = vector.broadcast %cst_58 : f32 to vector<8x128xf32>
    %309 = arith.addf %308, %307 : vector<8x128xf32>
    %310 = arith.divf %308, %309 : vector<8x128xf32>
    %311 = arith.select %18, %305, %310 : vector<8x128xi1>, vector<8x128xf32>
    %312 = math.tanh %304 : vector<8x128xf32>
    %313 = arith.negf %304 : vector<8x128xf32>
    %314 = math.exp %313 : vector<8x128xf32>
    %cst_59 = arith.constant 1.000000e+00 : f32
    %315 = vector.broadcast %cst_59 : f32 to vector<8x128xf32>
    %316 = arith.addf %315, %314 : vector<8x128xf32>
    %317 = arith.divf %315, %316 : vector<8x128xf32>
    %318 = arith.select %18, %312, %317 : vector<8x128xi1>, vector<8x128xf32>
    %319 = vector.extract_strided_slice %311 {offsets = [0, 32], sizes = [8, 32], strides = [1, 1]} : vector<8x128xf32> to vector<8x32xf32>
    %320 = arith.mulf %319, %286 : vector<8x32xf32>
    %321 = vector.extract_strided_slice %311 {offsets = [0, 0], sizes = [8, 32], strides = [1, 1]} : vector<8x128xf32> to vector<8x32xf32>
    %322 = vector.extract_strided_slice %311 {offsets = [0, 64], sizes = [8, 32], strides = [1, 1]} : vector<8x128xf32> to vector<8x32xf32>
    %323 = arith.mulf %321, %322 : vector<8x32xf32>
    %324 = arith.addf %320, %323 : vector<8x32xf32>
    %325 = vector.extract_strided_slice %318 {offsets = [0, 32], sizes = [8, 32], strides = [1, 1]} : vector<8x128xf32> to vector<8x32xf32>
    %326 = arith.mulf %325, %292 : vector<8x32xf32>
    %327 = vector.extract_strided_slice %318 {offsets = [0, 0], sizes = [8, 32], strides = [1, 1]} : vector<8x128xf32> to vector<8x32xf32>
    %328 = vector.extract_strided_slice %318 {offsets = [0, 64], sizes = [8, 32], strides = [1, 1]} : vector<8x128xf32> to vector<8x32xf32>
    %329 = arith.mulf %327, %328 : vector<8x32xf32>
    %330 = arith.addf %326, %329 : vector<8x32xf32>
    %331 = vector.extract_strided_slice %311 {offsets = [0, 96], sizes = [8, 32], strides = [1, 1]} : vector<8x128xf32> to vector<8x32xf32>
    %332 = math.tanh %324 : vector<8x32xf32>
    %333 = arith.mulf %331, %332 : vector<8x32xf32>
    %334 = vector.extract_strided_slice %318 {offsets = [0, 96], sizes = [8, 32], strides = [1, 1]} : vector<8x128xf32> to vector<8x32xf32>
    %335 = math.tanh %330 : vector<8x32xf32>
    %336 = arith.mulf %334, %335 : vector<8x32xf32>
    %337 = tpu.concatenate %67, %105, %143, %181, %219, %257, %295, %333 in 0 : vector<8x32xf32>, vector<8x32xf32>, vector<8x32xf32>, vector<8x32xf32>, vector<8x32xf32>, vector<8x32xf32>, vector<8x32xf32>, vector<8x32xf32> -> vector<64x32xf32>
    %338 = tpu.concatenate %336, %298, %260, %222, %184, %146, %108, %70 in 0 : vector<8x32xf32>, vector<8x32xf32>, vector<8x32xf32>, vector<8x32xf32>, vector<8x32xf32>, vector<8x32xf32>, vector<8x32xf32>, vector<8x32xf32> -> vector<64x32xf32>
    %c0_60 = arith.constant 0 : index
    %c0_61 = arith.constant 0 : index
    %339 = vector.load %arg12[%c0_60, %c0_61] : memref<64x256xf32, #tpu.memory_space<vmem>>, vector<32x256xf32>
    %cst_62 = arith.constant dense<0.000000e+00> : vector<64x256xf32>
    %340 = tpu.matmul %337, %339, %cst_62 {dimension_numbers = #tpu.dot_dimension_numbers<[1], [0], [0], [1], [0, 0, 1, 1], [], []>} : vector<64x32xf32>, vector<32x256xf32>, vector<64x256xf32> -> vector<64x256xf32>
    %c32_63 = arith.constant 32 : index
    %c0_64 = arith.constant 0 : index
    %341 = vector.load %arg12[%c32_63, %c0_64] : memref<64x256xf32, #tpu.memory_space<vmem>>, vector<32x256xf32>
    %cst_65 = arith.constant dense<0.000000e+00> : vector<64x256xf32>
    %342 = tpu.matmul %338, %341, %cst_65 {dimension_numbers = #tpu.dot_dimension_numbers<[1], [0], [0], [1], [0, 0, 1, 1], [], []>} : vector<64x32xf32>, vector<32x256xf32>, vector<64x256xf32> -> vector<64x256xf32>
    %343 = arith.addf %340, %342 : vector<64x256xf32>
    %c0_66 = arith.constant 0 : index
    %c0_67 = arith.constant 0 : index
    %344 = vector.load %arg13[%c0_66, %c0_67] : memref<1x256xf32, #tpu.memory_space<vmem>>, vector<1x256xf32>
    %345 = vector.broadcast %344 : vector<1x256xf32> to vector<64x256xf32>
    %346 = arith.addf %343, %345 : vector<64x256xf32>
    %c0_68 = arith.constant 0 : index
    %c0_69 = arith.constant 0 : index
    %347 = vector.load %arg14[%c0_68, %c0_69] : memref<32x128xf32, #tpu.memory_space<vmem>>, vector<32x128xf32>
    %c0_70 = arith.constant 0 : index
    %c0_71 = arith.constant 0 : index
    %348 = vector.load %arg15[%c0_70, %c0_71] : memref<32x128xf32, #tpu.memory_space<vmem>>, vector<32x128xf32>
    %cst_72 = arith.constant 0.000000e+00 : f32
    %349 = vector.broadcast %cst_72 : f32 to vector<8x32xf32>
    %cst_73 = arith.constant dense<0.000000e+00> : vector<8x128xf32>
    %350 = tpu.matmul %349, %347, %cst_73 {dimension_numbers = #tpu.dot_dimension_numbers<[1], [0], [0], [1], [0, 0, 1, 1], [], []>} : vector<8x32xf32>, vector<32x128xf32>, vector<8x128xf32> -> vector<8x128xf32>
    %cst_74 = arith.constant dense<0.000000e+00> : vector<8x128xf32>
    %351 = tpu.matmul %349, %348, %cst_74 {dimension_numbers = #tpu.dot_dimension_numbers<[1], [0], [0], [1], [0, 0, 1, 1], [], []>} : vector<8x32xf32>, vector<32x128xf32>, vector<8x128xf32> -> vector<8x128xf32>
    %352 = vector.extract_strided_slice %346 {offsets = [0, 0], sizes = [8, 128], strides = [1, 1]} : vector<64x256xf32> to vector<8x128xf32>
    %353 = arith.addf %352, %350 : vector<8x128xf32>
    %354 = vector.extract_strided_slice %346 {offsets = [56, 128], sizes = [8, 128], strides = [1, 1]} : vector<64x256xf32> to vector<8x128xf32>
    %355 = arith.addf %354, %351 : vector<8x128xf32>
    %356 = math.tanh %353 : vector<8x128xf32>
    %357 = arith.negf %353 : vector<8x128xf32>
    %358 = math.exp %357 : vector<8x128xf32>
    %cst_75 = arith.constant 1.000000e+00 : f32
    %359 = vector.broadcast %cst_75 : f32 to vector<8x128xf32>
    %360 = arith.addf %359, %358 : vector<8x128xf32>
    %361 = arith.divf %359, %360 : vector<8x128xf32>
    %362 = arith.select %18, %356, %361 : vector<8x128xi1>, vector<8x128xf32>
    %363 = math.tanh %355 : vector<8x128xf32>
    %364 = arith.negf %355 : vector<8x128xf32>
    %365 = math.exp %364 : vector<8x128xf32>
    %cst_76 = arith.constant 1.000000e+00 : f32
    %366 = vector.broadcast %cst_76 : f32 to vector<8x128xf32>
    %367 = arith.addf %366, %365 : vector<8x128xf32>
    %368 = arith.divf %366, %367 : vector<8x128xf32>
    %369 = arith.select %18, %363, %368 : vector<8x128xi1>, vector<8x128xf32>
    %370 = vector.extract_strided_slice %362 {offsets = [0, 32], sizes = [8, 32], strides = [1, 1]} : vector<8x128xf32> to vector<8x32xf32>
    %371 = arith.mulf %370, %349 : vector<8x32xf32>
    %372 = vector.extract_strided_slice %362 {offsets = [0, 0], sizes = [8, 32], strides = [1, 1]} : vector<8x128xf32> to vector<8x32xf32>
    %373 = vector.extract_strided_slice %362 {offsets = [0, 64], sizes = [8, 32], strides = [1, 1]} : vector<8x128xf32> to vector<8x32xf32>
    %374 = arith.mulf %372, %373 : vector<8x32xf32>
    %375 = arith.addf %371, %374 : vector<8x32xf32>
    %376 = vector.extract_strided_slice %369 {offsets = [0, 32], sizes = [8, 32], strides = [1, 1]} : vector<8x128xf32> to vector<8x32xf32>
    %377 = arith.mulf %376, %349 : vector<8x32xf32>
    %378 = vector.extract_strided_slice %369 {offsets = [0, 0], sizes = [8, 32], strides = [1, 1]} : vector<8x128xf32> to vector<8x32xf32>
    %379 = vector.extract_strided_slice %369 {offsets = [0, 64], sizes = [8, 32], strides = [1, 1]} : vector<8x128xf32> to vector<8x32xf32>
    %380 = arith.mulf %378, %379 : vector<8x32xf32>
    %381 = arith.addf %377, %380 : vector<8x32xf32>
    %382 = vector.extract_strided_slice %362 {offsets = [0, 96], sizes = [8, 32], strides = [1, 1]} : vector<8x128xf32> to vector<8x32xf32>
    %383 = math.tanh %375 : vector<8x32xf32>
    %384 = arith.mulf %382, %383 : vector<8x32xf32>
    %385 = vector.extract_strided_slice %369 {offsets = [0, 96], sizes = [8, 32], strides = [1, 1]} : vector<8x128xf32> to vector<8x32xf32>
    %386 = math.tanh %381 : vector<8x32xf32>
    %387 = arith.mulf %385, %386 : vector<8x32xf32>
    %cst_77 = arith.constant dense<0.000000e+00> : vector<8x128xf32>
    %388 = tpu.matmul %384, %347, %cst_77 {dimension_numbers = #tpu.dot_dimension_numbers<[1], [0], [0], [1], [0, 0, 1, 1], [], []>} : vector<8x32xf32>, vector<32x128xf32>, vector<8x128xf32> -> vector<8x128xf32>
    %cst_78 = arith.constant dense<0.000000e+00> : vector<8x128xf32>
    %389 = tpu.matmul %387, %348, %cst_78 {dimension_numbers = #tpu.dot_dimension_numbers<[1], [0], [0], [1], [0, 0, 1, 1], [], []>} : vector<8x32xf32>, vector<32x128xf32>, vector<8x128xf32> -> vector<8x128xf32>
    %390 = vector.extract_strided_slice %346 {offsets = [8, 0], sizes = [8, 128], strides = [1, 1]} : vector<64x256xf32> to vector<8x128xf32>
    %391 = arith.addf %390, %388 : vector<8x128xf32>
    %392 = vector.extract_strided_slice %346 {offsets = [48, 128], sizes = [8, 128], strides = [1, 1]} : vector<64x256xf32> to vector<8x128xf32>
    %393 = arith.addf %392, %389 : vector<8x128xf32>
    %394 = math.tanh %391 : vector<8x128xf32>
    %395 = arith.negf %391 : vector<8x128xf32>
    %396 = math.exp %395 : vector<8x128xf32>
    %cst_79 = arith.constant 1.000000e+00 : f32
    %397 = vector.broadcast %cst_79 : f32 to vector<8x128xf32>
    %398 = arith.addf %397, %396 : vector<8x128xf32>
    %399 = arith.divf %397, %398 : vector<8x128xf32>
    %400 = arith.select %18, %394, %399 : vector<8x128xi1>, vector<8x128xf32>
    %401 = math.tanh %393 : vector<8x128xf32>
    %402 = arith.negf %393 : vector<8x128xf32>
    %403 = math.exp %402 : vector<8x128xf32>
    %cst_80 = arith.constant 1.000000e+00 : f32
    %404 = vector.broadcast %cst_80 : f32 to vector<8x128xf32>
    %405 = arith.addf %404, %403 : vector<8x128xf32>
    %406 = arith.divf %404, %405 : vector<8x128xf32>
    %407 = arith.select %18, %401, %406 : vector<8x128xi1>, vector<8x128xf32>
    %408 = vector.extract_strided_slice %400 {offsets = [0, 32], sizes = [8, 32], strides = [1, 1]} : vector<8x128xf32> to vector<8x32xf32>
    %409 = arith.mulf %408, %375 : vector<8x32xf32>
    %410 = vector.extract_strided_slice %400 {offsets = [0, 0], sizes = [8, 32], strides = [1, 1]} : vector<8x128xf32> to vector<8x32xf32>
    %411 = vector.extract_strided_slice %400 {offsets = [0, 64], sizes = [8, 32], strides = [1, 1]} : vector<8x128xf32> to vector<8x32xf32>
    %412 = arith.mulf %410, %411 : vector<8x32xf32>
    %413 = arith.addf %409, %412 : vector<8x32xf32>
    %414 = vector.extract_strided_slice %407 {offsets = [0, 32], sizes = [8, 32], strides = [1, 1]} : vector<8x128xf32> to vector<8x32xf32>
    %415 = arith.mulf %414, %381 : vector<8x32xf32>
    %416 = vector.extract_strided_slice %407 {offsets = [0, 0], sizes = [8, 32], strides = [1, 1]} : vector<8x128xf32> to vector<8x32xf32>
    %417 = vector.extract_strided_slice %407 {offsets = [0, 64], sizes = [8, 32], strides = [1, 1]} : vector<8x128xf32> to vector<8x32xf32>
    %418 = arith.mulf %416, %417 : vector<8x32xf32>
    %419 = arith.addf %415, %418 : vector<8x32xf32>
    %420 = vector.extract_strided_slice %400 {offsets = [0, 96], sizes = [8, 32], strides = [1, 1]} : vector<8x128xf32> to vector<8x32xf32>
    %421 = math.tanh %413 : vector<8x32xf32>
    %422 = arith.mulf %420, %421 : vector<8x32xf32>
    %423 = vector.extract_strided_slice %407 {offsets = [0, 96], sizes = [8, 32], strides = [1, 1]} : vector<8x128xf32> to vector<8x32xf32>
    %424 = math.tanh %419 : vector<8x32xf32>
    %425 = arith.mulf %423, %424 : vector<8x32xf32>
    %cst_81 = arith.constant dense<0.000000e+00> : vector<8x128xf32>
    %426 = tpu.matmul %422, %347, %cst_81 {dimension_numbers = #tpu.dot_dimension_numbers<[1], [0], [0], [1], [0, 0, 1, 1], [], []>} : vector<8x32xf32>, vector<32x128xf32>, vector<8x128xf32> -> vector<8x128xf32>
    %cst_82 = arith.constant dense<0.000000e+00> : vector<8x128xf32>
    %427 = tpu.matmul %425, %348, %cst_82 {dimension_numbers = #tpu.dot_dimension_numbers<[1], [0], [0], [1], [0, 0, 1, 1], [], []>} : vector<8x32xf32>, vector<32x128xf32>, vector<8x128xf32> -> vector<8x128xf32>
    %428 = vector.extract_strided_slice %346 {offsets = [16, 0], sizes = [8, 128], strides = [1, 1]} : vector<64x256xf32> to vector<8x128xf32>
    %429 = arith.addf %428, %426 : vector<8x128xf32>
    %430 = vector.extract_strided_slice %346 {offsets = [40, 128], sizes = [8, 128], strides = [1, 1]} : vector<64x256xf32> to vector<8x128xf32>
    %431 = arith.addf %430, %427 : vector<8x128xf32>
    %432 = math.tanh %429 : vector<8x128xf32>
    %433 = arith.negf %429 : vector<8x128xf32>
    %434 = math.exp %433 : vector<8x128xf32>
    %cst_83 = arith.constant 1.000000e+00 : f32
    %435 = vector.broadcast %cst_83 : f32 to vector<8x128xf32>
    %436 = arith.addf %435, %434 : vector<8x128xf32>
    %437 = arith.divf %435, %436 : vector<8x128xf32>
    %438 = arith.select %18, %432, %437 : vector<8x128xi1>, vector<8x128xf32>
    %439 = math.tanh %431 : vector<8x128xf32>
    %440 = arith.negf %431 : vector<8x128xf32>
    %441 = math.exp %440 : vector<8x128xf32>
    %cst_84 = arith.constant 1.000000e+00 : f32
    %442 = vector.broadcast %cst_84 : f32 to vector<8x128xf32>
    %443 = arith.addf %442, %441 : vector<8x128xf32>
    %444 = arith.divf %442, %443 : vector<8x128xf32>
    %445 = arith.select %18, %439, %444 : vector<8x128xi1>, vector<8x128xf32>
    %446 = vector.extract_strided_slice %438 {offsets = [0, 32], sizes = [8, 32], strides = [1, 1]} : vector<8x128xf32> to vector<8x32xf32>
    %447 = arith.mulf %446, %413 : vector<8x32xf32>
    %448 = vector.extract_strided_slice %438 {offsets = [0, 0], sizes = [8, 32], strides = [1, 1]} : vector<8x128xf32> to vector<8x32xf32>
    %449 = vector.extract_strided_slice %438 {offsets = [0, 64], sizes = [8, 32], strides = [1, 1]} : vector<8x128xf32> to vector<8x32xf32>
    %450 = arith.mulf %448, %449 : vector<8x32xf32>
    %451 = arith.addf %447, %450 : vector<8x32xf32>
    %452 = vector.extract_strided_slice %445 {offsets = [0, 32], sizes = [8, 32], strides = [1, 1]} : vector<8x128xf32> to vector<8x32xf32>
    %453 = arith.mulf %452, %419 : vector<8x32xf32>
    %454 = vector.extract_strided_slice %445 {offsets = [0, 0], sizes = [8, 32], strides = [1, 1]} : vector<8x128xf32> to vector<8x32xf32>
    %455 = vector.extract_strided_slice %445 {offsets = [0, 64], sizes = [8, 32], strides = [1, 1]} : vector<8x128xf32> to vector<8x32xf32>
    %456 = arith.mulf %454, %455 : vector<8x32xf32>
    %457 = arith.addf %453, %456 : vector<8x32xf32>
    %458 = vector.extract_strided_slice %438 {offsets = [0, 96], sizes = [8, 32], strides = [1, 1]} : vector<8x128xf32> to vector<8x32xf32>
    %459 = math.tanh %451 : vector<8x32xf32>
    %460 = arith.mulf %458, %459 : vector<8x32xf32>
    %461 = vector.extract_strided_slice %445 {offsets = [0, 96], sizes = [8, 32], strides = [1, 1]} : vector<8x128xf32> to vector<8x32xf32>
    %462 = math.tanh %457 : vector<8x32xf32>
    %463 = arith.mulf %461, %462 : vector<8x32xf32>
    %cst_85 = arith.constant dense<0.000000e+00> : vector<8x128xf32>
    %464 = tpu.matmul %460, %347, %cst_85 {dimension_numbers = #tpu.dot_dimension_numbers<[1], [0], [0], [1], [0, 0, 1, 1], [], []>} : vector<8x32xf32>, vector<32x128xf32>, vector<8x128xf32> -> vector<8x128xf32>
    %cst_86 = arith.constant dense<0.000000e+00> : vector<8x128xf32>
    %465 = tpu.matmul %463, %348, %cst_86 {dimension_numbers = #tpu.dot_dimension_numbers<[1], [0], [0], [1], [0, 0, 1, 1], [], []>} : vector<8x32xf32>, vector<32x128xf32>, vector<8x128xf32> -> vector<8x128xf32>
    %466 = vector.extract_strided_slice %346 {offsets = [24, 0], sizes = [8, 128], strides = [1, 1]} : vector<64x256xf32> to vector<8x128xf32>
    %467 = arith.addf %466, %464 : vector<8x128xf32>
    %468 = vector.extract_strided_slice %346 {offsets = [32, 128], sizes = [8, 128], strides = [1, 1]} : vector<64x256xf32> to vector<8x128xf32>
    %469 = arith.addf %468, %465 : vector<8x128xf32>
    %470 = math.tanh %467 : vector<8x128xf32>
    %471 = arith.negf %467 : vector<8x128xf32>
    %472 = math.exp %471 : vector<8x128xf32>
    %cst_87 = arith.constant 1.000000e+00 : f32
    %473 = vector.broadcast %cst_87 : f32 to vector<8x128xf32>
    %474 = arith.addf %473, %472 : vector<8x128xf32>
    %475 = arith.divf %473, %474 : vector<8x128xf32>
    %476 = arith.select %18, %470, %475 : vector<8x128xi1>, vector<8x128xf32>
    %477 = math.tanh %469 : vector<8x128xf32>
    %478 = arith.negf %469 : vector<8x128xf32>
    %479 = math.exp %478 : vector<8x128xf32>
    %cst_88 = arith.constant 1.000000e+00 : f32
    %480 = vector.broadcast %cst_88 : f32 to vector<8x128xf32>
    %481 = arith.addf %480, %479 : vector<8x128xf32>
    %482 = arith.divf %480, %481 : vector<8x128xf32>
    %483 = arith.select %18, %477, %482 : vector<8x128xi1>, vector<8x128xf32>
    %484 = vector.extract_strided_slice %476 {offsets = [0, 32], sizes = [8, 32], strides = [1, 1]} : vector<8x128xf32> to vector<8x32xf32>
    %485 = arith.mulf %484, %451 : vector<8x32xf32>
    %486 = vector.extract_strided_slice %476 {offsets = [0, 0], sizes = [8, 32], strides = [1, 1]} : vector<8x128xf32> to vector<8x32xf32>
    %487 = vector.extract_strided_slice %476 {offsets = [0, 64], sizes = [8, 32], strides = [1, 1]} : vector<8x128xf32> to vector<8x32xf32>
    %488 = arith.mulf %486, %487 : vector<8x32xf32>
    %489 = arith.addf %485, %488 : vector<8x32xf32>
    %490 = vector.extract_strided_slice %483 {offsets = [0, 32], sizes = [8, 32], strides = [1, 1]} : vector<8x128xf32> to vector<8x32xf32>
    %491 = arith.mulf %490, %457 : vector<8x32xf32>
    %492 = vector.extract_strided_slice %483 {offsets = [0, 0], sizes = [8, 32], strides = [1, 1]} : vector<8x128xf32> to vector<8x32xf32>
    %493 = vector.extract_strided_slice %483 {offsets = [0, 64], sizes = [8, 32], strides = [1, 1]} : vector<8x128xf32> to vector<8x32xf32>
    %494 = arith.mulf %492, %493 : vector<8x32xf32>
    %495 = arith.addf %491, %494 : vector<8x32xf32>
    %496 = vector.extract_strided_slice %476 {offsets = [0, 96], sizes = [8, 32], strides = [1, 1]} : vector<8x128xf32> to vector<8x32xf32>
    %497 = math.tanh %489 : vector<8x32xf32>
    %498 = arith.mulf %496, %497 : vector<8x32xf32>
    %499 = vector.extract_strided_slice %483 {offsets = [0, 96], sizes = [8, 32], strides = [1, 1]} : vector<8x128xf32> to vector<8x32xf32>
    %500 = math.tanh %495 : vector<8x32xf32>
    %501 = arith.mulf %499, %500 : vector<8x32xf32>
    %cst_89 = arith.constant dense<0.000000e+00> : vector<8x128xf32>
    %502 = tpu.matmul %498, %347, %cst_89 {dimension_numbers = #tpu.dot_dimension_numbers<[1], [0], [0], [1], [0, 0, 1, 1], [], []>} : vector<8x32xf32>, vector<32x128xf32>, vector<8x128xf32> -> vector<8x128xf32>
    %cst_90 = arith.constant dense<0.000000e+00> : vector<8x128xf32>
    %503 = tpu.matmul %501, %348, %cst_90 {dimension_numbers = #tpu.dot_dimension_numbers<[1], [0], [0], [1], [0, 0, 1, 1], [], []>} : vector<8x32xf32>, vector<32x128xf32>, vector<8x128xf32> -> vector<8x128xf32>
    %504 = vector.extract_strided_slice %346 {offsets = [32, 0], sizes = [8, 128], strides = [1, 1]} : vector<64x256xf32> to vector<8x128xf32>
    %505 = arith.addf %504, %502 : vector<8x128xf32>
    %506 = vector.extract_strided_slice %346 {offsets = [24, 128], sizes = [8, 128], strides = [1, 1]} : vector<64x256xf32> to vector<8x128xf32>
    %507 = arith.addf %506, %503 : vector<8x128xf32>
    %508 = math.tanh %505 : vector<8x128xf32>
    %509 = arith.negf %505 : vector<8x128xf32>
    %510 = math.exp %509 : vector<8x128xf32>
    %cst_91 = arith.constant 1.000000e+00 : f32
    %511 = vector.broadcast %cst_91 : f32 to vector<8x128xf32>
    %512 = arith.addf %511, %510 : vector<8x128xf32>
    %513 = arith.divf %511, %512 : vector<8x128xf32>
    %514 = arith.select %18, %508, %513 : vector<8x128xi1>, vector<8x128xf32>
    %515 = math.tanh %507 : vector<8x128xf32>
    %516 = arith.negf %507 : vector<8x128xf32>
    %517 = math.exp %516 : vector<8x128xf32>
    %cst_92 = arith.constant 1.000000e+00 : f32
    %518 = vector.broadcast %cst_92 : f32 to vector<8x128xf32>
    %519 = arith.addf %518, %517 : vector<8x128xf32>
    %520 = arith.divf %518, %519 : vector<8x128xf32>
    %521 = arith.select %18, %515, %520 : vector<8x128xi1>, vector<8x128xf32>
    %522 = vector.extract_strided_slice %514 {offsets = [0, 32], sizes = [8, 32], strides = [1, 1]} : vector<8x128xf32> to vector<8x32xf32>
    %523 = arith.mulf %522, %489 : vector<8x32xf32>
    %524 = vector.extract_strided_slice %514 {offsets = [0, 0], sizes = [8, 32], strides = [1, 1]} : vector<8x128xf32> to vector<8x32xf32>
    %525 = vector.extract_strided_slice %514 {offsets = [0, 64], sizes = [8, 32], strides = [1, 1]} : vector<8x128xf32> to vector<8x32xf32>
    %526 = arith.mulf %524, %525 : vector<8x32xf32>
    %527 = arith.addf %523, %526 : vector<8x32xf32>
    %528 = vector.extract_strided_slice %521 {offsets = [0, 32], sizes = [8, 32], strides = [1, 1]} : vector<8x128xf32> to vector<8x32xf32>
    %529 = arith.mulf %528, %495 : vector<8x32xf32>
    %530 = vector.extract_strided_slice %521 {offsets = [0, 0], sizes = [8, 32], strides = [1, 1]} : vector<8x128xf32> to vector<8x32xf32>
    %531 = vector.extract_strided_slice %521 {offsets = [0, 64], sizes = [8, 32], strides = [1, 1]} : vector<8x128xf32> to vector<8x32xf32>
    %532 = arith.mulf %530, %531 : vector<8x32xf32>
    %533 = arith.addf %529, %532 : vector<8x32xf32>
    %534 = vector.extract_strided_slice %514 {offsets = [0, 96], sizes = [8, 32], strides = [1, 1]} : vector<8x128xf32> to vector<8x32xf32>
    %535 = math.tanh %527 : vector<8x32xf32>
    %536 = arith.mulf %534, %535 : vector<8x32xf32>
    %537 = vector.extract_strided_slice %521 {offsets = [0, 96], sizes = [8, 32], strides = [1, 1]} : vector<8x128xf32> to vector<8x32xf32>
    %538 = math.tanh %533 : vector<8x32xf32>
    %539 = arith.mulf %537, %538 : vector<8x32xf32>
    %cst_93 = arith.constant dense<0.000000e+00> : vector<8x128xf32>
    %540 = tpu.matmul %536, %347, %cst_93 {dimension_numbers = #tpu.dot_dimension_numbers<[1], [0], [0], [1], [0, 0, 1, 1], [], []>} : vector<8x32xf32>, vector<32x128xf32>, vector<8x128xf32> -> vector<8x128xf32>
    %cst_94 = arith.constant dense<0.000000e+00> : vector<8x128xf32>
    %541 = tpu.matmul %539, %348, %cst_94 {dimension_numbers = #tpu.dot_dimension_numbers<[1], [0], [0], [1], [0, 0, 1, 1], [], []>} : vector<8x32xf32>, vector<32x128xf32>, vector<8x128xf32> -> vector<8x128xf32>
    %542 = vector.extract_strided_slice %346 {offsets = [40, 0], sizes = [8, 128], strides = [1, 1]} : vector<64x256xf32> to vector<8x128xf32>
    %543 = arith.addf %542, %540 : vector<8x128xf32>
    %544 = vector.extract_strided_slice %346 {offsets = [16, 128], sizes = [8, 128], strides = [1, 1]} : vector<64x256xf32> to vector<8x128xf32>
    %545 = arith.addf %544, %541 : vector<8x128xf32>
    %546 = math.tanh %543 : vector<8x128xf32>
    %547 = arith.negf %543 : vector<8x128xf32>
    %548 = math.exp %547 : vector<8x128xf32>
    %cst_95 = arith.constant 1.000000e+00 : f32
    %549 = vector.broadcast %cst_95 : f32 to vector<8x128xf32>
    %550 = arith.addf %549, %548 : vector<8x128xf32>
    %551 = arith.divf %549, %550 : vector<8x128xf32>
    %552 = arith.select %18, %546, %551 : vector<8x128xi1>, vector<8x128xf32>
    %553 = math.tanh %545 : vector<8x128xf32>
    %554 = arith.negf %545 : vector<8x128xf32>
    %555 = math.exp %554 : vector<8x128xf32>
    %cst_96 = arith.constant 1.000000e+00 : f32
    %556 = vector.broadcast %cst_96 : f32 to vector<8x128xf32>
    %557 = arith.addf %556, %555 : vector<8x128xf32>
    %558 = arith.divf %556, %557 : vector<8x128xf32>
    %559 = arith.select %18, %553, %558 : vector<8x128xi1>, vector<8x128xf32>
    %560 = vector.extract_strided_slice %552 {offsets = [0, 32], sizes = [8, 32], strides = [1, 1]} : vector<8x128xf32> to vector<8x32xf32>
    %561 = arith.mulf %560, %527 : vector<8x32xf32>
    %562 = vector.extract_strided_slice %552 {offsets = [0, 0], sizes = [8, 32], strides = [1, 1]} : vector<8x128xf32> to vector<8x32xf32>
    %563 = vector.extract_strided_slice %552 {offsets = [0, 64], sizes = [8, 32], strides = [1, 1]} : vector<8x128xf32> to vector<8x32xf32>
    %564 = arith.mulf %562, %563 : vector<8x32xf32>
    %565 = arith.addf %561, %564 : vector<8x32xf32>
    %566 = vector.extract_strided_slice %559 {offsets = [0, 32], sizes = [8, 32], strides = [1, 1]} : vector<8x128xf32> to vector<8x32xf32>
    %567 = arith.mulf %566, %533 : vector<8x32xf32>
    %568 = vector.extract_strided_slice %559 {offsets = [0, 0], sizes = [8, 32], strides = [1, 1]} : vector<8x128xf32> to vector<8x32xf32>
    %569 = vector.extract_strided_slice %559 {offsets = [0, 64], sizes = [8, 32], strides = [1, 1]} : vector<8x128xf32> to vector<8x32xf32>
    %570 = arith.mulf %568, %569 : vector<8x32xf32>
    %571 = arith.addf %567, %570 : vector<8x32xf32>
    %572 = vector.extract_strided_slice %552 {offsets = [0, 96], sizes = [8, 32], strides = [1, 1]} : vector<8x128xf32> to vector<8x32xf32>
    %573 = math.tanh %565 : vector<8x32xf32>
    %574 = arith.mulf %572, %573 : vector<8x32xf32>
    %575 = vector.extract_strided_slice %559 {offsets = [0, 96], sizes = [8, 32], strides = [1, 1]} : vector<8x128xf32> to vector<8x32xf32>
    %576 = math.tanh %571 : vector<8x32xf32>
    %577 = arith.mulf %575, %576 : vector<8x32xf32>
    %cst_97 = arith.constant dense<0.000000e+00> : vector<8x128xf32>
    %578 = tpu.matmul %574, %347, %cst_97 {dimension_numbers = #tpu.dot_dimension_numbers<[1], [0], [0], [1], [0, 0, 1, 1], [], []>} : vector<8x32xf32>, vector<32x128xf32>, vector<8x128xf32> -> vector<8x128xf32>
    %cst_98 = arith.constant dense<0.000000e+00> : vector<8x128xf32>
    %579 = tpu.matmul %577, %348, %cst_98 {dimension_numbers = #tpu.dot_dimension_numbers<[1], [0], [0], [1], [0, 0, 1, 1], [], []>} : vector<8x32xf32>, vector<32x128xf32>, vector<8x128xf32> -> vector<8x128xf32>
    %580 = vector.extract_strided_slice %346 {offsets = [48, 0], sizes = [8, 128], strides = [1, 1]} : vector<64x256xf32> to vector<8x128xf32>
    %581 = arith.addf %580, %578 : vector<8x128xf32>
    %582 = vector.extract_strided_slice %346 {offsets = [8, 128], sizes = [8, 128], strides = [1, 1]} : vector<64x256xf32> to vector<8x128xf32>
    %583 = arith.addf %582, %579 : vector<8x128xf32>
    %584 = math.tanh %581 : vector<8x128xf32>
    %585 = arith.negf %581 : vector<8x128xf32>
    %586 = math.exp %585 : vector<8x128xf32>
    %cst_99 = arith.constant 1.000000e+00 : f32
    %587 = vector.broadcast %cst_99 : f32 to vector<8x128xf32>
    %588 = arith.addf %587, %586 : vector<8x128xf32>
    %589 = arith.divf %587, %588 : vector<8x128xf32>
    %590 = arith.select %18, %584, %589 : vector<8x128xi1>, vector<8x128xf32>
    %591 = math.tanh %583 : vector<8x128xf32>
    %592 = arith.negf %583 : vector<8x128xf32>
    %593 = math.exp %592 : vector<8x128xf32>
    %cst_100 = arith.constant 1.000000e+00 : f32
    %594 = vector.broadcast %cst_100 : f32 to vector<8x128xf32>
    %595 = arith.addf %594, %593 : vector<8x128xf32>
    %596 = arith.divf %594, %595 : vector<8x128xf32>
    %597 = arith.select %18, %591, %596 : vector<8x128xi1>, vector<8x128xf32>
    %598 = vector.extract_strided_slice %590 {offsets = [0, 32], sizes = [8, 32], strides = [1, 1]} : vector<8x128xf32> to vector<8x32xf32>
    %599 = arith.mulf %598, %565 : vector<8x32xf32>
    %600 = vector.extract_strided_slice %590 {offsets = [0, 0], sizes = [8, 32], strides = [1, 1]} : vector<8x128xf32> to vector<8x32xf32>
    %601 = vector.extract_strided_slice %590 {offsets = [0, 64], sizes = [8, 32], strides = [1, 1]} : vector<8x128xf32> to vector<8x32xf32>
    %602 = arith.mulf %600, %601 : vector<8x32xf32>
    %603 = arith.addf %599, %602 : vector<8x32xf32>
    %604 = vector.extract_strided_slice %597 {offsets = [0, 32], sizes = [8, 32], strides = [1, 1]} : vector<8x128xf32> to vector<8x32xf32>
    %605 = arith.mulf %604, %571 : vector<8x32xf32>
    %606 = vector.extract_strided_slice %597 {offsets = [0, 0], sizes = [8, 32], strides = [1, 1]} : vector<8x128xf32> to vector<8x32xf32>
    %607 = vector.extract_strided_slice %597 {offsets = [0, 64], sizes = [8, 32], strides = [1, 1]} : vector<8x128xf32> to vector<8x32xf32>
    %608 = arith.mulf %606, %607 : vector<8x32xf32>
    %609 = arith.addf %605, %608 : vector<8x32xf32>
    %610 = vector.extract_strided_slice %590 {offsets = [0, 96], sizes = [8, 32], strides = [1, 1]} : vector<8x128xf32> to vector<8x32xf32>
    %611 = math.tanh %603 : vector<8x32xf32>
    %612 = arith.mulf %610, %611 : vector<8x32xf32>
    %613 = vector.extract_strided_slice %597 {offsets = [0, 96], sizes = [8, 32], strides = [1, 1]} : vector<8x128xf32> to vector<8x32xf32>
    %614 = math.tanh %609 : vector<8x32xf32>
    %615 = arith.mulf %613, %614 : vector<8x32xf32>
    %cst_101 = arith.constant dense<0.000000e+00> : vector<8x128xf32>
    %616 = tpu.matmul %612, %347, %cst_101 {dimension_numbers = #tpu.dot_dimension_numbers<[1], [0], [0], [1], [0, 0, 1, 1], [], []>} : vector<8x32xf32>, vector<32x128xf32>, vector<8x128xf32> -> vector<8x128xf32>
    %cst_102 = arith.constant dense<0.000000e+00> : vector<8x128xf32>
    %617 = tpu.matmul %615, %348, %cst_102 {dimension_numbers = #tpu.dot_dimension_numbers<[1], [0], [0], [1], [0, 0, 1, 1], [], []>} : vector<8x32xf32>, vector<32x128xf32>, vector<8x128xf32> -> vector<8x128xf32>
    %618 = vector.extract_strided_slice %346 {offsets = [56, 0], sizes = [8, 128], strides = [1, 1]} : vector<64x256xf32> to vector<8x128xf32>
    %619 = arith.addf %618, %616 : vector<8x128xf32>
    %620 = vector.extract_strided_slice %346 {offsets = [0, 128], sizes = [8, 128], strides = [1, 1]} : vector<64x256xf32> to vector<8x128xf32>
    %621 = arith.addf %620, %617 : vector<8x128xf32>
    %622 = math.tanh %619 : vector<8x128xf32>
    %623 = arith.negf %619 : vector<8x128xf32>
    %624 = math.exp %623 : vector<8x128xf32>
    %cst_103 = arith.constant 1.000000e+00 : f32
    %625 = vector.broadcast %cst_103 : f32 to vector<8x128xf32>
    %626 = arith.addf %625, %624 : vector<8x128xf32>
    %627 = arith.divf %625, %626 : vector<8x128xf32>
    %628 = arith.select %18, %622, %627 : vector<8x128xi1>, vector<8x128xf32>
    %629 = math.tanh %621 : vector<8x128xf32>
    %630 = arith.negf %621 : vector<8x128xf32>
    %631 = math.exp %630 : vector<8x128xf32>
    %cst_104 = arith.constant 1.000000e+00 : f32
    %632 = vector.broadcast %cst_104 : f32 to vector<8x128xf32>
    %633 = arith.addf %632, %631 : vector<8x128xf32>
    %634 = arith.divf %632, %633 : vector<8x128xf32>
    %635 = arith.select %18, %629, %634 : vector<8x128xi1>, vector<8x128xf32>
    %636 = vector.extract_strided_slice %628 {offsets = [0, 32], sizes = [8, 32], strides = [1, 1]} : vector<8x128xf32> to vector<8x32xf32>
    %637 = arith.mulf %636, %603 : vector<8x32xf32>
    %638 = vector.extract_strided_slice %628 {offsets = [0, 0], sizes = [8, 32], strides = [1, 1]} : vector<8x128xf32> to vector<8x32xf32>
    %639 = vector.extract_strided_slice %628 {offsets = [0, 64], sizes = [8, 32], strides = [1, 1]} : vector<8x128xf32> to vector<8x32xf32>
    %640 = arith.mulf %638, %639 : vector<8x32xf32>
    %641 = arith.addf %637, %640 : vector<8x32xf32>
    %642 = vector.extract_strided_slice %635 {offsets = [0, 32], sizes = [8, 32], strides = [1, 1]} : vector<8x128xf32> to vector<8x32xf32>
    %643 = arith.mulf %642, %609 : vector<8x32xf32>
    %644 = vector.extract_strided_slice %635 {offsets = [0, 0], sizes = [8, 32], strides = [1, 1]} : vector<8x128xf32> to vector<8x32xf32>
    %645 = vector.extract_strided_slice %635 {offsets = [0, 64], sizes = [8, 32], strides = [1, 1]} : vector<8x128xf32> to vector<8x32xf32>
    %646 = arith.mulf %644, %645 : vector<8x32xf32>
    %647 = arith.addf %643, %646 : vector<8x32xf32>
    %648 = vector.extract_strided_slice %628 {offsets = [0, 96], sizes = [8, 32], strides = [1, 1]} : vector<8x128xf32> to vector<8x32xf32>
    %649 = math.tanh %641 : vector<8x32xf32>
    %650 = arith.mulf %648, %649 : vector<8x32xf32>
    %651 = vector.extract_strided_slice %635 {offsets = [0, 96], sizes = [8, 32], strides = [1, 1]} : vector<8x128xf32> to vector<8x32xf32>
    %652 = math.tanh %647 : vector<8x32xf32>
    %653 = arith.mulf %651, %652 : vector<8x32xf32>
    %654 = tpu.concatenate %384, %422, %460, %498, %536, %574, %612, %650 in 0 : vector<8x32xf32>, vector<8x32xf32>, vector<8x32xf32>, vector<8x32xf32>, vector<8x32xf32>, vector<8x32xf32>, vector<8x32xf32>, vector<8x32xf32> -> vector<64x32xf32>
    %655 = tpu.concatenate %653, %615, %577, %539, %501, %463, %425, %387 in 0 : vector<8x32xf32>, vector<8x32xf32>, vector<8x32xf32>, vector<8x32xf32>, vector<8x32xf32>, vector<8x32xf32>, vector<8x32xf32>, vector<8x32xf32> -> vector<64x32xf32>
    %c0_105 = arith.constant 0 : index
    %c0_106 = arith.constant 0 : index
    %656 = vector.load %arg16[%c0_105, %c0_106] : memref<64x256xf32, #tpu.memory_space<vmem>>, vector<32x256xf32>
    %cst_107 = arith.constant dense<0.000000e+00> : vector<64x256xf32>
    %657 = tpu.matmul %654, %656, %cst_107 {dimension_numbers = #tpu.dot_dimension_numbers<[1], [0], [0], [1], [0, 0, 1, 1], [], []>} : vector<64x32xf32>, vector<32x256xf32>, vector<64x256xf32> -> vector<64x256xf32>
    %c32_108 = arith.constant 32 : index
    %c0_109 = arith.constant 0 : index
    %658 = vector.load %arg16[%c32_108, %c0_109] : memref<64x256xf32, #tpu.memory_space<vmem>>, vector<32x256xf32>
    %cst_110 = arith.constant dense<0.000000e+00> : vector<64x256xf32>
    %659 = tpu.matmul %655, %658, %cst_110 {dimension_numbers = #tpu.dot_dimension_numbers<[1], [0], [0], [1], [0, 0, 1, 1], [], []>} : vector<64x32xf32>, vector<32x256xf32>, vector<64x256xf32> -> vector<64x256xf32>
    %660 = arith.addf %657, %659 : vector<64x256xf32>
    %c0_111 = arith.constant 0 : index
    %c0_112 = arith.constant 0 : index
    %661 = vector.load %arg17[%c0_111, %c0_112] : memref<1x256xf32, #tpu.memory_space<vmem>>, vector<1x256xf32>
    %662 = vector.broadcast %661 : vector<1x256xf32> to vector<64x256xf32>
    %663 = arith.addf %660, %662 : vector<64x256xf32>
    %c0_113 = arith.constant 0 : index
    %c0_114 = arith.constant 0 : index
    %664 = vector.load %arg18[%c0_113, %c0_114] : memref<64x256xf32, #tpu.memory_space<vmem>>, vector<64x256xf32>
    tpu.vector_store %arg18[%c0_113, %c0_114], %663 {strides = array<i32>} : memref<64x256xf32, #tpu.memory_space<vmem>>, vector<64x256xf32>,
    return
  }
  func.func @transform_0(%arg0: i32) -> (i32, i32) {
    %c0_i32 = arith.constant 0 : i32
    %c0_i32_0 = arith.constant 0 : i32
    %c0_i32_1 = arith.constant 0 : i32
    return %c0_i32, %c0_i32_0 : i32, i32
  }
  func.func @transform_1(%arg0: i32) -> (i32, i32) {
    %c0_i32 = arith.constant 0 : i32
    %c0_i32_0 = arith.constant 0 : i32
    %c0_i32_1 = arith.constant 0 : i32
    return %c0_i32, %c0_i32_0 : i32, i32
  }
  func.func @transform_2(%arg0: i32) -> (i32, i32) {
    %c0_i32 = arith.constant 0 : i32
    %c0_i32_0 = arith.constant 0 : i32
    %c0_i32_1 = arith.constant 0 : i32
    return %c0_i32, %c0_i32_0 : i32, i32
  }
  func.func @transform_3(%arg0: i32) -> (i32, i32) {
    %c0_i32 = arith.constant 0 : i32
    %c0_i32_0 = arith.constant 0 : i32
    %c0_i32_1 = arith.constant 0 : i32
    return %c0_i32, %c0_i32_0 : i32, i32
  }
  func.func @transform_4(%arg0: i32) -> (i32, i32) {
    %c0_i32 = arith.constant 0 : i32
    %c0_i32_0 = arith.constant 0 : i32
    %c0_i32_1 = arith.constant 0 : i32
    return %c0_i32, %c0_i32_0 : i32, i32
  }
  func.func @transform_5(%arg0: i32) -> (i32, i32) {
    %c0_i32 = arith.constant 0 : i32
    %c0_i32_0 = arith.constant 0 : i32
    %c0_i32_1 = arith.constant 0 : i32
    return %c0_i32, %c0_i32_0 : i32, i32
  }
  func.func @transform_6(%arg0: i32) -> (i32, i32) {
    %c0_i32 = arith.constant 0 : i32
    %c0_i32_0 = arith.constant 0 : i32
    %c0_i32_1 = arith.constant 0 : i32
    return %c0_i32, %c0_i32_0 : i32, i32
  }
  func.func @transform_7(%arg0: i32) -> (i32, i32) {
    %c0_i32 = arith.constant 0 : i32
    %c0_i32_0 = arith.constant 0 : i32
    %c0_i32_1 = arith.constant 0 : i32
    return %c0_i32, %c0_i32_0 : i32, i32
  }
  func.func @transform_8(%arg0: i32) -> (i32, i32) {
    %c0_i32 = arith.constant 0 : i32
    %c0_i32_0 = arith.constant 0 : i32
    %c0_i32_1 = arith.constant 0 : i32
    return %c0_i32, %c0_i32_0 : i32, i32
  }
  func.func @transform_9(%arg0: i32) -> (i32, i32) {
    %c0_i32 = arith.constant 0 : i32
    %c0_i32_0 = arith.constant 0 : i32
    %c0_i32_1 = arith.constant 0 : i32
    return %c0_i32, %c0_i32_0 : i32, i32
  }
  func.func @transform_10(%arg0: i32) -> (i32, i32) {
    %c0_i32 = arith.constant 0 : i32
    %c0_i32_0 = arith.constant 0 : i32
    %c0_i32_1 = arith.constant 0 : i32
    return %c0_i32, %c0_i32_0 : i32, i32
  }
  func.func @transform_11(%arg0: i32) -> (i32, i32) {
    %c0_i32 = arith.constant 0 : i32
    %c0_i32_0 = arith.constant 0 : i32
    %c0_i32_1 = arith.constant 0 : i32
    return %c0_i32, %c0_i32_0 : i32, i32
  }
  func.func @transform_12(%arg0: i32) -> (i32, i32) {
    %c0_i32 = arith.constant 0 : i32
    %c0_i32_0 = arith.constant 0 : i32
    %c0_i32_1 = arith.constant 0 : i32
    return %c0_i32, %c0_i32_0 : i32, i32
  }
  func.func @transform_13(%arg0: i32) -> (i32, i32) {
    %c0_i32 = arith.constant 0 : i32
    %c0_i32_0 = arith.constant 0 : i32
    %c0_i32_1 = arith.constant 0 : i32
    return %c0_i32, %c0_i32_0 : i32, i32
  }
  func.func @transform_14(%arg0: i32) -> (i32, i32) {
    %c0_i32 = arith.constant 0 : i32
    %c0_i32_0 = arith.constant 0 : i32
    %c0_i32_1 = arith.constant 0 : i32
    return %c0_i32, %c0_i32_0 : i32, i32
  }
  func.func @transform_15(%arg0: i32) -> (i32, i32) {
    %c0_i32 = arith.constant 0 : i32
    %c0_i32_0 = arith.constant 0 : i32
    %c0_i32_1 = arith.constant 0 : i32
    return %c0_i32, %c0_i32_0 : i32, i32
  }
  func.func @transform_16(%arg0: i32) -> (i32, i32) {
    %c0_i32 = arith.constant 0 : i32
    %c0_i32_0 = arith.constant 0 : i32
    %c0_i32_1 = arith.constant 0 : i32
    return %c0_i32, %c0_i32_0 : i32, i32
  }
  func.func @transform_17(%arg0: i32) -> (i32, i32) {
    %c0_i32 = arith.constant 0 : i32
    %c0_i32_0 = arith.constant 0 : i32
    %c0_i32_1 = arith.constant 0 : i32
    return %c0_i32, %c0_i32_0 : i32, i32
  }
}

</mosaic_0001>

<llo_original>
// kernel: forward_pallas.1
$region0: #{forward_pallas.1}
  #allocation0 [shape = 'u32[]', space=smem, size = 0x4, offset = 0x4, fixed_abs, tag = 'smem constant byte address 0x4 - core index']
  #allocation1 [shape = 'u32[144,128]{1,0:T(1,128)}', space=vmem, size = 0x12000, scoped, tag = 'internal scratch']
  %s0 = inlined_call_operand.vmem [shape: f32[64,768], index: 0, kind: input, shape index: {}]
  %s1 = inlined_call_operand.vmem [shape: f32[64,204], index: 1, kind: input, shape index: {}]
  %s2 = inlined_call_operand.vmem [shape: f32[64,32], index: 2, kind: input, shape index: {}]
  %s3 = inlined_call_operand.vmem [shape: f32[768,32], index: 3, kind: input, shape index: {}]
  %s4 = inlined_call_operand.vmem [shape: f32[1,32], index: 4, kind: input, shape index: {}]
  %s5 = inlined_call_operand.vmem [shape: f32[204,32], index: 5, kind: input, shape index: {}]
  %s6 = inlined_call_operand.vmem [shape: f32[1,32], index: 6, kind: input, shape index: {}]
  %s7 = inlined_call_operand.vmem [shape: f32[96,256], index: 7, kind: input, shape index: {}]
  %s8 = inlined_call_operand.vmem [shape: f32[1,256], index: 8, kind: input, shape index: {}]
  %s9 = inlined_call_operand.vmem [shape: f32[32,128], index: 9, kind: input, shape index: {}]
  %s10 = inlined_call_operand.vmem [shape: f32[32,128], index: 10, kind: input, shape index: {}]
  %s11 = inlined_call_operand.vmem [shape: f32[64,256], index: 11, kind: input, shape index: {}]
  %s12 = inlined_call_operand.vmem [shape: f32[1,256], index: 12, kind: input, shape index: {}]
  %s13 = inlined_call_operand.vmem [shape: f32[32,128], index: 13, kind: input, shape index: {}]
  %s14 = inlined_call_operand.vmem [shape: f32[32,128], index: 14, kind: input, shape index: {}]
  %s15 = inlined_call_operand.vmem [shape: f32[64,256], index: 15, kind: input, shape index: {}]
  %s16 = inlined_call_operand.vmem [shape: f32[1,256], index: 16, kind: input, shape index: {}]
  %s17 = inlined_call_operand.vmem [shape: f32[64,256], index: 17, kind: output, shape index: {}]
  %s18 = sld [smem:[#allocation0]]
  $region78: #{forward_pallas.1} parent=0
    _
  %s20 = ssub.s32 1, %s18
  %s21 = scalar_select 0, %s20, %s18
  // Predicated region
  $region2: #{forward_pallas.1} parent=0 // pred_check
    _
  $region3: #{forward_pallas.1} parent=0 // pred_check_branch
    %23 = sbr.rel (0) target = $region5
  $region4: #{forward_pallas.1} parent=0 // pred_region
    _
  $region5: #{forward_pallas.1} parent=0 // pred_fallthru
    _
  // Predicated region
  $region6: #{forward_pallas.1} parent=0 // pred_check
    _
  $region7: #{forward_pallas.1} parent=0 // pred_check_branch
    %25 = sbr.rel (0) target = $region9
  $region8: #{forward_pallas.1} parent=0 // pred_region
    _
  $region9: #{forward_pallas.1} parent=0 // pred_fallthru
    _
  // Predicated region
  $region10: #{forward_pallas.1} parent=0 // pred_check
    _
  $region11: #{forward_pallas.1} parent=0 // pred_check_branch
    %27 = sbr.rel (0) target = $region13
  $region12: #{forward_pallas.1} parent=0 // pred_region
    _
  $region13: #{forward_pallas.1} parent=0 // pred_fallthru
    _
  // Predicated region
  $region14: #{forward_pallas.1} parent=0 // pred_check
    _
  $region15: #{forward_pallas.1} parent=0 // pred_check_branch
    %29 = sbr.rel (0) target = $region17
  $region16: #{forward_pallas.1} parent=0 // pred_region
    _
  $region17: #{forward_pallas.1} parent=0 // pred_fallthru
    _
  // Predicated region
  $region18: #{forward_pallas.1} parent=0 // pred_check
    _
  $region19: #{forward_pallas.1} parent=0 // pred_check_branch
    %31 = sbr.rel (0) target = $region21
  $region20: #{forward_pallas.1} parent=0 // pred_region
    _
  $region21: #{forward_pallas.1} parent=0 // pred_fallthru
    _
  // Predicated region
  $region22: #{forward_pallas.1} parent=0 // pred_check
    _
  $region23: #{forward_pallas.1} parent=0 // pred_check_branch
    %33 = sbr.rel (0) target = $region25
  $region24: #{forward_pallas.1} parent=0 // pred_region
    _
  $region25: #{forward_pallas.1} parent=0 // pred_fallthru
    _
  // Predicated region
  $region26: #{forward_pallas.1} parent=0 // pred_check
    _
  $region27: #{forward_pallas.1} parent=0 // pred_check_branch
    %35 = sbr.rel (0) target = $region29
  $region28: #{forward_pallas.1} parent=0 // pred_region
    _
  $region29: #{forward_pallas.1} parent=0 // pred_fallthru
    _
  // Predicated region
  $region30: #{forward_pallas.1} parent=0 // pred_check
    _
  $region31: #{forward_pallas.1} parent=0 // pred_check_branch
    %37 = sbr.rel (0) target = $region33
  $region32: #{forward_pallas.1} parent=0 // pred_region
    _
  $region33: #{forward_pallas.1} parent=0 // pred_fallthru
    _
  // Predicated region
  $region34: #{forward_pallas.1} parent=0 // pred_check
    _
  $region35: #{forward_pallas.1} parent=0 // pred_check_branch
    %39 = sbr.rel (0) target = $region37
  $region36: #{forward_pallas.1} parent=0 // pred_region
    _
  $region37: #{forward_pallas.1} parent=0 // pred_fallthru
    _
  // Predicated region
  $region38: #{forward_pallas.1} parent=0 // pred_check
    _
  $region39: #{forward_pallas.1} parent=0 // pred_check_branch
    %41 = sbr.rel (0) target = $region41
  $region40: #{forward_pallas.1} parent=0 // pred_region
    _
  $region41: #{forward_pallas.1} parent=0 // pred_fallthru
    _
  // Predicated region
  $region42: #{forward_pallas.1} parent=0 // pred_check
    _
  $region43: #{forward_pallas.1} parent=0 // pred_check_branch
    %43 = sbr.rel (0) target = $region45
  $region44: #{forward_pallas.1} parent=0 // pred_region
    _
  $region45: #{forward_pallas.1} parent=0 // pred_fallthru
    _
  // Predicated region
  $region46: #{forward_pallas.1} parent=0 // pred_check
    _
  $region47: #{forward_pallas.1} parent=0 // pred_check_branch
    %45 = sbr.rel (0) target = $region49
  $region48: #{forward_pallas.1} parent=0 // pred_region
    _
  $region49: #{forward_pallas.1} parent=0 // pred_fallthru
    _
  // Predicated region
  $region50: #{forward_pallas.1} parent=0 // pred_check
    _
  $region51: #{forward_pallas.1} parent=0 // pred_check_branch
    %47 = sbr.rel (0) target = $region53
  $region52: #{forward_pallas.1} parent=0 // pred_region
    _
  $region53: #{forward_pallas.1} parent=0 // pred_fallthru
    _
  // Predicated region
  $region54: #{forward_pallas.1} parent=0 // pred_check
    _
  $region55: #{forward_pallas.1} parent=0 // pred_check_branch
    %49 = sbr.rel (0) target = $region57
  $region56: #{forward_pallas.1} parent=0 // pred_region
    _
  $region57: #{forward_pallas.1} parent=0 // pred_fallthru
    _
  // Predicated region
  $region58: #{forward_pallas.1} parent=0 // pred_check
    _
  $region59: #{forward_pallas.1} parent=0 // pred_check_branch
    %51 = sbr.rel (0) target = $region61
  $region60: #{forward_pallas.1} parent=0 // pred_region
    _
  $region61: #{forward_pallas.1} parent=0 // pred_fallthru
    _
  // Predicated region
  $region62: #{forward_pallas.1} parent=0 // pred_check
    _
  $region63: #{forward_pallas.1} parent=0 // pred_check_branch
    %53 = sbr.rel (0) target = $region65
  $region64: #{forward_pallas.1} parent=0 // pred_region
    _
  $region65: #{forward_pallas.1} parent=0 // pred_fallthru
    _
  // Predicated region
  $region66: #{forward_pallas.1} parent=0 // pred_check
    _
  $region67: #{forward_pallas.1} parent=0 // pred_check_branch
    %55 = sbr.rel (0) target = $region69
  $region68: #{forward_pallas.1} parent=0 // pred_region
    _
  $region69: #{forward_pallas.1} parent=0 // pred_fallthru
    _
  %v56 = vld [vmem:[%s0] sm:$0xff]
  %v57 = vld [vmem:[%s0 + $0x8] sm:$0xff]
  %v58 = vld [vmem:[%s0 + $0x10] sm:$0xff]
  %v59 = vld [vmem:[%s0 + $0x18] sm:$0xff]
  %v60 = vld [vmem:[%s0 + $0x20] sm:$0xff]
  %v61 = vld [vmem:[%s0 + $0x28] sm:$0xff]
  %v62 = vld [vmem:[%s0 + $0x30] sm:$0xff]
  %v63 = vld [vmem:[%s0 + $0x38] sm:$0xff]
  %v64 = vld [vmem:[%s0 + $0x40] sm:$0xff]
  %v65 = vld [vmem:[%s0 + $0x48] sm:$0xff]
  %v66 = vld [vmem:[%s0 + $0x50] sm:$0xff]
  %v67 = vld [vmem:[%s0 + $0x58] sm:$0xff]
  %v68 = vld [vmem:[%s0 + $0x60] sm:$0xff]
  %v69 = vld [vmem:[%s0 + $0x68] sm:$0xff]
  %v70 = vld [vmem:[%s0 + $0x70] sm:$0xff]
  %v71 = vld [vmem:[%s0 + $0x78] sm:$0xff]
  %v72 = vld [vmem:[%s0 + $0x80] sm:$0xff]
  %v73 = vld [vmem:[%s0 + $0x88] sm:$0xff]
  %v74 = vld [vmem:[%s0 + $0x90] sm:$0xff]
  %v75 = vld [vmem:[%s0 + $0x98] sm:$0xff]
  %v76 = vld [vmem:[%s0 + $0xa0] sm:$0xff]
  %v77 = vld [vmem:[%s0 + $0xa8] sm:$0xff]
  %v78 = vld [vmem:[%s0 + $0xb0] sm:$0xff]
  %v79 = vld [vmem:[%s0 + $0xb8] sm:$0xff]
  %v80 = vld [vmem:[%s0 + $0xc0] sm:$0xff]
  %v81 = vld [vmem:[%s0 + $0xc8] sm:$0xff]
  %v82 = vld [vmem:[%s0 + $0xd0] sm:$0xff]
  %v83 = vld [vmem:[%s0 + $0xd8] sm:$0xff]
  %v84 = vld [vmem:[%s0 + $0xe0] sm:$0xff]
  %v85 = vld [vmem:[%s0 + $0xe8] sm:$0xff]
  %v86 = vld [vmem:[%s0 + $0xf0] sm:$0xff]
  %v87 = vld [vmem:[%s0 + $0xf8] sm:$0xff]
  %v88 = vld [vmem:[%s0 + $0x100] sm:$0xff]
  %v89 = vld [vmem:[%s0 + $0x108] sm:$0xff]
  %v90 = vld [vmem:[%s0 + $0x110] sm:$0xff]
  %v91 = vld [vmem:[%s0 + $0x118] sm:$0xff]
  %v92 = vld [vmem:[%s0 + $0x120] sm:$0xff]
  %v93 = vld [vmem:[%s0 + $0x128] sm:$0xff]
  %v94 = vld [vmem:[%s0 + $0x130] sm:$0xff]
  %v95 = vld [vmem:[%s0 + $0x138] sm:$0xff]
  %v96 = vld [vmem:[%s0 + $0x140] sm:$0xff]
  %v97 = vld [vmem:[%s0 + $0x148] sm:$0xff]
  %v98 = vld [vmem:[%s0 + $0x150] sm:$0xff]
  %v99 = vld [vmem:[%s0 + $0x158] sm:$0xff]
  %v100 = vld [vmem:[%s0 + $0x160] sm:$0xff]
  %v101 = vld [vmem:[%s0 + $0x168] sm:$0xff]
  %v102 = vld [vmem:[%s0 + $0x170] sm:$0xff]
  %v103 = vld [vmem:[%s0 + $0x178] sm:$0xff]
  %v104 = vld [vmem:[%s3] sm:$0xff]
  %v105 = vld [vmem:[%s3 + $0x8] sm:$0xff]
  %v106 = vld [vmem:[%s3 + $0x10] sm:$0xff]
  %v107 = vld [vmem:[%s3 + $0x18] sm:$0xff]
  %v108 = vld [vmem:[%s3 + $0x20] sm:$0xff]
  %v109 = vld [vmem:[%s3 + $0x28] sm:$0xff]
  %v110 = vld [vmem:[%s3 + $0x30] sm:$0xff]
  %v111 = vld [vmem:[%s3 + $0x38] sm:$0xff]
  %v112 = vld [vmem:[%s3 + $0x40] sm:$0xff]
  %v113 = vld [vmem:[%s3 + $0x48] sm:$0xff]
  %v114 = vld [vmem:[%s3 + $0x50] sm:$0xff]
  %v115 = vld [vmem:[%s3 + $0x58] sm:$0xff]
  %v116 = vld [vmem:[%s3 + $0x60] sm:$0xff]
  %v117 = vld [vmem:[%s3 + $0x68] sm:$0xff]
  %v118 = vld [vmem:[%s3 + $0x70] sm:$0xff]
  %v119 = vld [vmem:[%s3 + $0x78] sm:$0xff]
  %v120 = vld [vmem:[%s3 + $0x80] sm:$0xff]
  %v121 = vld [vmem:[%s3 + $0x88] sm:$0xff]
  %v122 = vld [vmem:[%s3 + $0x90] sm:$0xff]
  %v123 = vld [vmem:[%s3 + $0x98] sm:$0xff]
  %v124 = vld [vmem:[%s3 + $0xa0] sm:$0xff]
  %v125 = vld [vmem:[%s3 + $0xa8] sm:$0xff]
  %v126 = vld [vmem:[%s3 + $0xb0] sm:$0xff]
  %v127 = vld [vmem:[%s3 + $0xb8] sm:$0xff]
  %v128 = vld [vmem:[%s3 + $0xc0] sm:$0xff]
  %v129 = vld [vmem:[%s3 + $0xc8] sm:$0xff]
  %v130 = vld [vmem:[%s3 + $0xd0] sm:$0xff]
  %v131 = vld [vmem:[%s3 + $0xd8] sm:$0xff]
  %v132 = vld [vmem:[%s3 + $0xe0] sm:$0xff]
  %v133 = vld [vmem:[%s3 + $0xe8] sm:$0xff]
  %v134 = vld [vmem:[%s3 + $0xf0] sm:$0xff]
  %v135 = vld [vmem:[%s3 + $0xf8] sm:$0xff]
  %v136 = vld [vmem:[%s3 + $0x100] sm:$0xff]
  %v137 = vld [vmem:[%s3 + $0x108] sm:$0xff]
  %v138 = vld [vmem:[%s3 + $0x110] sm:$0xff]
  %v139 = vld [vmem:[%s3 + $0x118] sm:$0xff]
  %v140 = vld [vmem:[%s3 + $0x120] sm:$0xff]
  %v141 = vld [vmem:[%s3 + $0x128] sm:$0xff]
  %v142 = vld [vmem:[%s3 + $0x130] sm:$0xff]
  %v143 = vld [vmem:[%s3 + $0x138] sm:$0xff]
  %v144 = vld [vmem:[%s3 + $0x140] sm:$0xff]
  %v145 = vld [vmem:[%s3 + $0x148] sm:$0xff]
  %v146 = vld [vmem:[%s3 + $0x150] sm:$0xff]
  %v147 = vld [vmem:[%s3 + $0x158] sm:$0xff]
  %v148 = vld [vmem:[%s3 + $0x160] sm:$0xff]
  %v149 = vld [vmem:[%s3 + $0x168] sm:$0xff]
  %v150 = vld [vmem:[%s3 + $0x170] sm:$0xff]
  %v151 = vld [vmem:[%s3 + $0x178] sm:$0xff]
  %v152 = vld [vmem:[%s3 + $0x180] sm:$0xff]
  %v153 = vld [vmem:[%s3 + $0x188] sm:$0xff]
  %v154 = vld [vmem:[%s3 + $0x190] sm:$0xff]
  %v155 = vld [vmem:[%s3 + $0x198] sm:$0xff]
  %v156 = vld [vmem:[%s3 + $0x1a0] sm:$0xff]
  %v157 = vld [vmem:[%s3 + $0x1a8] sm:$0xff]
  %v158 = vld [vmem:[%s3 + $0x1b0] sm:$0xff]
  %v159 = vld [vmem:[%s3 + $0x1b8] sm:$0xff]
  %v160 = vld [vmem:[%s3 + $0x1c0] sm:$0xff]
  %v161 = vld [vmem:[%s3 + $0x1c8] sm:$0xff]
  %v162 = vld [vmem:[%s3 + $0x1d0] sm:$0xff]
  %v163 = vld [vmem:[%s3 + $0x1d8] sm:$0xff]
  %v164 = vld [vmem:[%s3 + $0x1e0] sm:$0xff]
  %v165 = vld [vmem:[%s3 + $0x1e8] sm:$0xff]
  %v166 = vld [vmem:[%s3 + $0x1f0] sm:$0xff]
  %v167 = vld [vmem:[%s3 + $0x1f8] sm:$0xff]
  %v168 = vld [vmem:[%s3 + $0x200] sm:$0xff]
  %v169 = vld [vmem:[%s3 + $0x208] sm:$0xff]
  %v170 = vld [vmem:[%s3 + $0x210] sm:$0xff]
  %v171 = vld [vmem:[%s3 + $0x218] sm:$0xff]
  %v172 = vld [vmem:[%s3 + $0x220] sm:$0xff]
  %v173 = vld [vmem:[%s3 + $0x228] sm:$0xff]
  %v174 = vld [vmem:[%s3 + $0x230] sm:$0xff]
  %v175 = vld [vmem:[%s3 + $0x238] sm:$0xff]
  %v176 = vld [vmem:[%s3 + $0x240] sm:$0xff]
  %v177 = vld [vmem:[%s3 + $0x248] sm:$0xff]
  %v178 = vld [vmem:[%s3 + $0x250] sm:$0xff]
  %v179 = vld [vmem:[%s3 + $0x258] sm:$0xff]
  %v180 = vld [vmem:[%s3 + $0x260] sm:$0xff]
  %v181 = vld [vmem:[%s3 + $0x268] sm:$0xff]
  %v182 = vld [vmem:[%s3 + $0x270] sm:$0xff]
  %v183 = vld [vmem:[%s3 + $0x278] sm:$0xff]
  %v184 = vld [vmem:[%s3 + $0x280] sm:$0xff]
  %v185 = vld [vmem:[%s3 + $0x288] sm:$0xff]
  %v186 = vld [vmem:[%s3 + $0x290] sm:$0xff]
  %v187 = vld [vmem:[%s3 + $0x298] sm:$0xff]
  %v188 = vld [vmem:[%s3 + $0x2a0] sm:$0xff]
  %v189 = vld [vmem:[%s3 + $0x2a8] sm:$0xff]
  %v190 = vld [vmem:[%s3 + $0x2b0] sm:$0xff]
  %v191 = vld [vmem:[%s3 + $0x2b8] sm:$0xff]
  %v192 = vld [vmem:[%s3 + $0x2c0] sm:$0xff]
  %v193 = vld [vmem:[%s3 + $0x2c8] sm:$0xff]
  %v194 = vld [vmem:[%s3 + $0x2d0] sm:$0xff]
  %v195 = vld [vmem:[%s3 + $0x2d8] sm:$0xff]
  %v196 = vld [vmem:[%s3 + $0x2e0] sm:$0xff]
  %v197 = vld [vmem:[%s3 + $0x2e8] sm:$0xff]
  %v198 = vld [vmem:[%s3 + $0x2f0] sm:$0xff]
  %v199 = vld [vmem:[%s3 + $0x2f8] sm:$0xff]
  %v200 = vld [vmem:[%s4] sm:$0x1]
  %v202 = vlaneseq
  %v203 = vshrl.u32 %v202, 7
  %v204 = vsub.s32 0, %v203
  %v205 = vrot.slane %v200, %v204
  %207 = vmatprep.subr.mxu0 0.0
  %208 = vmatpush1.msra.mxu0 %v104
  %209 = vmatprep.subr.mxu0 0.0
  %210 = vmatpush1.msra.mxu0 %v105
  %211 = vmatprep.subr.mxu0 0.0
  %212 = vmatpush1.msra.mxu0 %v106
  %213 = vmatprep.subr.mxu0 0.0
  %214 = vmatpush1.msra.mxu0 %v107
  %215 = vmatprep.subr.mxu0 0.0
  %216 = vmatpush1.msra.mxu0 %v108
  %217 = vmatprep.subr.mxu0 0.0
  %218 = vmatpush1.msra.mxu0 %v109
  %219 = vmatprep.subr.mxu0 0.0
  %220 = vmatpush1.msra.mxu0 %v110
  %221 = vmatprep.subr.mxu0 0.0
  %222 = vmatpush1.msra.mxu0 %v111
  %223 = vmatprep.subr.mxu0 0.0
  %224 = vmatpush1.msra.mxu0 %v112
  %225 = vmatprep.subr.mxu0 0.0
  %226 = vmatpush1.msra.mxu0 %v113
  %227 = vmatprep.subr.mxu0 0.0
  %228 = vmatpush1.msra.mxu0 %v114
  %229 = vmatprep.subr.mxu0 0.0
  %230 = vmatpush1.msra.mxu0 %v115
  %231 = vmatprep.subr.mxu0 0.0
  %232 = vmatpush1.msra.mxu0 %v116
  %233 = vmatprep.subr.mxu0 0.0
  %234 = vmatpush1.msra.mxu0 %v117
  %235 = vmatprep.subr.mxu0 0.0
  %236 = vmatpush1.msra.mxu0 %v118
  %237 = vmatprep.subr.mxu0 0.0
  %238 = vmatpush1.msra.mxu0 %v119
  %239 = vmatprep.subr.mxu0 0.0
  %240 = vmatpush1.msra.mxu0 %v120
  %241 = vmatprep.subr.mxu0 0.0
  %242 = vmatpush1.msra.mxu0 %v121
  %243 = vmatprep.subr.mxu0 0.0
  %244 = vmatpush1.msra.mxu0 %v122
  %245 = vmatprep.subr.mxu0 0.0
  %246 = vmatpush1.msra.mxu0 %v123
  %247 = vmatprep.subr.mxu0 0.0
  %248 = vmatpush1.msra.mxu0 %v124
  %249 = vmatprep.subr.mxu0 0.0
  %250 = vmatpush1.msra.mxu0 %v125
  %251 = vmatprep.subr.mxu0 0.0
  %252 = vmatpush1.msra.mxu0 %v126
  %253 = vmatprep.subr.mxu0 0.0
  %254 = vmatpush1.msra.mxu0 %v127
  %255 = vmatprep.subr.mxu0 0.0
  %256 = vmatpush1.msra.mxu0 %v128
  %257 = vmatprep.subr.mxu0 0.0
  %258 = vmatpush1.msra.mxu0 %v129
  %259 = vmatprep.subr.mxu0 0.0
  %260 = vmatpush1.msra.mxu0 %v130
  %261 = vmatprep.subr.mxu0 0.0
  %262 = vmatpush1.msra.mxu0 %v131
  %263 = vmatprep.subr.mxu0 0.0
  %264 = vmatpush1.msra.mxu0 %v132
  %265 = vmatprep.subr.mxu0 0.0
  %266 = vmatpush1.msra.mxu0 %v133
  %267 = vmatprep.subr.mxu0 0.0
  %268 = vmatpush1.msra.mxu0 %v134
  %269 = vmatprep.subr.mxu0 0.0
  %270 = vmatpush1.msra.mxu0 %v135
  %271 = vmatprep.mubr.f32.mxu0 %v57
  %272 = vmatmul.mubr.f32.gmra.mrb[0].mxu0 %v56
  %v273 = vpop.f32.mrb[0].mxu0
  %v274 = vadd.f32 %v205, %v273
  %v275 = vpop.f32.mrb[0].mxu0
  %276 = vmatprep.mubr.f32.mxu0 %v63
  %277 = vmatmul.mubr.f32.gmra.mrb[0].mxu0 %v62
  %v278 = vpop.f32.mrb[0].mxu0
  %v279 = vadd.f32 %v205, %v278
  %v280 = vpop.f32.mrb[0].mxu0
  %281 = vmatprep.mubr.f32.mxu0 %v69
  %282 = vmatmul.mubr.f32.gmra.mrb[0].mxu0 %v68
  %v283 = vpop.f32.mrb[0].mxu0
  %v284 = vadd.f32 %v205, %v283
  %v285 = vpop.f32.mrb[0].mxu0
  %286 = vmatprep.mubr.f32.mxu0 %v75
  %287 = vmatmul.mubr.f32.gmra.mrb[0].mxu0 %v74
  %v288 = vpop.f32.mrb[0].mxu0
  %v289 = vadd.f32 %v205, %v288
  %v290 = vpop.f32.mrb[0].mxu0
  %291 = vmatprep.mubr.f32.mxu0 %v81
  %292 = vmatmul.mubr.f32.gmra.mrb[0].mxu0 %v80
  %v293 = vpop.f32.mrb[0].mxu0
  %v294 = vadd.f32 %v205, %v293
  %v295 = vpop.f32.mrb[0].mxu0
  %296 = vmatprep.mubr.f32.mxu0 %v87
  %297 = vmatmul.mubr.f32.gmra.mrb[0].mxu0 %v86
  %v298 = vpop.f32.mrb[0].mxu0
  %v299 = vadd.f32 %v205, %v298
  %v300 = vpop.f32.mrb[0].mxu0
  %301 = vmatprep.mubr.f32.mxu0 %v93
  %302 = vmatmul.mubr.f32.gmra.mrb[0].mxu0 %v92
  %v303 = vpop.f32.mrb[0].mxu0
  %v304 = vadd.f32 %v205, %v303
  %v305 = vpop.f32.mrb[0].mxu0
  %306 = vmatprep.mubr.f32.mxu0 %v99
  %307 = vmatmul.mubr.f32.gmra.mrb[0].mxu0 %v98
  %v308 = vpop.f32.mrb[0].mxu0
  %v309 = vadd.f32 %v205, %v308
  %v310 = vpop.f32.mrb[0].mxu0
  %311 = vdwg.mxu0
  %312 = vmatprep.subr.mxu0 0.0
  %313 = vmatpush1.msra.mxu0 %v136
  %314 = vmatprep.subr.mxu0 0.0
  %315 = vmatpush1.msra.mxu0 %v137
  %316 = vmatprep.subr.mxu0 0.0
  %317 = vmatpush1.msra.mxu0 %v138
  %318 = vmatprep.subr.mxu0 0.0
  %319 = vmatpush1.msra.mxu0 %v139
  %320 = vmatprep.subr.mxu0 0.0
  %321 = vmatpush1.msra.mxu0 %v140
  %322 = vmatprep.subr.mxu0 0.0
  %323 = vmatpush1.msra.mxu0 %v141
  %324 = vmatprep.subr.mxu0 0.0
  %325 = vmatpush1.msra.mxu0 %v142
  %326 = vmatprep.subr.mxu0 0.0
  %327 = vmatpush1.msra.mxu0 %v143
  %328 = vmatprep.subr.mxu0 0.0
  %329 = vmatpush1.msra.mxu0 %v144
  %330 = vmatprep.subr.mxu0 0.0
  %331 = vmatpush1.msra.mxu0 %v145
  %332 = vmatprep.subr.mxu0 0.0
  %333 = vmatpush1.msra.mxu0 %v146
  %334 = vmatprep.subr.mxu0 0.0
  %335 = vmatpush1.msra.mxu0 %v147
  %336 = vmatprep.subr.mxu0 0.0
  %337 = vmatpush1.msra.mxu0 %v148
  %338 = vmatprep.subr.mxu0 0.0
  %339 = vmatpush1.msra.mxu0 %v149
  %340 = vmatprep.subr.mxu0 0.0
  %341 = vmatpush1.msra.mxu0 %v150
  %342 = vmatprep.subr.mxu0 0.0
  %343 = vmatpush1.msra.mxu0 %v151
  %344 = vmatprep.subr.mxu0 0.0
  %345 = vmatpush1.msra.mxu0 %v152
  %346 = vmatprep.subr.mxu0 0.0
  %347 = vmatpush1.msra.mxu0 %v153
  %348 = vmatprep.subr.mxu0 0.0
  %349 = vmatpush1.msra.mxu0 %v154
  %350 = vmatprep.subr.mxu0 0.0
  %351 = vmatpush1.msra.mxu0 %v155
  %352 = vmatprep.subr.mxu0 0.0
  %353 = vmatpush1.msra.mxu0 %v156
  %354 = vmatprep.subr.mxu0 0.0
  %355 = vmatpush1.msra.mxu0 %v157
  %356 = vmatprep.subr.mxu0 0.0
  %357 = vmatpush1.msra.mxu0 %v158
  %358 = vmatprep.subr.mxu0 0.0
  %359 = vmatpush1.msra.mxu0 %v159
  %360 = vmatprep.subr.mxu0 0.0
  %361 = vmatpush1.msra.mxu0 %v160
  %362 = vmatprep.subr.mxu0 0.0
  %363 = vmatpush1.msra.mxu0 %v161
  %364 = vmatprep.subr.mxu0 0.0
  %365 = vmatpush1.msra.mxu0 %v162
  %366 = vmatprep.subr.mxu0 0.0
  %367 = vmatpush1.msra.mxu0 %v163
  %368 = vmatprep.subr.mxu0 0.0
  %369 = vmatpush1.msra.mxu0 %v164
  %370 = vmatprep.subr.mxu0 0.0
  %371 = vmatpush1.msra.mxu0 %v165
  %372 = vmatprep.subr.mxu0 0.0
  %373 = vmatpush1.msra.mxu0 %v166
  %374 = vmatprep.subr.mxu0 0.0
  %375 = vmatpush1.msra.mxu0 %v167
  %376 = vmatprep.mubr.f32.mxu0 %v59
  %377 = vmatmul.mubr.f32.gmra.mrb[0].mxu0 %v58
  %v378 = vpop.f32.mrb[0].mxu0
  %v379 = vadd.f32 %v274, %v378
  %v380 = vpop.f32.mrb[0].mxu0
  %381 = vmatprep.mubr.f32.mxu0 %v65
  %382 = vmatmul.mubr.f32.gmra.mrb[0].mxu0 %v64
  %v383 = vpop.f32.mrb[0].mxu0
  %v384 = vadd.f32 %v279, %v383
  %v385 = vpop.f32.mrb[0].mxu0
  %386 = vmatprep.mubr.f32.mxu0 %v71
  %387 = vmatmul.mubr.f32.gmra.mrb[0].mxu0 %v70
  %v388 = vpop.f32.mrb[0].mxu0
  %v389 = vadd.f32 %v284, %v388
  %v390 = vpop.f32.mrb[0].mxu0
  %391 = vmatprep.mubr.f32.mxu0 %v77
  %392 = vmatmul.mubr.f32.gmra.mrb[0].mxu0 %v76
  %v393 = vpop.f32.mrb[0].mxu0
  %v394 = vadd.f32 %v289, %v393
  %v395 = vpop.f32.mrb[0].mxu0
  %396 = vmatprep.mubr.f32.mxu0 %v83
  %397 = vmatmul.mubr.f32.gmra.mrb[0].mxu0 %v82
  %v398 = vpop.f32.mrb[0].mxu0
  %v399 = vadd.f32 %v294, %v398
  %v400 = vpop.f32.mrb[0].mxu0
  %401 = vmatprep.mubr.f32.mxu0 %v89
  %402 = vmatmul.mubr.f32.gmra.mrb[0].mxu0 %v88
  %v403 = vpop.f32.mrb[0].mxu0
  %v404 = vadd.f32 %v299, %v403
  %v405 = vpop.f32.mrb[0].mxu0
  %406 = vmatprep.mubr.f32.mxu0 %v95
  %407 = vmatmul.mubr.f32.gmra.mrb[0].mxu0 %v94
  %v408 = vpop.f32.mrb[0].mxu0
  %v409 = vadd.f32 %v304, %v408
  %v410 = vpop.f32.mrb[0].mxu0
  %411 = vmatprep.mubr.f32.mxu0 %v101
  %412 = vmatmul.mubr.f32.gmra.mrb[0].mxu0 %v100
  %v413 = vpop.f32.mrb[0].mxu0
  %v414 = vadd.f32 %v309, %v413
  %v415 = vpop.f32.mrb[0].mxu0
  %416 = vdwg.mxu0
  %417 = vmatprep.subr.mxu0 0.0
  %418 = vmatpush1.msra.mxu0 %v168
  %419 = vmatprep.subr.mxu0 0.0
  %420 = vmatpush1.msra.mxu0 %v169
  %421 = vmatprep.subr.mxu0 0.0
  %422 = vmatpush1.msra.mxu0 %v170
  %423 = vmatprep.subr.mxu0 0.0
  %424 = vmatpush1.msra.mxu0 %v171
  %425 = vmatprep.subr.mxu0 0.0
  %426 = vmatpush1.msra.mxu0 %v172
  %427 = vmatprep.subr.mxu0 0.0
  %428 = vmatpush1.msra.mxu0 %v173
  %429 = vmatprep.subr.mxu0 0.0
  %430 = vmatpush1.msra.mxu0 %v174
  %431 = vmatprep.subr.mxu0 0.0
  %432 = vmatpush1.msra.mxu0 %v175
  %433 = vmatprep.subr.mxu0 0.0
  %434 = vmatpush1.msra.mxu0 %v176
  %435 = vmatprep.subr.mxu0 0.0
  %436 = vmatpush1.msra.mxu0 %v177
  %437 = vmatprep.subr.mxu0 0.0
  %438 = vmatpush1.msra.mxu0 %v178
  %439 = vmatprep.subr.mxu0 0.0
  %440 = vmatpush1.msra.mxu0 %v179
  %441 = vmatprep.subr.mxu0 0.0
  %442 = vmatpush1.msra.mxu0 %v180
  %443 = vmatprep.subr.mxu0 0.0
  %444 = vmatpush1.msra.mxu0 %v181
  %445 = vmatprep.subr.mxu0 0.0
  %446 = vmatpush1.msra.mxu0 %v182
  %447 = vmatprep.subr.mxu0 0.0
  %448 = vmatpush1.msra.mxu0 %v183
  %449 = vmatprep.subr.mxu0 0.0
  %450 = vmatpush1.msra.mxu0 %v184
  %451 = vmatprep.subr.mxu0 0.0
  %452 = vmatpush1.msra.mxu0 %v185
  %453 = vmatprep.subr.mxu0 0.0
  %454 = vmatpush1.msra.mxu0 %v186
  %455 = vmatprep.subr.mxu0 0.0
  %456 = vmatpush1.msra.mxu0 %v187
  %457 = vmatprep.subr.mxu0 0.0
  %458 = vmatpush1.msra.mxu0 %v188
  %459 = vmatprep.subr.mxu0 0.0
  %460 = vmatpush1.msra.mxu0 %v189
  %461 = vmatprep.subr.mxu0 0.0
  %462 = vmatpush1.msra.mxu0 %v190
  %463 = vmatprep.subr.mxu0 0.0
  %464 = vmatpush1.msra.mxu0 %v191
  %465 = vmatprep.subr.mxu0 0.0
  %466 = vmatpush1.msra.mxu0 %v192
  %467 = vmatprep.subr.mxu0 0.0
  %468 = vmatpush1.msra.mxu0 %v193
  %469 = vmatprep.subr.mxu0 0.0
  %470 = vmatpush1.msra.mxu0 %v194
  %471 = vmatprep.subr.mxu0 0.0
  %472 = vmatpush1.msra.mxu0 %v195
  %473 = vmatprep.subr.mxu0 0.0
  %474 = vmatpush1.msra.mxu0 %v196
  %475 = vmatprep.subr.mxu0 0.0
  %476 = vmatpush1.msra.mxu0 %v197
  %477 = vmatprep.subr.mxu0 0.0
  %478 = vmatpush1.msra.mxu0 %v198
  %479 = vmatprep.subr.mxu0 0.0
  %480 = vmatpush1.msra.mxu0 %v199
  %481 = vmatprep.mubr.f32.mxu0 %v61
  %482 = vmatmul.mubr.f32.gmra.mrb[0].mxu0 %v60
  %v483 = vpop.f32.mrb[0].mxu0
  %v484 = vadd.f32 %v379, %v483
  %v485 = vpop.f32.mrb[0].mxu0
  %486 = vmatprep.mubr.f32.mxu0 %v67
  %487 = vmatmul.mubr.f32.gmra.mrb[0].mxu0 %v66
  %v488 = vpop.f32.mrb[0].mxu0
  %v489 = vadd.f32 %v384, %v488
  %v490 = vpop.f32.mrb[0].mxu0
  %491 = vmatprep.mubr.f32.mxu0 %v73
  %492 = vmatmul.mubr.f32.gmra.mrb[0].mxu0 %v72
  %v493 = vpop.f32.mrb[0].mxu0
  %v494 = vadd.f32 %v389, %v493
  %v495 = vpop.f32.mrb[0].mxu0
  %496 = vmatprep.mubr.f32.mxu0 %v79
  %497 = vmatmul.mubr.f32.gmra.mrb[0].mxu0 %v78
  %v498 = vpop.f32.mrb[0].mxu0
  %v499 = vadd.f32 %v394, %v498
  %v500 = vpop.f32.mrb[0].mxu0
  %501 = vmatprep.mubr.f32.mxu0 %v85
  %502 = vmatmul.mubr.f32.gmra.mrb[0].mxu0 %v84
  %v503 = vpop.f32.mrb[0].mxu0
  %v504 = vadd.f32 %v399, %v503
  %v505 = vpop.f32.mrb[0].mxu0
  %506 = vmatprep.mubr.f32.mxu0 %v91
  %507 = vmatmul.mubr.f32.gmra.mrb[0].mxu0 %v90
  %v508 = vpop.f32.mrb[0].mxu0
  %v509 = vadd.f32 %v404, %v508
  %v510 = vpop.f32.mrb[0].mxu0
  %511 = vmatprep.mubr.f32.mxu0 %v97
  %512 = vmatmul.mubr.f32.gmra.mrb[0].mxu0 %v96
  %v513 = vpop.f32.mrb[0].mxu0
  %v514 = vadd.f32 %v409, %v513
  %v515 = vpop.f32.mrb[0].mxu0
  %516 = vmatprep.mubr.f32.mxu0 %v103
  %517 = vmatmul.mubr.f32.gmra.mrb[0].mxu0 %v102
  %v518 = vpop.f32.mrb[0].mxu0
  %v519 = vadd.f32 %v414, %v518
  %v520 = vpop.f32.mrb[0].mxu0
  %521 = vdwg.mxu0
  %v522 = vld [vmem:[%s1] sm:$0xff]
  %v523 = vld [vmem:[%s1 + $0x8] sm:$0xff]
  %v524 = vld [vmem:[%s1 + $0x10] sm:$0xff]
  %v525 = vld [vmem:[%s1 + $0x18] sm:$0xff]
  %v526 = vld [vmem:[%s1 + $0x20] sm:$0xff]
  %v527 = vld [vmem:[%s1 + $0x28] sm:$0xff]
  %v528 = vld [vmem:[%s1 + $0x30] sm:$0xff]
  %v529 = vld [vmem:[%s1 + $0x38] sm:$0xff]
  %v530 = vld [vmem:[%s1 + $0x40] sm:$0xff]
  %v531 = vld [vmem:[%s1 + $0x48] sm:$0xff]
  %v532 = vld [vmem:[%s1 + $0x50] sm:$0xff]
  %v533 = vld [vmem:[%s1 + $0x58] sm:$0xff]
  %v534 = vld [vmem:[%s1 + $0x60] sm:$0xff]
  %v535 = vld [vmem:[%s1 + $0x68] sm:$0xff]
  %v536 = vld [vmem:[%s1 + $0x70] sm:$0xff]
  %v537 = vld [vmem:[%s1 + $0x78] sm:$0xff]
  %v538 = vld [vmem:[%s5] sm:$0xff]
  %v539 = vld [vmem:[%s5 + $0x8] sm:$0xff]
  %v540 = vld [vmem:[%s5 + $0x10] sm:$0xff]
  %v541 = vld [vmem:[%s5 + $0x18] sm:$0xff]
  %v542 = vld [vmem:[%s5 + $0x20] sm:$0xff]
  %v543 = vld [vmem:[%s5 + $0x28] sm:$0xff]
  %v544 = vld [vmem:[%s5 + $0x30] sm:$0xff]
  %v545 = vld [vmem:[%s5 + $0x38] sm:$0xff]
  %v546 = vld [vmem:[%s5 + $0x40] sm:$0xff]
  %v547 = vld [vmem:[%s5 + $0x48] sm:$0xff]
  %v548 = vld [vmem:[%s5 + $0x50] sm:$0xff]
  %v549 = vld [vmem:[%s5 + $0x58] sm:$0xff]
  %v550 = vld [vmem:[%s5 + $0x60] sm:$0xff]
  %v551 = vld [vmem:[%s5 + $0x68] sm:$0xff]
  %v552 = vld [vmem:[%s5 + $0x70] sm:$0xff]
  %v553 = vld [vmem:[%s5 + $0x78] sm:$0xff]
  %v554 = vld [vmem:[%s5 + $0x80] sm:$0xff]
  %v555 = vld [vmem:[%s5 + $0x88] sm:$0xff]
  %v556 = vld [vmem:[%s5 + $0x90] sm:$0xff]
  %v557 = vld [vmem:[%s5 + $0x98] sm:$0xff]
  %v558 = vld [vmem:[%s5 + $0xa0] sm:$0xff]
  %v559 = vld [vmem:[%s5 + $0xa8] sm:$0xff]
  %v560 = vld [vmem:[%s5 + $0xb0] sm:$0xff]
  %v561 = vld [vmem:[%s5 + $0xb8] sm:$0xff]
  %v562 = vld [vmem:[%s5 + $0xc0] sm:$0xff]
  %v563 = vld [vmem:[%s5 + $0xc8] sm:$0xf]
  %v564 = vld [vmem:[%s6] sm:$0x1]
  %v566 = vlaneseq
  %v567 = vshrl.u32 %v566, 7
  %v568 = vsub.s32 0, %v567
  %v569 = vrot.slane %v564, %v568
  %vm571 = vcmask 621568
  %v573 = vsel %vm571, %v523, 0
  %v576 = vsel %vm571, %v525, 0
  %v579 = vsel %vm571, %v527, 0
  %v582 = vsel %vm571, %v529, 0
  %v585 = vsel %vm571, %v531, 0
  %v588 = vsel %vm571, %v533, 0
  %v591 = vsel %vm571, %v535, 0
  %v594 = vsel %vm571, %v537, 0
  %vm596 = vcmask 1043456
  %v598 = vsel %vm596, %v563, 0
  %600 = vmatprep.subr.mxu0 0.0
  %601 = vmatpush1.msra.mxu0 %v538
  %602 = vmatprep.subr.mxu0 0.0
  %603 = vmatpush1.msra.mxu0 %v539
  %604 = vmatprep.subr.mxu0 0.0
  %605 = vmatpush1.msra.mxu0 %v540
  %606 = vmatprep.subr.mxu0 0.0
  %607 = vmatpush1.msra.mxu0 %v541
  %608 = vmatprep.subr.mxu0 0.0
  %609 = vmatpush1.msra.mxu0 %v542
  %610 = vmatprep.subr.mxu0 0.0
  %611 = vmatpush1.msra.mxu0 %v543
  %612 = vmatprep.subr.mxu0 0.0
  %613 = vmatpush1.msra.mxu0 %v544
  %614 = vmatprep.subr.mxu0 0.0
  %615 = vmatpush1.msra.mxu0 %v545
  %616 = vmatprep.subr.mxu0 0.0
  %617 = vmatpush1.msra.mxu0 %v546
  %618 = vmatprep.subr.mxu0 0.0
  %619 = vmatpush1.msra.mxu0 %v547
  %620 = vmatprep.subr.mxu0 0.0
  %621 = vmatpush1.msra.mxu0 %v548
  %622 = vmatprep.subr.mxu0 0.0
  %623 = vmatpush1.msra.mxu0 %v549
  %624 = vmatprep.subr.mxu0 0.0
  %625 = vmatpush1.msra.mxu0 %v550
  %626 = vmatprep.subr.mxu0 0.0
  %627 = vmatpush1.msra.mxu0 %v551
  %628 = vmatprep.subr.mxu0 0.0
  %629 = vmatpush1.msra.mxu0 %v552
  %630 = vmatprep.subr.mxu0 0.0
  %631 = vmatpush1.msra.mxu0 %v553
  %632 = vmatprep.subr.mxu0 0.0
  %633 = vmatpush1.msra.mxu0 %v554
  %634 = vmatprep.subr.mxu0 0.0
  %635 = vmatpush1.msra.mxu0 %v555
  %636 = vmatprep.subr.mxu0 0.0
  %637 = vmatpush1.msra.mxu0 %v556
  %638 = vmatprep.subr.mxu0 0.0
  %639 = vmatpush1.msra.mxu0 %v557
  %640 = vmatprep.subr.mxu0 0.0
  %641 = vmatpush1.msra.mxu0 %v558
  %642 = vmatprep.subr.mxu0 0.0
  %643 = vmatpush1.msra.mxu0 %v559
  %644 = vmatprep.subr.mxu0 0.0
  %645 = vmatpush1.msra.mxu0 %v560
  %646 = vmatprep.subr.mxu0 0.0
  %647 = vmatpush1.msra.mxu0 %v561
  %648 = vmatprep.subr.mxu0 0.0
  %649 = vmatpush1.msra.mxu0 %v562
  %650 = vmatprep.subr.mxu0 0.0
  %651 = vmatpush1.msra.mxu0 %v598
  %652 = vmatprep.subr.mxu0 0.0
  %653 = vmatpush1.msra.mxu0 0.0
  %654 = vmatprep.subr.mxu0 0.0
  %655 = vmatpush1.msra.mxu0 0.0
  %656 = vmatprep.subr.mxu0 0.0
  %657 = vmatpush1.msra.mxu0 0.0
  %658 = vmatprep.subr.mxu0 0.0
  %659 = vmatpush1.msra.mxu0 0.0
  %660 = vmatprep.subr.mxu0 0.0
  %661 = vmatpush1.msra.mxu0 0.0
  %662 = vmatprep.subr.mxu0 0.0
  %663 = vmatpush1.msra.mxu0 0.0
  %664 = vmatprep.mubr.f32.mxu0 %v573
  %665 = vmatmul.mubr.f32.gmra.mrb[0].mxu0 %v522
  %v666 = vpop.f32.mrb[0].mxu0
  %v667 = vadd.f32 %v569, %v666
  %v668 = vpop.f32.mrb[0].mxu0
  %669 = vmatprep.mubr.f32.mxu0 %v576
  %670 = vmatmul.mubr.f32.gmra.mrb[0].mxu0 %v524
  %v671 = vpop.f32.mrb[0].mxu0
  %v672 = vadd.f32 %v569, %v671
  %v673 = vpop.f32.mrb[0].mxu0
  %674 = vmatprep.mubr.f32.mxu0 %v579
  %675 = vmatmul.mubr.f32.gmra.mrb[0].mxu0 %v526
  %v676 = vpop.f32.mrb[0].mxu0
  %v677 = vadd.f32 %v569, %v676
  %v678 = vpop.f32.mrb[0].mxu0
  %679 = vmatprep.mubr.f32.mxu0 %v582
  %680 = vmatmul.mubr.f32.gmra.mrb[0].mxu0 %v528
  %v681 = vpop.f32.mrb[0].mxu0
  %v682 = vadd.f32 %v569, %v681
  %v683 = vpop.f32.mrb[0].mxu0
  %684 = vmatprep.mubr.f32.mxu0 %v585
  %685 = vmatmul.mubr.f32.gmra.mrb[0].mxu0 %v530
  %v686 = vpop.f32.mrb[0].mxu0
  %v687 = vadd.f32 %v569, %v686
  %v688 = vpop.f32.mrb[0].mxu0
  %689 = vmatprep.mubr.f32.mxu0 %v588
  %690 = vmatmul.mubr.f32.gmra.mrb[0].mxu0 %v532
  %v691 = vpop.f32.mrb[0].mxu0
  %v692 = vadd.f32 %v569, %v691
  %v693 = vpop.f32.mrb[0].mxu0
  %694 = vmatprep.mubr.f32.mxu0 %v591
  %695 = vmatmul.mubr.f32.gmra.mrb[0].mxu0 %v534
  %v696 = vpop.f32.mrb[0].mxu0
  %v697 = vadd.f32 %v569, %v696
  %v698 = vpop.f32.mrb[0].mxu0
  %699 = vmatprep.mubr.f32.mxu0 %v594
  %700 = vmatmul.mubr.f32.gmra.mrb[0].mxu0 %v536
  %v701 = vpop.f32.mrb[0].mxu0
  %v702 = vadd.f32 %v569, %v701
  %v703 = vpop.f32.mrb[0].mxu0
  %704 = vdwg.mxu0
  %v705 = vld [vmem:[%s2] sm:$0xff]
  %v706 = vld [vmem:[%s2 + $0x8] sm:$0xff]
  %v707 = vld [vmem:[%s2 + $0x10] sm:$0xff]
  %v708 = vld [vmem:[%s2 + $0x18] sm:$0xff]
  %v709 = vld [vmem:[%s2 + $0x20] sm:$0xff]
  %v710 = vld [vmem:[%s2 + $0x28] sm:$0xff]
  %v711 = vld [vmem:[%s2 + $0x30] sm:$0xff]
  %v712 = vld [vmem:[%s2 + $0x38] sm:$0xff]
  %v713 = vlaneseq
  %v714 = vand.u32 %v713, 127
  %vm715 = vcmp.ge.s32.totalorder %v714, 64
  %vm716 = vcmp.lt.s32.totalorder %v714, 96
  %vm717 = vmand %vm715, %vm716
  %v718 = vld [vmem:[%s7] sm:$0xff]
  %v719 = vld [vmem:[%s7 + $0x8] sm:$0xff]
  %v720 = vld [vmem:[%s7 + $0x10] sm:$0xff]
  %v721 = vld [vmem:[%s7 + $0x18] sm:$0xff]
  %v722 = vld [vmem:[%s7 + $0x20] sm:$0xff]
  %v723 = vld [vmem:[%s7 + $0x28] sm:$0xff]
  %v724 = vld [vmem:[%s7 + $0x30] sm:$0xff]
  %v725 = vld [vmem:[%s7 + $0x38] sm:$0xff]
  %v726 = vld [vmem:[%s7 + $0x40] sm:$0xff]
  %v727 = vld [vmem:[%s7 + $0x48] sm:$0xff]
  %v728 = vld [vmem:[%s7 + $0x50] sm:$0xff]
  %v729 = vld [vmem:[%s7 + $0x58] sm:$0xff]
  %v730 = vld [vmem:[%s7 + $0x60] sm:$0xff]
  %v731 = vld [vmem:[%s7 + $0x68] sm:$0xff]
  %v732 = vld [vmem:[%s7 + $0x70] sm:$0xff]
  %v733 = vld [vmem:[%s7 + $0x78] sm:$0xff]
  %vm734 = vcmask 261120
  %v736 = vsel %vm734, %v705, 0
  %v739 = vsel %vm734, %v706, 0
  %v742 = vsel %vm734, %v707, 0
  %v745 = vsel %vm734, %v708, 0
  %v748 = vsel %vm734, %v709, 0
  %v751 = vsel %vm734, %v710, 0
  %v754 = vsel %vm734, %v711, 0
  %v757 = vsel %vm734, %v712, 0
  %759 = vmatprep.subr.mxu0 %v727
  %760 = vmatpush1.msra.mxu0 %v726
  %761 = vmatprep.subr.mxu0 %v729
  %762 = vmatpush1.msra.mxu0 %v728
  %763 = vmatprep.subr.mxu0 %v731
  %764 = vmatpush1.msra.mxu0 %v730
  %765 = vmatprep.subr.mxu0 %v733
  %766 = vmatpush1.msra.mxu0 %v732
  %767 = vmatprep.subr.mxu0 0.0
  %768 = vmatpush1.msra.mxu0 0.0
  %769 = vmatprep.subr.mxu0 0.0
  %770 = vmatpush1.msra.mxu0 0.0
  %771 = vmatprep.subr.mxu0 0.0
  %772 = vmatpush1.msra.mxu0 0.0
  %773 = vmatprep.subr.mxu0 0.0
  %774 = vmatpush1.msra.mxu0 0.0
  %775 = vmatprep.subr.mxu0 0.0
  %776 = vmatpush1.msra.mxu0 0.0
  %777 = vmatprep.subr.mxu0 0.0
  %778 = vmatpush1.msra.mxu0 0.0
  %779 = vmatprep.subr.mxu0 0.0
  %780 = vmatpush1.msra.mxu0 0.0
  %781 = vmatprep.subr.mxu0 0.0
  %782 = vmatpush1.msra.mxu0 0.0
  %783 = vmatprep.subr.mxu0 0.0
  %784 = vmatpush1.msra.mxu0 0.0
  %785 = vmatprep.subr.mxu0 0.0
  %786 = vmatpush1.msra.mxu0 0.0
  %787 = vmatprep.subr.mxu0 0.0
  %788 = vmatpush1.msra.mxu0 0.0
  %789 = vmatprep.subr.mxu0 0.0
  %790 = vmatpush1.msra.mxu0 0.0
  %791 = vmatprep.subr.mxu0 0.0
  %792 = vmatpush1.msra.mxu0 0.0
  %793 = vmatprep.subr.mxu0 0.0
  %794 = vmatpush1.msra.mxu0 0.0
  %795 = vmatprep.subr.mxu0 0.0
  %796 = vmatpush1.msra.mxu0 0.0
  %797 = vmatprep.subr.mxu0 0.0
  %798 = vmatpush1.msra.mxu0 0.0
  %799 = vmatprep.subr.mxu0 0.0
  %800 = vmatpush1.msra.mxu0 0.0
  %801 = vmatprep.subr.mxu0 0.0
  %802 = vmatpush1.msra.mxu0 0.0
  %803 = vmatprep.subr.mxu0 0.0
  %804 = vmatpush1.msra.mxu0 0.0
  %805 = vmatprep.subr.mxu0 0.0
  %806 = vmatpush1.msra.mxu0 0.0
  %807 = vmatprep.subr.mxu0 0.0
  %808 = vmatpush1.msra.mxu0 0.0
  %809 = vmatprep.subr.mxu0 0.0
  %810 = vmatpush1.msra.mxu0 0.0
  %811 = vmatprep.subr.mxu0 0.0
  %812 = vmatpush1.msra.mxu0 0.0
  %813 = vmatprep.subr.mxu0 0.0
  %814 = vmatpush1.msra.mxu0 0.0
  %815 = vmatprep.subr.mxu0 0.0
  %816 = vmatpush1.msra.mxu0 0.0
  %817 = vmatprep.subr.mxu0 0.0
  %818 = vmatpush1.msra.mxu0 0.0
  %819 = vmatprep.subr.mxu0 0.0
  %820 = vmatpush1.msra.mxu0 0.0
  %821 = vmatprep.subr.mxu0 0.0
  %822 = vmatpush1.msra.mxu0 0.0
  %823 = vmatprep.mubr.f32.mxu0 0.0
  %824 = vmatmul.mubr.f32.gmra.mrb[0].mxu0 %v736
  %v825 = vpop.f32.mrb[0].mxu0
  %v826 = vadd.f32 0.0, %v825
  %v827 = vpop.f32.mrb[0].mxu0
  %v828 = vadd.f32 0.0, %v827
  %829 = vmatprep.mubr.f32.mxu0 0.0
  %830 = vmatmul.mubr.f32.gmra.mrb[0].mxu0 %v739
  %v831 = vpop.f32.mrb[0].mxu0
  %v832 = vadd.f32 0.0, %v831
  %v833 = vpop.f32.mrb[0].mxu0
  %v834 = vadd.f32 0.0, %v833
  %835 = vmatprep.mubr.f32.mxu0 0.0
  %836 = vmatmul.mubr.f32.gmra.mrb[0].mxu0 %v742
  %v837 = vpop.f32.mrb[0].mxu0
  %v838 = vadd.f32 0.0, %v837
  %v839 = vpop.f32.mrb[0].mxu0
  %v840 = vadd.f32 0.0, %v839
  %841 = vmatprep.mubr.f32.mxu0 0.0
  %842 = vmatmul.mubr.f32.gmra.mrb[0].mxu0 %v745
  %v843 = vpop.f32.mrb[0].mxu0
  %v844 = vadd.f32 0.0, %v843
  %v845 = vpop.f32.mrb[0].mxu0
  %v846 = vadd.f32 0.0, %v845
  %847 = vmatprep.mubr.f32.mxu0 0.0
  %848 = vmatmul.mubr.f32.gmra.mrb[0].mxu0 %v748
  %v849 = vpop.f32.mrb[0].mxu0
  %v850 = vadd.f32 0.0, %v849
  %v851 = vpop.f32.mrb[0].mxu0
  %v852 = vadd.f32 0.0, %v851
  %853 = vmatprep.mubr.f32.mxu0 0.0
  %854 = vmatmul.mubr.f32.gmra.mrb[0].mxu0 %v751
  %v855 = vpop.f32.mrb[0].mxu0
  %v856 = vadd.f32 0.0, %v855
  %v857 = vpop.f32.mrb[0].mxu0
  %v858 = vadd.f32 0.0, %v857
  %859 = vmatprep.mubr.f32.mxu0 0.0
  %860 = vmatmul.mubr.f32.gmra.mrb[0].mxu0 %v754
  %v861 = vpop.f32.mrb[0].mxu0
  %v862 = vadd.f32 0.0, %v861
  %v863 = vpop.f32.mrb[0].mxu0
  %v864 = vadd.f32 0.0, %v863
  %865 = vmatprep.mubr.f32.mxu0 0.0
  %866 = vmatmul.mubr.f32.gmra.mrb[0].mxu0 %v757
  %v867 = vpop.f32.mrb[0].mxu0
  %v868 = vadd.f32 0.0, %v867
  %v869 = vpop.f32.mrb[0].mxu0
  %v870 = vadd.f32 0.0, %v869
  %871 = vdwg.mxu0
  %v873 = vsel %vm734, %v484, 0
  %v876 = vsel %vm734, %v489, 0
  %v879 = vsel %vm734, %v494, 0
  %v882 = vsel %vm734, %v499, 0
  %v885 = vsel %vm734, %v504, 0
  %v888 = vsel %vm734, %v509, 0
  %v891 = vsel %vm734, %v514, 0
  %v894 = vsel %vm734, %v519, 0
  %896 = vmatprep.subr.mxu0 %v719
  %897 = vmatpush1.msra.mxu0 %v718
  %898 = vmatprep.subr.mxu0 %v721
  %899 = vmatpush1.msra.mxu0 %v720
  %900 = vmatprep.subr.mxu0 %v723
  %901 = vmatpush1.msra.mxu0 %v722
  %902 = vmatprep.subr.mxu0 %v725
  %903 = vmatpush1.msra.mxu0 %v724
  %904 = vmatprep.subr.mxu0 0.0
  %905 = vmatpush1.msra.mxu0 0.0
  %906 = vmatprep.subr.mxu0 0.0
  %907 = vmatpush1.msra.mxu0 0.0
  %908 = vmatprep.subr.mxu0 0.0
  %909 = vmatpush1.msra.mxu0 0.0
  %910 = vmatprep.subr.mxu0 0.0
  %911 = vmatpush1.msra.mxu0 0.0
  %912 = vmatprep.subr.mxu0 0.0
  %913 = vmatpush1.msra.mxu0 0.0
  %914 = vmatprep.subr.mxu0 0.0
  %915 = vmatpush1.msra.mxu0 0.0
  %916 = vmatprep.subr.mxu0 0.0
  %917 = vmatpush1.msra.mxu0 0.0
  %918 = vmatprep.subr.mxu0 0.0
  %919 = vmatpush1.msra.mxu0 0.0
  %920 = vmatprep.subr.mxu0 0.0
  %921 = vmatpush1.msra.mxu0 0.0
  %922 = vmatprep.subr.mxu0 0.0
  %923 = vmatpush1.msra.mxu0 0.0
  %924 = vmatprep.subr.mxu0 0.0
  %925 = vmatpush1.msra.mxu0 0.0
  %926 = vmatprep.subr.mxu0 0.0
  %927 = vmatpush1.msra.mxu0 0.0
  %928 = vmatprep.subr.mxu0 0.0
  %929 = vmatpush1.msra.mxu0 0.0
  %930 = vmatprep.subr.mxu0 0.0
  %931 = vmatpush1.msra.mxu0 0.0
  %932 = vmatprep.subr.mxu0 0.0
  %933 = vmatpush1.msra.mxu0 0.0
  %934 = vmatprep.subr.mxu0 0.0
  %935 = vmatpush1.msra.mxu0 0.0
  %936 = vmatprep.subr.mxu0 0.0
  %937 = vmatpush1.msra.mxu0 0.0
  %938 = vmatprep.subr.mxu0 0.0
  %939 = vmatpush1.msra.mxu0 0.0
  %940 = vmatprep.subr.mxu0 0.0
  %941 = vmatpush1.msra.mxu0 0.0
  %942 = vmatprep.subr.mxu0 0.0
  %943 = vmatpush1.msra.mxu0 0.0
  %944 = vmatprep.subr.mxu0 0.0
  %945 = vmatpush1.msra.mxu0 0.0
  %946 = vmatprep.subr.mxu0 0.0
  %947 = vmatpush1.msra.mxu0 0.0
  %948 = vmatprep.subr.mxu0 0.0
  %949 = vmatpush1.msra.mxu0 0.0
  %950 = vmatprep.subr.mxu0 0.0
  %951 = vmatpush1.msra.mxu0 0.0
  %952 = vmatprep.subr.mxu0 0.0
  %953 = vmatpush1.msra.mxu0 0.0
  %954 = vmatprep.subr.mxu0 0.0
  %955 = vmatpush1.msra.mxu0 0.0
  %956 = vmatprep.subr.mxu0 0.0
  %957 = vmatpush1.msra.mxu0 0.0
  %958 = vmatprep.subr.mxu0 0.0
  %959 = vmatpush1.msra.mxu0 0.0
  %960 = vmatprep.mubr.f32.mxu0 0.0
  %961 = vmatmul.mubr.f32.gmra.mrb[0].mxu0 %v873
  %v962 = vpop.f32.mrb[0].mxu0
  %v963 = vadd.f32 %v826, %v962
  %v964 = vpop.f32.mrb[0].mxu0
  %v965 = vadd.f32 %v828, %v964
  %966 = vmatprep.mubr.f32.mxu0 0.0
  %967 = vmatmul.mubr.f32.gmra.mrb[0].mxu0 %v876
  %v968 = vpop.f32.mrb[0].mxu0
  %v969 = vadd.f32 %v832, %v968
  %v970 = vpop.f32.mrb[0].mxu0
  %v971 = vadd.f32 %v834, %v970
  %972 = vmatprep.mubr.f32.mxu0 0.0
  %973 = vmatmul.mubr.f32.gmra.mrb[0].mxu0 %v879
  %v974 = vpop.f32.mrb[0].mxu0
  %v975 = vadd.f32 %v838, %v974
  %v976 = vpop.f32.mrb[0].mxu0
  %v977 = vadd.f32 %v840, %v976
  %978 = vmatprep.mubr.f32.mxu0 0.0
  %979 = vmatmul.mubr.f32.gmra.mrb[0].mxu0 %v882
  %v980 = vpop.f32.mrb[0].mxu0
  %v981 = vadd.f32 %v844, %v980
  %v982 = vpop.f32.mrb[0].mxu0
  %v983 = vadd.f32 %v846, %v982
  %984 = vmatprep.mubr.f32.mxu0 0.0
  %985 = vmatmul.mubr.f32.gmra.mrb[0].mxu0 %v885
  %v986 = vpop.f32.mrb[0].mxu0
  %v987 = vadd.f32 %v850, %v986
  %v988 = vpop.f32.mrb[0].mxu0
  %v989 = vadd.f32 %v852, %v988
  %990 = vmatprep.mubr.f32.mxu0 0.0
  %991 = vmatmul.mubr.f32.gmra.mrb[0].mxu0 %v888
  %v992 = vpop.f32.mrb[0].mxu0
  %v993 = vadd.f32 %v856, %v992
  %v994 = vpop.f32.mrb[0].mxu0
  %v995 = vadd.f32 %v858, %v994
  %996 = vmatprep.mubr.f32.mxu0 0.0
  %997 = vmatmul.mubr.f32.gmra.mrb[0].mxu0 %v891
  %v998 = vpop.f32.mrb[0].mxu0
  %v999 = vadd.f32 %v862, %v998
  %v1000 = vpop.f32.mrb[0].mxu0
  %v1001 = vadd.f32 %v864, %v1000
  %1002 = vmatprep.mubr.f32.mxu0 0.0
  %1003 = vmatmul.mubr.f32.gmra.mrb[0].mxu0 %v894
  %v1004 = vpop.f32.mrb[0].mxu0
  %v1005 = vadd.f32 %v868, %v1004
  %v1006 = vpop.f32.mrb[0].mxu0
  %v1007 = vadd.f32 %v870, %v1006
  %1008 = vdwg.mxu0
  %v1009 = vld [vmem:[%s7 + $0x80] sm:$0xff]
  %v1010 = vld [vmem:[%s7 + $0x88] sm:$0xff]
  %v1011 = vld [vmem:[%s7 + $0x90] sm:$0xff]
  %v1012 = vld [vmem:[%s7 + $0x98] sm:$0xff]
  %v1013 = vld [vmem:[%s7 + $0xa0] sm:$0xff]
  %v1014 = vld [vmem:[%s7 + $0xa8] sm:$0xff]
  %v1015 = vld [vmem:[%s7 + $0xb0] sm:$0xff]
  %v1016 = vld [vmem:[%s7 + $0xb8] sm:$0xff]
  %v1018 = vsel %vm734, %v667, 0
  %v1021 = vsel %vm734, %v672, 0
  %v1024 = vsel %vm734, %v677, 0
  %v1027 = vsel %vm734, %v682, 0
  %v1030 = vsel %vm734, %v687, 0
  %v1033 = vsel %vm734, %v692, 0
  %v1036 = vsel %vm734, %v697, 0
  %v1039 = vsel %vm734, %v702, 0
  %1041 = vmatprep.subr.mxu0 %v1010
  %1042 = vmatpush1.msra.mxu0 %v1009
  %1043 = vmatprep.subr.mxu0 %v1012
  %1044 = vmatpush1.msra.mxu0 %v1011
  %1045 = vmatprep.subr.mxu0 %v1014
  %1046 = vmatpush1.msra.mxu0 %v1013
  %1047 = vmatprep.subr.mxu0 %v1016
  %1048 = vmatpush1.msra.mxu0 %v1015
  %1049 = vmatprep.subr.mxu0 0.0
  %1050 = vmatpush1.msra.mxu0 0.0
  %1051 = vmatprep.subr.mxu0 0.0
  %1052 = vmatpush1.msra.mxu0 0.0
  %1053 = vmatprep.subr.mxu0 0.0
  %1054 = vmatpush1.msra.mxu0 0.0
  %1055 = vmatprep.subr.mxu0 0.0
  %1056 = vmatpush1.msra.mxu0 0.0
  %1057 = vmatprep.subr.mxu0 0.0
  %1058 = vmatpush1.msra.mxu0 0.0
  %1059 = vmatprep.subr.mxu0 0.0
  %1060 = vmatpush1.msra.mxu0 0.0
  %1061 = vmatprep.subr.mxu0 0.0
  %1062 = vmatpush1.msra.mxu0 0.0
  %1063 = vmatprep.subr.mxu0 0.0
  %1064 = vmatpush1.msra.mxu0 0.0
  %1065 = vmatprep.subr.mxu0 0.0
  %1066 = vmatpush1.msra.mxu0 0.0
  %1067 = vmatprep.subr.mxu0 0.0
  %1068 = vmatpush1.msra.mxu0 0.0
  %1069 = vmatprep.subr.mxu0 0.0
  %1070 = vmatpush1.msra.mxu0 0.0
  %1071 = vmatprep.subr.mxu0 0.0
  %1072 = vmatpush1.msra.mxu0 0.0
  %1073 = vmatprep.subr.mxu0 0.0
  %1074 = vmatpush1.msra.mxu0 0.0
  %1075 = vmatprep.subr.mxu0 0.0
  %1076 = vmatpush1.msra.mxu0 0.0
  %1077 = vmatprep.subr.mxu0 0.0
  %1078 = vmatpush1.msra.mxu0 0.0
  %1079 = vmatprep.subr.mxu0 0.0
  %1080 = vmatpush1.msra.mxu0 0.0
  %1081 = vmatprep.subr.mxu0 0.0
  %1082 = vmatpush1.msra.mxu0 0.0
  %1083 = vmatprep.subr.mxu0 0.0
  %1084 = vmatpush1.msra.mxu0 0.0
  %1085 = vmatprep.subr.mxu0 0.0
  %1086 = vmatpush1.msra.mxu0 0.0
  %1087 = vmatprep.subr.mxu0 0.0
  %1088 = vmatpush1.msra.mxu0 0.0
  %1089 = vmatprep.subr.mxu0 0.0
  %1090 = vmatpush1.msra.mxu0 0.0
  %1091 = vmatprep.subr.mxu0 0.0
  %1092 = vmatpush1.msra.mxu0 0.0
  %1093 = vmatprep.subr.mxu0 0.0
  %1094 = vmatpush1.msra.mxu0 0.0
  %1095 = vmatprep.subr.mxu0 0.0
  %1096 = vmatpush1.msra.mxu0 0.0
  %1097 = vmatprep.subr.mxu0 0.0
  %1098 = vmatpush1.msra.mxu0 0.0
  %1099 = vmatprep.subr.mxu0 0.0
  %1100 = vmatpush1.msra.mxu0 0.0
  %1101 = vmatprep.subr.mxu0 0.0
  %1102 = vmatpush1.msra.mxu0 0.0
  %1103 = vmatprep.subr.mxu0 0.0
  %1104 = vmatpush1.msra.mxu0 0.0
  %1105 = vmatprep.mubr.f32.mxu0 0.0
  %1106 = vmatmul.mubr.f32.gmra.mrb[0].mxu0 %v1018
  %v1107 = vpop.f32.mrb[0].mxu0
  %v1108 = vadd.f32 0.0, %v1107
  %v1109 = vpop.f32.mrb[0].mxu0
  %v1110 = vadd.f32 0.0, %v1109
  %1111 = vmatprep.mubr.f32.mxu0 0.0
  %1112 = vmatmul.mubr.f32.gmra.mrb[0].mxu0 %v1021
  %v1113 = vpop.f32.mrb[0].mxu0
  %v1114 = vadd.f32 0.0, %v1113
  %v1115 = vpop.f32.mrb[0].mxu0
  %v1116 = vadd.f32 0.0, %v1115
  %1117 = vmatprep.mubr.f32.mxu0 0.0
  %1118 = vmatmul.mubr.f32.gmra.mrb[0].mxu0 %v1024
  %v1119 = vpop.f32.mrb[0].mxu0
  %v1120 = vadd.f32 0.0, %v1119
  %v1121 = vpop.f32.mrb[0].mxu0
  %v1122 = vadd.f32 0.0, %v1121
  %1123 = vmatprep.mubr.f32.mxu0 0.0
  %1124 = vmatmul.mubr.f32.gmra.mrb[0].mxu0 %v1027
  %v1125 = vpop.f32.mrb[0].mxu0
  %v1126 = vadd.f32 0.0, %v1125
  %v1127 = vpop.f32.mrb[0].mxu0
  %v1128 = vadd.f32 0.0, %v1127
  %1129 = vmatprep.mubr.f32.mxu0 0.0
  %1130 = vmatmul.mubr.f32.gmra.mrb[0].mxu0 %v1030
  %v1131 = vpop.f32.mrb[0].mxu0
  %v1132 = vadd.f32 0.0, %v1131
  %v1133 = vpop.f32.mrb[0].mxu0
  %v1134 = vadd.f32 0.0, %v1133
  %1135 = vmatprep.mubr.f32.mxu0 0.0
  %1136 = vmatmul.mubr.f32.gmra.mrb[0].mxu0 %v1033
  %v1137 = vpop.f32.mrb[0].mxu0
  %v1138 = vadd.f32 0.0, %v1137
  %v1139 = vpop.f32.mrb[0].mxu0
  %v1140 = vadd.f32 0.0, %v1139
  %1141 = vmatprep.mubr.f32.mxu0 0.0
  %1142 = vmatmul.mubr.f32.gmra.mrb[0].mxu0 %v1036
  %v1143 = vpop.f32.mrb[0].mxu0
  %v1144 = vadd.f32 0.0, %v1143
  %v1145 = vpop.f32.mrb[0].mxu0
  %v1146 = vadd.f32 0.0, %v1145
  %1147 = vmatprep.mubr.f32.mxu0 0.0
  %1148 = vmatmul.mubr.f32.gmra.mrb[0].mxu0 %v1039
  %v1149 = vpop.f32.mrb[0].mxu0
  %v1150 = vadd.f32 0.0, %v1149
  %v1151 = vpop.f32.mrb[0].mxu0
  %v1152 = vadd.f32 0.0, %v1151
  %1153 = vdwg.mxu0
  %v1154 = vadd.f32 %v963, %v1108
  %v1155 = vadd.f32 %v965, %v1110
  %v1156 = vadd.f32 %v969, %v1114
  %v1157 = vadd.f32 %v971, %v1116
  %v1158 = vadd.f32 %v975, %v1120
  %v1159 = vadd.f32 %v977, %v1122
  %v1160 = vadd.f32 %v981, %v1126
  %v1161 = vadd.f32 %v983, %v1128
  %v1162 = vadd.f32 %v987, %v1132
  %v1163 = vadd.f32 %v989, %v1134
  %v1164 = vadd.f32 %v993, %v1138
  %v1165 = vadd.f32 %v995, %v1140
  %v1166 = vadd.f32 %v999, %v1144
  %v1167 = vadd.f32 %v1001, %v1146
  %v1168 = vadd.f32 %v1005, %v1150
  %v1169 = vadd.f32 %v1007, %v1152
  %v1170 = vld [vmem:[%s8] sm:$0x3]
  %v1172 = vlaneseq
  %v1173 = vshrl.u32 %v1172, 7
  %v1174 = vsub.s32 0, %v1173
  %v1175 = vrot.slane %v1170, %v1174
  %v1176 = vlaneseq
  %v1177 = vshrl.u32 %v1176, 7
  %v1178 = vsub.s32 1, %v1177
  %v1179 = vrot.slane %v1170, %v1178
  %v1182 = vadd.f32 %v1154, %v1175
  %v1183 = vadd.f32 %v1155, %v1179
  %v1184 = vadd.f32 %v1156, %v1175
  %v1185 = vadd.f32 %v1157, %v1179
  %v1186 = vadd.f32 %v1158, %v1175
  %v1187 = vadd.f32 %v1159, %v1179
  %v1188 = vadd.f32 %v1160, %v1175
  %v1189 = vadd.f32 %v1161, %v1179
  %v1190 = vadd.f32 %v1162, %v1175
  %v1191 = vadd.f32 %v1163, %v1179
  %v1192 = vadd.f32 %v1164, %v1175
  %v1193 = vadd.f32 %v1165, %v1179
  %v1194 = vadd.f32 %v1166, %v1175
  %v1195 = vadd.f32 %v1167, %v1179
  %v1196 = vadd.f32 %v1168, %v1175
  %v1197 = vadd.f32 %v1169, %v1179
  %v1198 = vld [vmem:[%s9] sm:$0xff]
  %v1199 = vld [vmem:[%s9 + $0x8] sm:$0xff]
  %v1200 = vld [vmem:[%s9 + $0x10] sm:$0xff]
  %v1201 = vld [vmem:[%s9 + $0x18] sm:$0xff]
  %v1202 = vld [vmem:[%s10] sm:$0xff]
  %v1203 = vld [vmem:[%s10 + $0x8] sm:$0xff]
  %v1204 = vld [vmem:[%s10 + $0x10] sm:$0xff]
  %v1205 = vld [vmem:[%s10 + $0x18] sm:$0xff]
  %v1207 = vsel %vm734, 0.0, 0
  %1209 = vmatprep.subr.mxu0 0.0
  %1210 = vmatpush1.msra.mxu0 %v1198
  %1211 = vmatprep.subr.mxu0 0.0
  %1212 = vmatpush1.msra.mxu0 %v1199
  %1213 = vmatprep.subr.mxu0 0.0
  %1214 = vmatpush1.msra.mxu0 %v1200
  %1215 = vmatprep.subr.mxu0 0.0
  %1216 = vmatpush1.msra.mxu0 %v1201
  %1217 = vmatprep.subr.mxu0 0.0
  %1218 = vmatpush1.msra.mxu0 0.0
  %1219 = vmatprep.subr.mxu0 0.0
  %1220 = vmatpush1.msra.mxu0 0.0
  %1221 = vmatprep.subr.mxu0 0.0
  %1222 = vmatpush1.msra.mxu0 0.0
  %1223 = vmatprep.subr.mxu0 0.0
  %1224 = vmatpush1.msra.mxu0 0.0
  %1225 = vmatprep.subr.mxu0 0.0
  %1226 = vmatpush1.msra.mxu0 0.0
  %1227 = vmatprep.subr.mxu0 0.0
  %1228 = vmatpush1.msra.mxu0 0.0
  %1229 = vmatprep.subr.mxu0 0.0
  %1230 = vmatpush1.msra.mxu0 0.0
  %1231 = vmatprep.subr.mxu0 0.0
  %1232 = vmatpush1.msra.mxu0 0.0
  %1233 = vmatprep.subr.mxu0 0.0
  %1234 = vmatpush1.msra.mxu0 0.0
  %1235 = vmatprep.subr.mxu0 0.0
  %1236 = vmatpush1.msra.mxu0 0.0
  %1237 = vmatprep.subr.mxu0 0.0
  %1238 = vmatpush1.msra.mxu0 0.0
  %1239 = vmatprep.subr.mxu0 0.0
  %1240 = vmatpush1.msra.mxu0 0.0
  %1241 = vmatprep.subr.mxu0 0.0
  %1242 = vmatpush1.msra.mxu0 0.0
  %1243 = vmatprep.subr.mxu0 0.0
  %1244 = vmatpush1.msra.mxu0 0.0
  %1245 = vmatprep.subr.mxu0 0.0
  %1246 = vmatpush1.msra.mxu0 0.0
  %1247 = vmatprep.subr.mxu0 0.0
  %1248 = vmatpush1.msra.mxu0 0.0
  %1249 = vmatprep.subr.mxu0 0.0
  %1250 = vmatpush1.msra.mxu0 0.0
  %1251 = vmatprep.subr.mxu0 0.0
  %1252 = vmatpush1.msra.mxu0 0.0
  %1253 = vmatprep.subr.mxu0 0.0
  %1254 = vmatpush1.msra.mxu0 0.0
  %1255 = vmatprep.subr.mxu0 0.0
  %1256 = vmatpush1.msra.mxu0 0.0
  %1257 = vmatprep.subr.mxu0 0.0
  %1258 = vmatpush1.msra.mxu0 0.0
  %1259 = vmatprep.subr.mxu0 0.0
  %1260 = vmatpush1.msra.mxu0 0.0
  %1261 = vmatprep.subr.mxu0 0.0
  %1262 = vmatpush1.msra.mxu0 0.0
  %1263 = vmatprep.subr.mxu0 0.0
  %1264 = vmatpush1.msra.mxu0 0.0
  %1265 = vmatprep.subr.mxu0 0.0
  %1266 = vmatpush1.msra.mxu0 0.0
  %1267 = vmatprep.subr.mxu0 0.0
  %1268 = vmatpush1.msra.mxu0 0.0
  %1269 = vmatprep.subr.mxu0 0.0
  %1270 = vmatpush1.msra.mxu0 0.0
  %1271 = vmatprep.subr.mxu0 0.0
  %1272 = vmatpush1.msra.mxu0 0.0
  %1273 = vmatprep.mubr.f32.mxu0 0.0
  %1274 = vmatmul.mubr.f32.gmra.mrb[0].mxu0 %v1207
  %v1275 = vpop.f32.mrb[0].mxu0
  %v1276 = vadd.f32 0.0, %v1275
  %v1277 = vpop.f32.mrb[0].mxu0
  %1278 = vdwg.mxu0
  %1279 = vmatprep.subr.mxu0 0.0
  %1280 = vmatpush1.msra.mxu0 %v1202
  %1281 = vmatprep.subr.mxu0 0.0
  %1282 = vmatpush1.msra.mxu0 %v1203
  %1283 = vmatprep.subr.mxu0 0.0
  %1284 = vmatpush1.msra.mxu0 %v1204
  %1285 = vmatprep.subr.mxu0 0.0
  %1286 = vmatpush1.msra.mxu0 %v1205
  %1287 = vmatprep.subr.mxu0 0.0
  %1288 = vmatpush1.msra.mxu0 0.0
  %1289 = vmatprep.subr.mxu0 0.0
  %1290 = vmatpush1.msra.mxu0 0.0
  %1291 = vmatprep.subr.mxu0 0.0
  %1292 = vmatpush1.msra.mxu0 0.0
  %1293 = vmatprep.subr.mxu0 0.0
  %1294 = vmatpush1.msra.mxu0 0.0
  %1295 = vmatprep.subr.mxu0 0.0
  %1296 = vmatpush1.msra.mxu0 0.0
  %1297 = vmatprep.subr.mxu0 0.0
  %1298 = vmatpush1.msra.mxu0 0.0
  %1299 = vmatprep.subr.mxu0 0.0
  %1300 = vmatpush1.msra.mxu0 0.0
  %1301 = vmatprep.subr.mxu0 0.0
  %1302 = vmatpush1.msra.mxu0 0.0
  %1303 = vmatprep.subr.mxu0 0.0
  %1304 = vmatpush1.msra.mxu0 0.0
  %1305 = vmatprep.subr.mxu0 0.0
  %1306 = vmatpush1.msra.mxu0 0.0
  %1307 = vmatprep.subr.mxu0 0.0
  %1308 = vmatpush1.msra.mxu0 0.0
  %1309 = vmatprep.subr.mxu0 0.0
  %1310 = vmatpush1.msra.mxu0 0.0
  %1311 = vmatprep.subr.mxu0 0.0
  %1312 = vmatpush1.msra.mxu0 0.0
  %1313 = vmatprep.subr.mxu0 0.0
  %1314 = vmatpush1.msra.mxu0 0.0
  %1315 = vmatprep.subr.mxu0 0.0
  %1316 = vmatpush1.msra.mxu0 0.0
  %1317 = vmatprep.subr.mxu0 0.0
  %1318 = vmatpush1.msra.mxu0 0.0
  %1319 = vmatprep.subr.mxu0 0.0
  %1320 = vmatpush1.msra.mxu0 0.0
  %1321 = vmatprep.subr.mxu0 0.0
  %1322 = vmatpush1.msra.mxu0 0.0
  %1323 = vmatprep.subr.mxu0 0.0
  %1324 = vmatpush1.msra.mxu0 0.0
  %1325 = vmatprep.subr.mxu0 0.0
  %1326 = vmatpush1.msra.mxu0 0.0
  %1327 = vmatprep.subr.mxu0 0.0
  %1328 = vmatpush1.msra.mxu0 0.0
  %1329 = vmatprep.subr.mxu0 0.0
  %1330 = vmatpush1.msra.mxu0 0.0
  %1331 = vmatprep.subr.mxu0 0.0
  %1332 = vmatpush1.msra.mxu0 0.0
  %1333 = vmatprep.subr.mxu0 0.0
  %1334 = vmatpush1.msra.mxu0 0.0
  %1335 = vmatprep.subr.mxu0 0.0
  %1336 = vmatpush1.msra.mxu0 0.0
  %1337 = vmatprep.subr.mxu0 0.0
  %1338 = vmatpush1.msra.mxu0 0.0
  %1339 = vmatprep.subr.mxu0 0.0
  %1340 = vmatpush1.msra.mxu0 0.0
  %1341 = vmatprep.subr.mxu0 0.0
  %1342 = vmatpush1.msra.mxu0 0.0
  %1343 = vmatprep.mubr.f32.mxu0 0.0
  %1344 = vmatmul.mubr.f32.gmra.mrb[0].mxu0 %v1207
  %v1345 = vpop.f32.mrb[0].mxu0
  %v1346 = vadd.f32 0.0, %v1345
  %v1347 = vpop.f32.mrb[0].mxu0
  %1348 = vdwg.mxu0
  %v1349 = vadd.f32 %v1182, %v1276
  %v1350 = vadd.f32 %v1197, %v1346
  %v1351 = vtanh.pop %v1349
  %v1352 = vxor.u32 %v1349, 2147483648
  %v1353 = vmul.f32 %v1352, 1.442695
  %v1354 = vpow.pop %v1353
  %v1355 = vadd.f32 %v1354, 1.0
  %v1356 = vrcp.pop %v1355
  %v1357 = vmul.f32 1.0, %v1356
  %v1358 = vsel %vm717, %v1351, %v1357
  %v1359 = vtanh.pop %v1350
  %v1360 = vxor.u32 %v1350, 2147483648
  %v1361 = vmul.f32 %v1360, 1.442695
  %v1362 = vpow.pop %v1361
  %v1363 = vadd.f32 %v1362, 1.0
  %v1364 = vrcp.pop %v1363
  %v1365 = vmul.f32 1.0, %v1364
  %v1366 = vsel %vm717, %v1359, %v1365
  %v1367 = vmul.f32 %v1358, 0.0
  %1369 = vrot.lane.b32.xlu0 %v1358, 64
  %v1370 = vpop.permute.xlu0 %1369
  %v1372 = vmul.f32 %v1358, %v1370
  %1374 = vrot.lane.b32.xlu0 %v1372, 32
  %v1375 = vpop.permute.xlu0 %1374
  %v1377 = vadd.f32 %v1367, %v1375
  %v1378 = vmul.f32 %v1366, 0.0
  %1380 = vrot.lane.b32.xlu0 %v1366, 64
  %v1381 = vpop.permute.xlu0 %1380
  %v1383 = vmul.f32 %v1366, %v1381
  %1385 = vrot.lane.b32.xlu0 %v1383, 32
  %v1386 = vpop.permute.xlu0 %1385
  %v1388 = vadd.f32 %v1378, %v1386
  %v1389 = vtanh.pop %v1377
  %1391 = vrot.lane.b32.xlu0 %v1389, 64
  %v1392 = vpop.permute.xlu0 %1391
  %v1394 = vmul.f32 %v1358, %v1392
  %v1395 = vtanh.pop %v1388
  %1397 = vrot.lane.b32.xlu0 %v1395, 64
  %v1398 = vpop.permute.xlu0 %1397
  %v1400 = vmul.f32 %v1366, %v1398
  %1402 = vrot.lane.b32.xlu0 %v1394, 32
  %v1403 = vpop.permute.xlu0 %1402
  %v1404 = vsel %vm734, %v1403, 0
  %1406 = vmatprep.subr.mxu0 0.0
  %1407 = vmatpush1.msra.mxu0 %v1198
  %1408 = vmatprep.subr.mxu0 0.0
  %1409 = vmatpush1.msra.mxu0 %v1199
  %1410 = vmatprep.subr.mxu0 0.0
  %1411 = vmatpush1.msra.mxu0 %v1200
  %1412 = vmatprep.subr.mxu0 0.0
  %1413 = vmatpush1.msra.mxu0 %v1201
  %1414 = vmatprep.subr.mxu0 0.0
  %1415 = vmatpush1.msra.mxu0 0.0
  %1416 = vmatprep.subr.mxu0 0.0
  %1417 = vmatpush1.msra.mxu0 0.0
  %1418 = vmatprep.subr.mxu0 0.0
  %1419 = vmatpush1.msra.mxu0 0.0
  %1420 = vmatprep.subr.mxu0 0.0
  %1421 = vmatpush1.msra.mxu0 0.0
  %1422 = vmatprep.subr.mxu0 0.0
  %1423 = vmatpush1.msra.mxu0 0.0
  %1424 = vmatprep.subr.mxu0 0.0
  %1425 = vmatpush1.msra.mxu0 0.0
  %1426 = vmatprep.subr.mxu0 0.0
  %1427 = vmatpush1.msra.mxu0 0.0
  %1428 = vmatprep.subr.mxu0 0.0
  %1429 = vmatpush1.msra.mxu0 0.0
  %1430 = vmatprep.subr.mxu0 0.0
  %1431 = vmatpush1.msra.mxu0 0.0
  %1432 = vmatprep.subr.mxu0 0.0
  %1433 = vmatpush1.msra.mxu0 0.0
  %1434 = vmatprep.subr.mxu0 0.0
  %1435 = vmatpush1.msra.mxu0 0.0
  %1436 = vmatprep.subr.mxu0 0.0
  %1437 = vmatpush1.msra.mxu0 0.0
  %1438 = vmatprep.subr.mxu0 0.0
  %1439 = vmatpush1.msra.mxu0 0.0
  %1440 = vmatprep.subr.mxu0 0.0
  %1441 = vmatpush1.msra.mxu0 0.0
  %1442 = vmatprep.subr.mxu0 0.0
  %1443 = vmatpush1.msra.mxu0 0.0
  %1444 = vmatprep.subr.mxu0 0.0
  %1445 = vmatpush1.msra.mxu0 0.0
  %1446 = vmatprep.subr.mxu0 0.0
  %1447 = vmatpush1.msra.mxu0 0.0
  %1448 = vmatprep.subr.mxu0 0.0
  %1449 = vmatpush1.msra.mxu0 0.0
  %1450 = vmatprep.subr.mxu0 0.0
  %1451 = vmatpush1.msra.mxu0 0.0
  %1452 = vmatprep.subr.mxu0 0.0
  %1453 = vmatpush1.msra.mxu0 0.0
  %1454 = vmatprep.subr.mxu0 0.0
  %1455 = vmatpush1.msra.mxu0 0.0
  %1456 = vmatprep.subr.mxu0 0.0
  %1457 = vmatpush1.msra.mxu0 0.0
  %1458 = vmatprep.subr.mxu0 0.0
  %1459 = vmatpush1.msra.mxu0 0.0
  %1460 = vmatprep.subr.mxu0 0.0
  %1461 = vmatpush1.msra.mxu0 0.0
  %1462 = vmatprep.subr.mxu0 0.0
  %1463 = vmatpush1.msra.mxu0 0.0
  %1464 = vmatprep.subr.mxu0 0.0
  %1465 = vmatpush1.msra.mxu0 0.0
  %1466 = vmatprep.subr.mxu0 0.0
  %1467 = vmatpush1.msra.mxu0 0.0
  %1468 = vmatprep.subr.mxu0 0.0
  %1469 = vmatpush1.msra.mxu0 0.0
  %1470 = vmatprep.mubr.f32.mxu0 0.0
  %1471 = vmatmul.mubr.f32.gmra.mrb[0].mxu0 %v1404
  %v1472 = vpop.f32.mrb[0].mxu0
  %v1473 = vadd.f32 0.0, %v1472
  %v1474 = vpop.f32.mrb[0].mxu0
  %1475 = vdwg.mxu0
  %1477 = vrot.lane.b32.xlu0 %v1400, 32
  %v1478 = vpop.permute.xlu0 %1477
  %v1479 = vsel %vm734, %v1478, 0
  %1481 = vmatprep.subr.mxu0 0.0
  %1482 = vmatpush1.msra.mxu0 %v1202
  %1483 = vmatprep.subr.mxu0 0.0
  %1484 = vmatpush1.msra.mxu0 %v1203
  %1485 = vmatprep.subr.mxu0 0.0
  %1486 = vmatpush1.msra.mxu0 %v1204
  %1487 = vmatprep.subr.mxu0 0.0
  %1488 = vmatpush1.msra.mxu0 %v1205
  %1489 = vmatprep.subr.mxu0 0.0
  %1490 = vmatpush1.msra.mxu0 0.0
  %1491 = vmatprep.subr.mxu0 0.0
  %1492 = vmatpush1.msra.mxu0 0.0
  %1493 = vmatprep.subr.mxu0 0.0
  %1494 = vmatpush1.msra.mxu0 0.0
  %1495 = vmatprep.subr.mxu0 0.0
  %1496 = vmatpush1.msra.mxu0 0.0
  %1497 = vmatprep.subr.mxu0 0.0
  %1498 = vmatpush1.msra.mxu0 0.0
  %1499 = vmatprep.subr.mxu0 0.0
  %1500 = vmatpush1.msra.mxu0 0.0
  %1501 = vmatprep.subr.mxu0 0.0
  %1502 = vmatpush1.msra.mxu0 0.0
  %1503 = vmatprep.subr.mxu0 0.0
  %1504 = vmatpush1.msra.mxu0 0.0
  %1505 = vmatprep.subr.mxu0 0.0
  %1506 = vmatpush1.msra.mxu0 0.0
  %1507 = vmatprep.subr.mxu0 0.0
  %1508 = vmatpush1.msra.mxu0 0.0
  %1509 = vmatprep.subr.mxu0 0.0
  %1510 = vmatpush1.msra.mxu0 0.0
  %1511 = vmatprep.subr.mxu0 0.0
  %1512 = vmatpush1.msra.mxu0 0.0
  %1513 = vmatprep.subr.mxu0 0.0
  %1514 = vmatpush1.msra.mxu0 0.0
  %1515 = vmatprep.subr.mxu0 0.0
  %1516 = vmatpush1.msra.mxu0 0.0
  %1517 = vmatprep.subr.mxu0 0.0
  %1518 = vmatpush1.msra.mxu0 0.0
  %1519 = vmatprep.subr.mxu0 0.0
  %1520 = vmatpush1.msra.mxu0 0.0
  %1521 = vmatprep.subr.mxu0 0.0
  %1522 = vmatpush1.msra.mxu0 0.0
  %1523 = vmatprep.subr.mxu0 0.0
  %1524 = vmatpush1.msra.mxu0 0.0
  %1525 = vmatprep.subr.mxu0 0.0
  %1526 = vmatpush1.msra.mxu0 0.0
  %1527 = vmatprep.subr.mxu0 0.0
  %1528 = vmatpush1.msra.mxu0 0.0
  %1529 = vmatprep.subr.mxu0 0.0
  %1530 = vmatpush1.msra.mxu0 0.0
  %1531 = vmatprep.subr.mxu0 0.0
  %1532 = vmatpush1.msra.mxu0 0.0
  %1533 = vmatprep.subr.mxu0 0.0
  %1534 = vmatpush1.msra.mxu0 0.0
  %1535 = vmatprep.subr.mxu0 0.0
  %1536 = vmatpush1.msra.mxu0 0.0
  %1537 = vmatprep.subr.mxu0 0.0
  %1538 = vmatpush1.msra.mxu0 0.0
  %1539 = vmatprep.subr.mxu0 0.0
  %1540 = vmatpush1.msra.mxu0 0.0
  %1541 = vmatprep.subr.mxu0 0.0
  %1542 = vmatpush1.msra.mxu0 0.0
  %1543 = vmatprep.subr.mxu0 0.0
  %1544 = vmatpush1.msra.mxu0 0.0
  %1545 = vmatprep.mubr.f32.mxu0 0.0
  %1546 = vmatmul.mubr.f32.gmra.mrb[0].mxu0 %v1479
  %v1547 = vpop.f32.mrb[0].mxu0
  %v1548 = vadd.f32 0.0, %v1547
  %v1549 = vpop.f32.mrb[0].mxu0
  %1550 = vdwg.mxu0
  %v1551 = vadd.f32 %v1184, %v1473
  %v1552 = vadd.f32 %v1195, %v1548
  %v1553 = vtanh.pop %v1551
  %v1554 = vxor.u32 %v1551, 2147483648
  %v1555 = vmul.f32 %v1554, 1.442695
  %v1556 = vpow.pop %v1555
  %v1557 = vadd.f32 %v1556, 1.0
  %v1558 = vrcp.pop %v1557
  %v1559 = vmul.f32 1.0, %v1558
  %v1560 = vsel %vm717, %v1553, %v1559
  %v1561 = vtanh.pop %v1552
  %v1562 = vxor.u32 %v1552, 2147483648
  %v1563 = vmul.f32 %v1562, 1.442695
  %v1564 = vpow.pop %v1563
  %v1565 = vadd.f32 %v1564, 1.0
  %v1566 = vrcp.pop %v1565
  %v1567 = vmul.f32 1.0, %v1566
  %v1568 = vsel %vm717, %v1561, %v1567
  %v1569 = vmul.f32 %v1560, %v1377
  %1571 = vrot.lane.b32.xlu0 %v1560, 64
  %v1572 = vpop.permute.xlu0 %1571
  %v1574 = vmul.f32 %v1560, %v1572
  %1576 = vrot.lane.b32.xlu0 %v1574, 32
  %v1577 = vpop.permute.xlu0 %1576
  %v1579 = vadd.f32 %v1569, %v1577
  %v1580 = vmul.f32 %v1568, %v1388
  %1582 = vrot.lane.b32.xlu0 %v1568, 64
  %v1583 = vpop.permute.xlu0 %1582
  %v1585 = vmul.f32 %v1568, %v1583
  %1587 = vrot.lane.b32.xlu0 %v1585, 32
  %v1588 = vpop.permute.xlu0 %1587
  %v1590 = vadd.f32 %v1580, %v1588
  %v1591 = vtanh.pop %v1579
  %1593 = vrot.lane.b32.xlu0 %v1591, 64
  %v1594 = vpop.permute.xlu0 %1593
  %v1596 = vmul.f32 %v1560, %v1594
  %v1597 = vtanh.pop %v1590
  %1599 = vrot.lane.b32.xlu0 %v1597, 64
  %v1600 = vpop.permute.xlu0 %1599
  %v1602 = vmul.f32 %v1568, %v1600
  %1604 = vrot.lane.b32.xlu0 %v1596, 32
  %v1605 = vpop.permute.xlu0 %1604
  %v1606 = vsel %vm734, %v1605, 0
  %1608 = vmatprep.subr.mxu0 0.0
  %1609 = vmatpush1.msra.mxu0 %v1198
  %1610 = vmatprep.subr.mxu0 0.0
  %1611 = vmatpush1.msra.mxu0 %v1199
  %1612 = vmatprep.subr.mxu0 0.0
  %1613 = vmatpush1.msra.mxu0 %v1200
  %1614 = vmatprep.subr.mxu0 0.0
  %1615 = vmatpush1.msra.mxu0 %v1201
  %1616 = vmatprep.subr.mxu0 0.0
  %1617 = vmatpush1.msra.mxu0 0.0
  %1618 = vmatprep.subr.mxu0 0.0
  %1619 = vmatpush1.msra.mxu0 0.0
  %1620 = vmatprep.subr.mxu0 0.0
  %1621 = vmatpush1.msra.mxu0 0.0
  %1622 = vmatprep.subr.mxu0 0.0
  %1623 = vmatpush1.msra.mxu0 0.0
  %1624 = vmatprep.subr.mxu0 0.0
  %1625 = vmatpush1.msra.mxu0 0.0
  %1626 = vmatprep.subr.mxu0 0.0
  %1627 = vmatpush1.msra.mxu0 0.0
  %1628 = vmatprep.subr.mxu0 0.0
  %1629 = vmatpush1.msra.mxu0 0.0
  %1630 = vmatprep.subr.mxu0 0.0
  %1631 = vmatpush1.msra.mxu0 0.0
  %1632 = vmatprep.subr.mxu0 0.0
  %1633 = vmatpush1.msra.mxu0 0.0
  %1634 = vmatprep.subr.mxu0 0.0
  %1635 = vmatpush1.msra.mxu0 0.0
  %1636 = vmatprep.subr.mxu0 0.0
  %1637 = vmatpush1.msra.mxu0 0.0
  %1638 = vmatprep.subr.mxu0 0.0
  %1639 = vmatpush1.msra.mxu0 0.0
  %1640 = vmatprep.subr.mxu0 0.0
  %1641 = vmatpush1.msra.mxu0 0.0
  %1642 = vmatprep.subr.mxu0 0.0
  %1643 = vmatpush1.msra.mxu0 0.0
  %1644 = vmatprep.subr.mxu0 0.0
  %1645 = vmatpush1.msra.mxu0 0.0
  %1646 = vmatprep.subr.mxu0 0.0
  %1647 = vmatpush1.msra.mxu0 0.0
  %1648 = vmatprep.subr.mxu0 0.0
  %1649 = vmatpush1.msra.mxu0 0.0
  %1650 = vmatprep.subr.mxu0 0.0
  %1651 = vmatpush1.msra.mxu0 0.0
  %1652 = vmatprep.subr.mxu0 0.0
  %1653 = vmatpush1.msra.mxu0 0.0
  %1654 = vmatprep.subr.mxu0 0.0
  %1655 = vmatpush1.msra.mxu0 0.0
  %1656 = vmatprep.subr.mxu0 0.0
  %1657 = vmatpush1.msra.mxu0 0.0
  %1658 = vmatprep.subr.mxu0 0.0
  %1659 = vmatpush1.msra.mxu0 0.0
  %1660 = vmatprep.subr.mxu0 0.0
  %1661 = vmatpush1.msra.mxu0 0.0
  %1662 = vmatprep.subr.mxu0 0.0
  %1663 = vmatpush1.msra.mxu0 0.0
  %1664 = vmatprep.subr.mxu0 0.0
  %1665 = vmatpush1.msra.mxu0 0.0
  %1666 = vmatprep.subr.mxu0 0.0
  %1667 = vmatpush1.msra.mxu0 0.0
  %1668 = vmatprep.subr.mxu0 0.0
  %1669 = vmatpush1.msra.mxu0 0.0
  %1670 = vmatprep.subr.mxu0 0.0
  %1671 = vmatpush1.msra.mxu0 0.0
  %1672 = vmatprep.mubr.f32.mxu0 0.0
  %1673 = vmatmul.mubr.f32.gmra.mrb[0].mxu0 %v1606
  %v1674 = vpop.f32.mrb[0].mxu0
  %v1675 = vadd.f32 0.0, %v1674
  %v1676 = vpop.f32.mrb[0].mxu0
  %1677 = vdwg.mxu0
  %1679 = vrot.lane.b32.xlu0 %v1602, 32
  %v1680 = vpop.permute.xlu0 %1679
  %v1681 = vsel %vm734, %v1680, 0
  %1683 = vmatprep.subr.mxu0 0.0
  %1684 = vmatpush1.msra.mxu0 %v1202
  %1685 = vmatprep.subr.mxu0 0.0
  %1686 = vmatpush1.msra.mxu0 %v1203
  %1687 = vmatprep.subr.mxu0 0.0
  %1688 = vmatpush1.msra.mxu0 %v1204
  %1689 = vmatprep.subr.mxu0 0.0
  %1690 = vmatpush1.msra.mxu0 %v1205
  %1691 = vmatprep.subr.mxu0 0.0
  %1692 = vmatpush1.msra.mxu0 0.0
  %1693 = vmatprep.subr.mxu0 0.0
  %1694 = vmatpush1.msra.mxu0 0.0
  %1695 = vmatprep.subr.mxu0 0.0
  %1696 = vmatpush1.msra.mxu0 0.0
  %1697 = vmatprep.subr.mxu0 0.0
  %1698 = vmatpush1.msra.mxu0 0.0
  %1699 = vmatprep.subr.mxu0 0.0
  %1700 = vmatpush1.msra.mxu0 0.0
  %1701 = vmatprep.subr.mxu0 0.0
  %1702 = vmatpush1.msra.mxu0 0.0
  %1703 = vmatprep.subr.mxu0 0.0
  %1704 = vmatpush1.msra.mxu0 0.0
  %1705 = vmatprep.subr.mxu0 0.0
  %1706 = vmatpush1.msra.mxu0 0.0
  %1707 = vmatprep.subr.mxu0 0.0
  %1708 = vmatpush1.msra.mxu0 0.0
  %1709 = vmatprep.subr.mxu0 0.0
  %1710 = vmatpush1.msra.mxu0 0.0
  %1711 = vmatprep.subr.mxu0 0.0
  %1712 = vmatpush1.msra.mxu0 0.0
  %1713 = vmatprep.subr.mxu0 0.0
  %1714 = vmatpush1.msra.mxu0 0.0
  %1715 = vmatprep.subr.mxu0 0.0
  %1716 = vmatpush1.msra.mxu0 0.0
  %1717 = vmatprep.subr.mxu0 0.0
  %1718 = vmatpush1.msra.mxu0 0.0
  %1719 = vmatprep.subr.mxu0 0.0
  %1720 = vmatpush1.msra.mxu0 0.0
  %1721 = vmatprep.subr.mxu0 0.0
  %1722 = vmatpush1.msra.mxu0 0.0
  %1723 = vmatprep.subr.mxu0 0.0
  %1724 = vmatpush1.msra.mxu0 0.0
  %1725 = vmatprep.subr.mxu0 0.0
  %1726 = vmatpush1.msra.mxu0 0.0
  %1727 = vmatprep.subr.mxu0 0.0
  %1728 = vmatpush1.msra.mxu0 0.0
  %1729 = vmatprep.subr.mxu0 0.0
  %1730 = vmatpush1.msra.mxu0 0.0
  %1731 = vmatprep.subr.mxu0 0.0
  %1732 = vmatpush1.msra.mxu0 0.0
  %1733 = vmatprep.subr.mxu0 0.0
  %1734 = vmatpush1.msra.mxu0 0.0
  %1735 = vmatprep.subr.mxu0 0.0
  %1736 = vmatpush1.msra.mxu0 0.0
  %1737 = vmatprep.subr.mxu0 0.0
  %1738 = vmatpush1.msra.mxu0 0.0
  %1739 = vmatprep.subr.mxu0 0.0
  %1740 = vmatpush1.msra.mxu0 0.0
  %1741 = vmatprep.subr.mxu0 0.0
  %1742 = vmatpush1.msra.mxu0 0.0
  %1743 = vmatprep.subr.mxu0 0.0
  %1744 = vmatpush1.msra.mxu0 0.0
  %1745 = vmatprep.subr.mxu0 0.0
  %1746 = vmatpush1.msra.mxu0 0.0
  %1747 = vmatprep.mubr.f32.mxu0 0.0
  %1748 = vmatmul.mubr.f32.gmra.mrb[0].mxu0 %v1681
  %v1749 = vpop.f32.mrb[0].mxu0
  %v1750 = vadd.f32 0.0, %v1749
  %v1751 = vpop.f32.mrb[0].mxu0
  %1752 = vdwg.mxu0
  %v1753 = vadd.f32 %v1186, %v1675
  %v1754 = vadd.f32 %v1193, %v1750
  %v1755 = vtanh.pop %v1753
  %v1756 = vxor.u32 %v1753, 2147483648
  %v1757 = vmul.f32 %v1756, 1.442695
  %v1758 = vpow.pop %v1757
  %v1759 = vadd.f32 %v1758, 1.0
  %v1760 = vrcp.pop %v1759
  %v1761 = vmul.f32 1.0, %v1760
  %v1762 = vsel %vm717, %v1755, %v1761
  %v1763 = vtanh.pop %v1754
  %v1764 = vxor.u32 %v1754, 2147483648
  %v1765 = vmul.f32 %v1764, 1.442695
  %v1766 = vpow.pop %v1765
  %v1767 = vadd.f32 %v1766, 1.0
  %v1768 = vrcp.pop %v1767
  %v1769 = vmul.f32 1.0, %v1768
  %v1770 = vsel %vm717, %v1763, %v1769
  %v1771 = vmul.f32 %v1762, %v1579
  %1773 = vrot.lane.b32.xlu0 %v1762, 64
  %v1774 = vpop.permute.xlu0 %1773
  %v1776 = vmul.f32 %v1762, %v1774
  %1778 = vrot.lane.b32.xlu0 %v1776, 32
  %v1779 = vpop.permute.xlu0 %1778
  %v1781 = vadd.f32 %v1771, %v1779
  %v1782 = vmul.f32 %v1770, %v1590
  %1784 = vrot.lane.b32.xlu0 %v1770, 64
  %v1785 = vpop.permute.xlu0 %1784
  %v1787 = vmul.f32 %v1770, %v1785
  %1789 = vrot.lane.b32.xlu0 %v1787, 32
  %v1790 = vpop.permute.xlu0 %1789
  %v1792 = vadd.f32 %v1782, %v1790
  %v1793 = vtanh.pop %v1781
  %1795 = vrot.lane.b32.xlu0 %v1793, 64
  %v1796 = vpop.permute.xlu0 %1795
  %v1798 = vmul.f32 %v1762, %v1796
  %v1799 = vtanh.pop %v1792
  %1801 = vrot.lane.b32.xlu0 %v1799, 64
  %v1802 = vpop.permute.xlu0 %1801
  %v1804 = vmul.f32 %v1770, %v1802
  %1806 = vrot.lane.b32.xlu0 %v1798, 32
  %v1807 = vpop.permute.xlu0 %1806
  %v1808 = vsel %vm734, %v1807, 0
  %1810 = vmatprep.subr.mxu0 0.0
  %1811 = vmatpush1.msra.mxu0 %v1198
  %1812 = vmatprep.subr.mxu0 0.0
  %1813 = vmatpush1.msra.mxu0 %v1199
  %1814 = vmatprep.subr.mxu0 0.0
  %1815 = vmatpush1.msra.mxu0 %v1200
  %1816 = vmatprep.subr.mxu0 0.0
  %1817 = vmatpush1.msra.mxu0 %v1201
  %1818 = vmatprep.subr.mxu0 0.0
  %1819 = vmatpush1.msra.mxu0 0.0
  %1820 = vmatprep.subr.mxu0 0.0
  %1821 = vmatpush1.msra.mxu0 0.0
  %1822 = vmatprep.subr.mxu0 0.0
  %1823 = vmatpush1.msra.mxu0 0.0
  %1824 = vmatprep.subr.mxu0 0.0
  %1825 = vmatpush1.msra.mxu0 0.0
  %1826 = vmatprep.subr.mxu0 0.0
  %1827 = vmatpush1.msra.mxu0 0.0
  %1828 = vmatprep.subr.mxu0 0.0
  %1829 = vmatpush1.msra.mxu0 0.0
  %1830 = vmatprep.subr.mxu0 0.0
  %1831 = vmatpush1.msra.mxu0 0.0
  %1832 = vmatprep.subr.mxu0 0.0
  %1833 = vmatpush1.msra.mxu0 0.0
  %1834 = vmatprep.subr.mxu0 0.0
  %1835 = vmatpush1.msra.mxu0 0.0
  %1836 = vmatprep.subr.mxu0 0.0
  %1837 = vmatpush1.msra.mxu0 0.0
  %1838 = vmatprep.subr.mxu0 0.0
  %1839 = vmatpush1.msra.mxu0 0.0
  %1840 = vmatprep.subr.mxu0 0.0
  %1841 = vmatpush1.msra.mxu0 0.0
  %1842 = vmatprep.subr.mxu0 0.0
  %1843 = vmatpush1.msra.mxu0 0.0
  %1844 = vmatprep.subr.mxu0 0.0
  %1845 = vmatpush1.msra.mxu0 0.0
  %1846 = vmatprep.subr.mxu0 0.0
  %1847 = vmatpush1.msra.mxu0 0.0
  %1848 = vmatprep.subr.mxu0 0.0
  %1849 = vmatpush1.msra.mxu0 0.0
  %1850 = vmatprep.subr.mxu0 0.0
  %1851 = vmatpush1.msra.mxu0 0.0
  %1852 = vmatprep.subr.mxu0 0.0
  %1853 = vmatpush1.msra.mxu0 0.0
  %1854 = vmatprep.subr.mxu0 0.0
  %1855 = vmatpush1.msra.mxu0 0.0
  %1856 = vmatprep.subr.mxu0 0.0
  %1857 = vmatpush1.msra.mxu0 0.0
  %1858 = vmatprep.subr.mxu0 0.0
  %1859 = vmatpush1.msra.mxu0 0.0
  %1860 = vmatprep.subr.mxu0 0.0
  %1861 = vmatpush1.msra.mxu0 0.0
  %1862 = vmatprep.subr.mxu0 0.0
  %1863 = vmatpush1.msra.mxu0 0.0
  %1864 = vmatprep.subr.mxu0 0.0
  %1865 = vmatpush1.msra.mxu0 0.0
  %1866 = vmatprep.subr.mxu0 0.0
  %1867 = vmatpush1.msra.mxu0 0.0
  %1868 = vmatprep.subr.mxu0 0.0
  %1869 = vmatpush1.msra.mxu0 0.0
  %1870 = vmatprep.subr.mxu0 0.0
  %1871 = vmatpush1.msra.mxu0 0.0
  %1872 = vmatprep.subr.mxu0 0.0
  %1873 = vmatpush1.msra.mxu0 0.0
  %1874 = vmatprep.mubr.f32.mxu0 0.0
  %1875 = vmatmul.mubr.f32.gmra.mrb[0].mxu0 %v1808
  %v1876 = vpop.f32.mrb[0].mxu0
  %v1877 = vadd.f32 0.0, %v1876
  %v1878 = vpop.f32.mrb[0].mxu0
  %1879 = vdwg.mxu0
  %1881 = vrot.lane.b32.xlu0 %v1804, 32
  %v1882 = vpop.permute.xlu0 %1881
  %v1883 = vsel %vm734, %v1882, 0
  %1885 = vmatprep.subr.mxu0 0.0
  %1886 = vmatpush1.msra.mxu0 %v1202
  %1887 = vmatprep.subr.mxu0 0.0
  %1888 = vmatpush1.msra.mxu0 %v1203
  %1889 = vmatprep.subr.mxu0 0.0
  %1890 = vmatpush1.msra.mxu0 %v1204
  %1891 = vmatprep.subr.mxu0 0.0
  %1892 = vmatpush1.msra.mxu0 %v1205
  %1893 = vmatprep.subr.mxu0 0.0
  %1894 = vmatpush1.msra.mxu0 0.0
  %1895 = vmatprep.subr.mxu0 0.0
  %1896 = vmatpush1.msra.mxu0 0.0
  %1897 = vmatprep.subr.mxu0 0.0
  %1898 = vmatpush1.msra.mxu0 0.0
  %1899 = vmatprep.subr.mxu0 0.0
  %1900 = vmatpush1.msra.mxu0 0.0
  %1901 = vmatprep.subr.mxu0 0.0
  %1902 = vmatpush1.msra.mxu0 0.0
  %1903 = vmatprep.subr.mxu0 0.0
  %1904 = vmatpush1.msra.mxu0 0.0
  %1905 = vmatprep.subr.mxu0 0.0
  %1906 = vmatpush1.msra.mxu0 0.0
  %1907 = vmatprep.subr.mxu0 0.0
  %1908 = vmatpush1.msra.mxu0 0.0
  %1909 = vmatprep.subr.mxu0 0.0
  %1910 = vmatpush1.msra.mxu0 0.0
  %1911 = vmatprep.subr.mxu0 0.0
  %1912 = vmatpush1.msra.mxu0 0.0
  %1913 = vmatprep.subr.mxu0 0.0
  %1914 = vmatpush1.msra.mxu0 0.0
  %1915 = vmatprep.subr.mxu0 0.0
  %1916 = vmatpush1.msra.mxu0 0.0
  %1917 = vmatprep.subr.mxu0 0.0
  %1918 = vmatpush1.msra.mxu0 0.0
  %1919 = vmatprep.subr.mxu0 0.0
  %1920 = vmatpush1.msra.mxu0 0.0
  %1921 = vmatprep.subr.mxu0 0.0
  %1922 = vmatpush1.msra.mxu0 0.0
  %1923 = vmatprep.subr.mxu0 0.0
  %1924 = vmatpush1.msra.mxu0 0.0
  %1925 = vmatprep.subr.mxu0 0.0
  %1926 = vmatpush1.msra.mxu0 0.0
  %1927 = vmatprep.subr.mxu0 0.0
  %1928 = vmatpush1.msra.mxu0 0.0
  %1929 = vmatprep.subr.mxu0 0.0
  %1930 = vmatpush1.msra.mxu0 0.0
  %1931 = vmatprep.subr.mxu0 0.0
  %1932 = vmatpush1.msra.mxu0 0.0
  %1933 = vmatprep.subr.mxu0 0.0
  %1934 = vmatpush1.msra.mxu0 0.0
  %1935 = vmatprep.subr.mxu0 0.0
  %1936 = vmatpush1.msra.mxu0 0.0
  %1937 = vmatprep.subr.mxu0 0.0
  %1938 = vmatpush1.msra.mxu0 0.0
  %1939 = vmatprep.subr.mxu0 0.0
  %1940 = vmatpush1.msra.mxu0 0.0
  %1941 = vmatprep.subr.mxu0 0.0
  %1942 = vmatpush1.msra.mxu0 0.0
  %1943 = vmatprep.subr.mxu0 0.0
  %1944 = vmatpush1.msra.mxu0 0.0
  %1945 = vmatprep.subr.mxu0 0.0
  %1946 = vmatpush1.msra.mxu0 0.0
  %1947 = vmatprep.subr.mxu0 0.0
  %1948 = vmatpush1.msra.mxu0 0.0
  %1949 = vmatprep.mubr.f32.mxu0 0.0
  %1950 = vmatmul.mubr.f32.gmra.mrb[0].mxu0 %v1883
  %v1951 = vpop.f32.mrb[0].mxu0
  %v1952 = vadd.f32 0.0, %v1951
  %v1953 = vpop.f32.mrb[0].mxu0
  %1954 = vdwg.mxu0
  %v1955 = vadd.f32 %v1188, %v1877
  %v1956 = vadd.f32 %v1191, %v1952
  %v1957 = vtanh.pop %v1955
  %v1958 = vxor.u32 %v1955, 2147483648
  %v1959 = vmul.f32 %v1958, 1.442695
  %v1960 = vpow.pop %v1959
  %v1961 = vadd.f32 %v1960, 1.0
  %v1962 = vrcp.pop %v1961
  %v1963 = vmul.f32 1.0, %v1962
  %v1964 = vsel %vm717, %v1957, %v1963
  %v1965 = vtanh.pop %v1956
  %v1966 = vxor.u32 %v1956, 2147483648
  %v1967 = vmul.f32 %v1966, 1.442695
  %v1968 = vpow.pop %v1967
  %v1969 = vadd.f32 %v1968, 1.0
  %v1970 = vrcp.pop %v1969
  %v1971 = vmul.f32 1.0, %v1970
  %v1972 = vsel %vm717, %v1965, %v1971
  %v1973 = vmul.f32 %v1964, %v1781
  %1975 = vrot.lane.b32.xlu0 %v1964, 64
  %v1976 = vpop.permute.xlu0 %1975
  %v1978 = vmul.f32 %v1964, %v1976
  %1980 = vrot.lane.b32.xlu0 %v1978, 32
  %v1981 = vpop.permute.xlu0 %1980
  %v1983 = vadd.f32 %v1973, %v1981
  %v1984 = vmul.f32 %v1972, %v1792
  %1986 = vrot.lane.b32.xlu0 %v1972, 64
  %v1987 = vpop.permute.xlu0 %1986
  %v1989 = vmul.f32 %v1972, %v1987
  %1991 = vrot.lane.b32.xlu0 %v1989, 32
  %v1992 = vpop.permute.xlu0 %1991
  %v1994 = vadd.f32 %v1984, %v1992
  %v1995 = vtanh.pop %v1983
  %1997 = vrot.lane.b32.xlu0 %v1995, 64
  %v1998 = vpop.permute.xlu0 %1997
  %v2000 = vmul.f32 %v1964, %v1998
  %v2001 = vtanh.pop %v1994
  %2003 = vrot.lane.b32.xlu0 %v2001, 64
  %v2004 = vpop.permute.xlu0 %2003
  %v2006 = vmul.f32 %v1972, %v2004
  %2008 = vrot.lane.b32.xlu0 %v2000, 32
  %v2009 = vpop.permute.xlu0 %2008
  %v2010 = vsel %vm734, %v2009, 0
  %2012 = vmatprep.subr.mxu0 0.0
  %2013 = vmatpush1.msra.mxu0 %v1198
  %2014 = vmatprep.subr.mxu0 0.0
  %2015 = vmatpush1.msra.mxu0 %v1199
  %2016 = vmatprep.subr.mxu0 0.0
  %2017 = vmatpush1.msra.mxu0 %v1200
  %2018 = vmatprep.subr.mxu0 0.0
  %2019 = vmatpush1.msra.mxu0 %v1201
  %2020 = vmatprep.subr.mxu0 0.0
  %2021 = vmatpush1.msra.mxu0 0.0
  %2022 = vmatprep.subr.mxu0 0.0
  %2023 = vmatpush1.msra.mxu0 0.0
  %2024 = vmatprep.subr.mxu0 0.0
  %2025 = vmatpush1.msra.mxu0 0.0
  %2026 = vmatprep.subr.mxu0 0.0
  %2027 = vmatpush1.msra.mxu0 0.0
  %2028 = vmatprep.subr.mxu0 0.0
  %2029 = vmatpush1.msra.mxu0 0.0
  %2030 = vmatprep.subr.mxu0 0.0
  %2031 = vmatpush1.msra.mxu0 0.0
  %2032 = vmatprep.subr.mxu0 0.0
  %2033 = vmatpush1.msra.mxu0 0.0
  %2034 = vmatprep.subr.mxu0 0.0
  %2035 = vmatpush1.msra.mxu0 0.0
  %2036 = vmatprep.subr.mxu0 0.0
  %2037 = vmatpush1.msra.mxu0 0.0
  %2038 = vmatprep.subr.mxu0 0.0
  %2039 = vmatpush1.msra.mxu0 0.0
  %2040 = vmatprep.subr.mxu0 0.0
  %2041 = vmatpush1.msra.mxu0 0.0
  %2042 = vmatprep.subr.mxu0 0.0
  %2043 = vmatpush1.msra.mxu0 0.0
  %2044 = vmatprep.subr.mxu0 0.0
  %2045 = vmatpush1.msra.mxu0 0.0
  %2046 = vmatprep.subr.mxu0 0.0
  %2047 = vmatpush1.msra.mxu0 0.0
  %2048 = vmatprep.subr.mxu0 0.0
  %2049 = vmatpush1.msra.mxu0 0.0
  %2050 = vmatprep.subr.mxu0 0.0
  %2051 = vmatpush1.msra.mxu0 0.0
  %2052 = vmatprep.subr.mxu0 0.0
  %2053 = vmatpush1.msra.mxu0 0.0
  %2054 = vmatprep.subr.mxu0 0.0
  %2055 = vmatpush1.msra.mxu0 0.0
  %2056 = vmatprep.subr.mxu0 0.0
  %2057 = vmatpush1.msra.mxu0 0.0
  %2058 = vmatprep.subr.mxu0 0.0
  %2059 = vmatpush1.msra.mxu0 0.0
  %2060 = vmatprep.subr.mxu0 0.0
  %2061 = vmatpush1.msra.mxu0 0.0
  %2062 = vmatprep.subr.mxu0 0.0
  %2063 = vmatpush1.msra.mxu0 0.0
  %2064 = vmatprep.subr.mxu0 0.0
  %2065 = vmatpush1.msra.mxu0 0.0
  %2066 = vmatprep.subr.mxu0 0.0
  %2067 = vmatpush1.msra.mxu0 0.0
  %2068 = vmatprep.subr.mxu0 0.0
  %2069 = vmatpush1.msra.mxu0 0.0
  %2070 = vmatprep.subr.mxu0 0.0
  %2071 = vmatpush1.msra.mxu0 0.0
  %2072 = vmatprep.subr.mxu0 0.0
  %2073 = vmatpush1.msra.mxu0 0.0
  %2074 = vmatprep.subr.mxu0 0.0
  %2075 = vmatpush1.msra.mxu0 0.0
  %2076 = vmatprep.mubr.f32.mxu0 0.0
  %2077 = vmatmul.mubr.f32.gmra.mrb[0].mxu0 %v2010
  %v2078 = vpop.f32.mrb[0].mxu0
  %v2079 = vadd.f32 0.0, %v2078
  %v2080 = vpop.f32.mrb[0].mxu0
  %2081 = vdwg.mxu0
  %2083 = vrot.lane.b32.xlu0 %v2006, 32
  %v2084 = vpop.permute.xlu0 %2083
  %v2085 = vsel %vm734, %v2084, 0
  %2087 = vmatprep.subr.mxu0 0.0
  %2088 = vmatpush1.msra.mxu0 %v1202
  %2089 = vmatprep.subr.mxu0 0.0
  %2090 = vmatpush1.msra.mxu0 %v1203
  %2091 = vmatprep.subr.mxu0 0.0
  %2092 = vmatpush1.msra.mxu0 %v1204
  %2093 = vmatprep.subr.mxu0 0.0
  %2094 = vmatpush1.msra.mxu0 %v1205
  %2095 = vmatprep.subr.mxu0 0.0
  %2096 = vmatpush1.msra.mxu0 0.0
  %2097 = vmatprep.subr.mxu0 0.0
  %2098 = vmatpush1.msra.mxu0 0.0
  %2099 = vmatprep.subr.mxu0 0.0
  %2100 = vmatpush1.msra.mxu0 0.0
  %2101 = vmatprep.subr.mxu0 0.0
  %2102 = vmatpush1.msra.mxu0 0.0
  %2103 = vmatprep.subr.mxu0 0.0
  %2104 = vmatpush1.msra.mxu0 0.0
  %2105 = vmatprep.subr.mxu0 0.0
  %2106 = vmatpush1.msra.mxu0 0.0
  %2107 = vmatprep.subr.mxu0 0.0
  %2108 = vmatpush1.msra.mxu0 0.0
  %2109 = vmatprep.subr.mxu0 0.0
  %2110 = vmatpush1.msra.mxu0 0.0
  %2111 = vmatprep.subr.mxu0 0.0
  %2112 = vmatpush1.msra.mxu0 0.0
  %2113 = vmatprep.subr.mxu0 0.0
  %2114 = vmatpush1.msra.mxu0 0.0
  %2115 = vmatprep.subr.mxu0 0.0
  %2116 = vmatpush1.msra.mxu0 0.0
  %2117 = vmatprep.subr.mxu0 0.0
  %2118 = vmatpush1.msra.mxu0 0.0
  %2119 = vmatprep.subr.mxu0 0.0
  %2120 = vmatpush1.msra.mxu0 0.0
  %2121 = vmatprep.subr.mxu0 0.0
  %2122 = vmatpush1.msra.mxu0 0.0
  %2123 = vmatprep.subr.mxu0 0.0
  %2124 = vmatpush1.msra.mxu0 0.0
  %2125 = vmatprep.subr.mxu0 0.0
  %2126 = vmatpush1.msra.mxu0 0.0
  %2127 = vmatprep.subr.mxu0 0.0
  %2128 = vmatpush1.msra.mxu0 0.0
  %2129 = vmatprep.subr.mxu0 0.0
  %2130 = vmatpush1.msra.mxu0 0.0
  %2131 = vmatprep.subr.mxu0 0.0
  %2132 = vmatpush1.msra.mxu0 0.0
  %2133 = vmatprep.subr.mxu0 0.0
  %2134 = vmatpush1.msra.mxu0 0.0
  %2135 = vmatprep.subr.mxu0 0.0
  %2136 = vmatpush1.msra.mxu0 0.0
  %2137 = vmatprep.subr.mxu0 0.0
  %2138 = vmatpush1.msra.mxu0 0.0
  %2139 = vmatprep.subr.mxu0 0.0
  %2140 = vmatpush1.msra.mxu0 0.0
  %2141 = vmatprep.subr.mxu0 0.0
  %2142 = vmatpush1.msra.mxu0 0.0
  %2143 = vmatprep.subr.mxu0 0.0
  %2144 = vmatpush1.msra.mxu0 0.0
  %2145 = vmatprep.subr.mxu0 0.0
  %2146 = vmatpush1.msra.mxu0 0.0
  %2147 = vmatprep.subr.mxu0 0.0
  %2148 = vmatpush1.msra.mxu0 0.0
  %2149 = vmatprep.subr.mxu0 0.0
  %2150 = vmatpush1.msra.mxu0 0.0
  %2151 = vmatprep.mubr.f32.mxu0 0.0
  %2152 = vmatmul.mubr.f32.gmra.mrb[0].mxu0 %v2085
  %v2153 = vpop.f32.mrb[0].mxu0
  %v2154 = vadd.f32 0.0, %v2153
  %v2155 = vpop.f32.mrb[0].mxu0
  %2156 = vdwg.mxu0
  %v2157 = vadd.f32 %v1190, %v2079
  %v2158 = vadd.f32 %v1189, %v2154
  %v2159 = vtanh.pop %v2157
  %v2160 = vxor.u32 %v2157, 2147483648
  %v2161 = vmul.f32 %v2160, 1.442695
  %v2162 = vpow.pop %v2161
  %v2163 = vadd.f32 %v2162, 1.0
  %v2164 = vrcp.pop %v2163
  %v2165 = vmul.f32 1.0, %v2164
  %v2166 = vsel %vm717, %v2159, %v2165
  %v2167 = vtanh.pop %v2158
  %v2168 = vxor.u32 %v2158, 2147483648
  %v2169 = vmul.f32 %v2168, 1.442695
  %v2170 = vpow.pop %v2169
  %v2171 = vadd.f32 %v2170, 1.0
  %v2172 = vrcp.pop %v2171
  %v2173 = vmul.f32 1.0, %v2172
  %v2174 = vsel %vm717, %v2167, %v2173
  %v2175 = vmul.f32 %v2166, %v1983
  %2177 = vrot.lane.b32.xlu0 %v2166, 64
  %v2178 = vpop.permute.xlu0 %2177
  %v2180 = vmul.f32 %v2166, %v2178
  %2182 = vrot.lane.b32.xlu0 %v2180, 32
  %v2183 = vpop.permute.xlu0 %2182
  %v2185 = vadd.f32 %v2175, %v2183
  %v2186 = vmul.f32 %v2174, %v1994
  %2188 = vrot.lane.b32.xlu0 %v2174, 64
  %v2189 = vpop.permute.xlu0 %2188
  %v2191 = vmul.f32 %v2174, %v2189
  %2193 = vrot.lane.b32.xlu0 %v2191, 32
  %v2194 = vpop.permute.xlu0 %2193
  %v2196 = vadd.f32 %v2186, %v2194
  %v2197 = vtanh.pop %v2185
  %2199 = vrot.lane.b32.xlu0 %v2197, 64
  %v2200 = vpop.permute.xlu0 %2199
  %v2202 = vmul.f32 %v2166, %v2200
  %v2203 = vtanh.pop %v2196
  %2205 = vrot.lane.b32.xlu0 %v2203, 64
  %v2206 = vpop.permute.xlu0 %2205
  %v2208 = vmul.f32 %v2174, %v2206
  %2210 = vrot.lane.b32.xlu0 %v2202, 32
  %v2211 = vpop.permute.xlu0 %2210
  %v2212 = vsel %vm734, %v2211, 0
  %2214 = vmatprep.subr.mxu0 0.0
  %2215 = vmatpush1.msra.mxu0 %v1198
  %2216 = vmatprep.subr.mxu0 0.0
  %2217 = vmatpush1.msra.mxu0 %v1199
  %2218 = vmatprep.subr.mxu0 0.0
  %2219 = vmatpush1.msra.mxu0 %v1200
  %2220 = vmatprep.subr.mxu0 0.0
  %2221 = vmatpush1.msra.mxu0 %v1201
  %2222 = vmatprep.subr.mxu0 0.0
  %2223 = vmatpush1.msra.mxu0 0.0
  %2224 = vmatprep.subr.mxu0 0.0
  %2225 = vmatpush1.msra.mxu0 0.0
  %2226 = vmatprep.subr.mxu0 0.0
  %2227 = vmatpush1.msra.mxu0 0.0
  %2228 = vmatprep.subr.mxu0 0.0
  %2229 = vmatpush1.msra.mxu0 0.0
  %2230 = vmatprep.subr.mxu0 0.0
  %2231 = vmatpush1.msra.mxu0 0.0
  %2232 = vmatprep.subr.mxu0 0.0
  %2233 = vmatpush1.msra.mxu0 0.0
  %2234 = vmatprep.subr.mxu0 0.0
  %2235 = vmatpush1.msra.mxu0 0.0
  %2236 = vmatprep.subr.mxu0 0.0
  %2237 = vmatpush1.msra.mxu0 0.0
  %2238 = vmatprep.subr.mxu0 0.0
  %2239 = vmatpush1.msra.mxu0 0.0
  %2240 = vmatprep.subr.mxu0 0.0
  %2241 = vmatpush1.msra.mxu0 0.0
  %2242 = vmatprep.subr.mxu0 0.0
  %2243 = vmatpush1.msra.mxu0 0.0
  %2244 = vmatprep.subr.mxu0 0.0
  %2245 = vmatpush1.msra.mxu0 0.0
  %2246 = vmatprep.subr.mxu0 0.0
  %2247 = vmatpush1.msra.mxu0 0.0
  %2248 = vmatprep.subr.mxu0 0.0
  %2249 = vmatpush1.msra.mxu0 0.0
  %2250 = vmatprep.subr.mxu0 0.0
  %2251 = vmatpush1.msra.mxu0 0.0
  %2252 = vmatprep.subr.mxu0 0.0
  %2253 = vmatpush1.msra.mxu0 0.0
  %2254 = vmatprep.subr.mxu0 0.0
  %2255 = vmatpush1.msra.mxu0 0.0
  %2256 = vmatprep.subr.mxu0 0.0
  %2257 = vmatpush1.msra.mxu0 0.0
  %2258 = vmatprep.subr.mxu0 0.0
  %2259 = vmatpush1.msra.mxu0 0.0
  %2260 = vmatprep.subr.mxu0 0.0
  %2261 = vmatpush1.msra.mxu0 0.0
  %2262 = vmatprep.subr.mxu0 0.0
  %2263 = vmatpush1.msra.mxu0 0.0
  %2264 = vmatprep.subr.mxu0 0.0
  %2265 = vmatpush1.msra.mxu0 0.0
  %2266 = vmatprep.subr.mxu0 0.0
  %2267 = vmatpush1.msra.mxu0 0.0
  %2268 = vmatprep.subr.mxu0 0.0
  %2269 = vmatpush1.msra.mxu0 0.0
  %2270 = vmatprep.subr.mxu0 0.0
  %2271 = vmatpush1.msra.mxu0 0.0
  %2272 = vmatprep.subr.mxu0 0.0
  %2273 = vmatpush1.msra.mxu0 0.0
  %2274 = vmatprep.subr.mxu0 0.0
  %2275 = vmatpush1.msra.mxu0 0.0
  %2276 = vmatprep.subr.mxu0 0.0
  %2277 = vmatpush1.msra.mxu0 0.0
  %2278 = vmatprep.mubr.f32.mxu0 0.0
  %2279 = vmatmul.mubr.f32.gmra.mrb[0].mxu0 %v2212
  %v2280 = vpop.f32.mrb[0].mxu0
  %v2281 = vadd.f32 0.0, %v2280
  %v2282 = vpop.f32.mrb[0].mxu0
  %2283 = vdwg.mxu0
  %2285 = vrot.lane.b32.xlu0 %v2208, 32
  %v2286 = vpop.permute.xlu0 %2285
  %v2287 = vsel %vm734, %v2286, 0
  %2289 = vmatprep.subr.mxu0 0.0
  %2290 = vmatpush1.msra.mxu0 %v1202
  %2291 = vmatprep.subr.mxu0 0.0
  %2292 = vmatpush1.msra.mxu0 %v1203
  %2293 = vmatprep.subr.mxu0 0.0
  %2294 = vmatpush1.msra.mxu0 %v1204
  %2295 = vmatprep.subr.mxu0 0.0
  %2296 = vmatpush1.msra.mxu0 %v1205
  %2297 = vmatprep.subr.mxu0 0.0
  %2298 = vmatpush1.msra.mxu0 0.0
  %2299 = vmatprep.subr.mxu0 0.0
  %2300 = vmatpush1.msra.mxu0 0.0
  %2301 = vmatprep.subr.mxu0 0.0
  %2302 = vmatpush1.msra.mxu0 0.0
  %2303 = vmatprep.subr.mxu0 0.0
  %2304 = vmatpush1.msra.mxu0 0.0
  %2305 = vmatprep.subr.mxu0 0.0
  %2306 = vmatpush1.msra.mxu0 0.0
  %2307 = vmatprep.subr.mxu0 0.0
  %2308 = vmatpush1.msra.mxu0 0.0
  %2309 = vmatprep.subr.mxu0 0.0
  %2310 = vmatpush1.msra.mxu0 0.0
  %2311 = vmatprep.subr.mxu0 0.0
  %2312 = vmatpush1.msra.mxu0 0.0
  %2313 = vmatprep.subr.mxu0 0.0
  %2314 = vmatpush1.msra.mxu0 0.0
  %2315 = vmatprep.subr.mxu0 0.0
  %2316 = vmatpush1.msra.mxu0 0.0
  %2317 = vmatprep.subr.mxu0 0.0
  %2318 = vmatpush1.msra.mxu0 0.0
  %2319 = vmatprep.subr.mxu0 0.0
  %2320 = vmatpush1.msra.mxu0 0.0
  %2321 = vmatprep.subr.mxu0 0.0
  %2322 = vmatpush1.msra.mxu0 0.0
  %2323 = vmatprep.subr.mxu0 0.0
  %2324 = vmatpush1.msra.mxu0 0.0
  %2325 = vmatprep.subr.mxu0 0.0
  %2326 = vmatpush1.msra.mxu0 0.0
  %2327 = vmatprep.subr.mxu0 0.0
  %2328 = vmatpush1.msra.mxu0 0.0
  %2329 = vmatprep.subr.mxu0 0.0
  %2330 = vmatpush1.msra.mxu0 0.0
  %2331 = vmatprep.subr.mxu0 0.0
  %2332 = vmatpush1.msra.mxu0 0.0
  %2333 = vmatprep.subr.mxu0 0.0
  %2334 = vmatpush1.msra.mxu0 0.0
  %2335 = vmatprep.subr.mxu0 0.0
  %2336 = vmatpush1.msra.mxu0 0.0
  %2337 = vmatprep.subr.mxu0 0.0
  %2338 = vmatpush1.msra.mxu0 0.0
  %2339 = vmatprep.subr.mxu0 0.0
  %2340 = vmatpush1.msra.mxu0 0.0
  %2341 = vmatprep.subr.mxu0 0.0
  %2342 = vmatpush1.msra.mxu0 0.0
  %2343 = vmatprep.subr.mxu0 0.0
  %2344 = vmatpush1.msra.mxu0 0.0
  %2345 = vmatprep.subr.mxu0 0.0
  %2346 = vmatpush1.msra.mxu0 0.0
  %2347 = vmatprep.subr.mxu0 0.0
  %2348 = vmatpush1.msra.mxu0 0.0
  %2349 = vmatprep.subr.mxu0 0.0
  %2350 = vmatpush1.msra.mxu0 0.0
  %2351 = vmatprep.subr.mxu0 0.0
  %2352 = vmatpush1.msra.mxu0 0.0
  %2353 = vmatprep.mubr.f32.mxu0 0.0
  %2354 = vmatmul.mubr.f32.gmra.mrb[0].mxu0 %v2287
  %v2355 = vpop.f32.mrb[0].mxu0
  %v2356 = vadd.f32 0.0, %v2355
  %v2357 = vpop.f32.mrb[0].mxu0
  %2358 = vdwg.mxu0
  %v2359 = vadd.f32 %v1192, %v2281
  %v2360 = vadd.f32 %v1187, %v2356
  %v2361 = vtanh.pop %v2359
  %v2362 = vxor.u32 %v2359, 2147483648
  %v2363 = vmul.f32 %v2362, 1.442695
  %v2364 = vpow.pop %v2363
  %v2365 = vadd.f32 %v2364, 1.0
  %v2366 = vrcp.pop %v2365
  %v2367 = vmul.f32 1.0, %v2366
  %v2368 = vsel %vm717, %v2361, %v2367
  %v2369 = vtanh.pop %v2360
  %v2370 = vxor.u32 %v2360, 2147483648
  %v2371 = vmul.f32 %v2370, 1.442695
  %v2372 = vpow.pop %v2371
  %v2373 = vadd.f32 %v2372, 1.0
  %v2374 = vrcp.pop %v2373
  %v2375 = vmul.f32 1.0, %v2374
  %v2376 = vsel %vm717, %v2369, %v2375
  %v2377 = vmul.f32 %v2368, %v2185
  %2379 = vrot.lane.b32.xlu0 %v2368, 64
  %v2380 = vpop.permute.xlu0 %2379
  %v2382 = vmul.f32 %v2368, %v2380
  %2384 = vrot.lane.b32.xlu0 %v2382, 32
  %v2385 = vpop.permute.xlu0 %2384
  %v2387 = vadd.f32 %v2377, %v2385
  %v2388 = vmul.f32 %v2376, %v2196
  %2390 = vrot.lane.b32.xlu0 %v2376, 64
  %v2391 = vpop.permute.xlu0 %2390
  %v2393 = vmul.f32 %v2376, %v2391
  %2395 = vrot.lane.b32.xlu0 %v2393, 32
  %v2396 = vpop.permute.xlu0 %2395
  %v2398 = vadd.f32 %v2388, %v2396
  %v2399 = vtanh.pop %v2387
  %2401 = vrot.lane.b32.xlu0 %v2399, 64
  %v2402 = vpop.permute.xlu0 %2401
  %v2404 = vmul.f32 %v2368, %v2402
  %v2405 = vtanh.pop %v2398
  %2407 = vrot.lane.b32.xlu0 %v2405, 64
  %v2408 = vpop.permute.xlu0 %2407
  %v2410 = vmul.f32 %v2376, %v2408
  %2412 = vrot.lane.b32.xlu0 %v2404, 32
  %v2413 = vpop.permute.xlu0 %2412
  %v2414 = vsel %vm734, %v2413, 0
  %2416 = vmatprep.subr.mxu0 0.0
  %2417 = vmatpush1.msra.mxu0 %v1198
  %2418 = vmatprep.subr.mxu0 0.0
  %2419 = vmatpush1.msra.mxu0 %v1199
  %2420 = vmatprep.subr.mxu0 0.0
  %2421 = vmatpush1.msra.mxu0 %v1200
  %2422 = vmatprep.subr.mxu0 0.0
  %2423 = vmatpush1.msra.mxu0 %v1201
  %2424 = vmatprep.subr.mxu0 0.0
  %2425 = vmatpush1.msra.mxu0 0.0
  %2426 = vmatprep.subr.mxu0 0.0
  %2427 = vmatpush1.msra.mxu0 0.0
  %2428 = vmatprep.subr.mxu0 0.0
  %2429 = vmatpush1.msra.mxu0 0.0
  %2430 = vmatprep.subr.mxu0 0.0
  %2431 = vmatpush1.msra.mxu0 0.0
  %2432 = vmatprep.subr.mxu0 0.0
  %2433 = vmatpush1.msra.mxu0 0.0
  %2434 = vmatprep.subr.mxu0 0.0
  %2435 = vmatpush1.msra.mxu0 0.0
  %2436 = vmatprep.subr.mxu0 0.0
  %2437 = vmatpush1.msra.mxu0 0.0
  %2438 = vmatprep.subr.mxu0 0.0
  %2439 = vmatpush1.msra.mxu0 0.0
  %2440 = vmatprep.subr.mxu0 0.0
  %2441 = vmatpush1.msra.mxu0 0.0
  %2442 = vmatprep.subr.mxu0 0.0
  %2443 = vmatpush1.msra.mxu0 0.0
  %2444 = vmatprep.subr.mxu0 0.0
  %2445 = vmatpush1.msra.mxu0 0.0
  %2446 = vmatprep.subr.mxu0 0.0
  %2447 = vmatpush1.msra.mxu0 0.0
  %2448 = vmatprep.subr.mxu0 0.0
  %2449 = vmatpush1.msra.mxu0 0.0
  %2450 = vmatprep.subr.mxu0 0.0
  %2451 = vmatpush1.msra.mxu0 0.0
  %2452 = vmatprep.subr.mxu0 0.0
  %2453 = vmatpush1.msra.mxu0 0.0
  %2454 = vmatprep.subr.mxu0 0.0
  %2455 = vmatpush1.msra.mxu0 0.0
  %2456 = vmatprep.subr.mxu0 0.0
  %2457 = vmatpush1.msra.mxu0 0.0
  %2458 = vmatprep.subr.mxu0 0.0
  %2459 = vmatpush1.msra.mxu0 0.0
  %2460 = vmatprep.subr.mxu0 0.0
  %2461 = vmatpush1.msra.mxu0 0.0
  %2462 = vmatprep.subr.mxu0 0.0
  %2463 = vmatpush1.msra.mxu0 0.0
  %2464 = vmatprep.subr.mxu0 0.0
  %2465 = vmatpush1.msra.mxu0 0.0
  %2466 = vmatprep.subr.mxu0 0.0
  %2467 = vmatpush1.msra.mxu0 0.0
  %2468 = vmatprep.subr.mxu0 0.0
  %2469 = vmatpush1.msra.mxu0 0.0
  %2470 = vmatprep.subr.mxu0 0.0
  %2471 = vmatpush1.msra.mxu0 0.0
  %2472 = vmatprep.subr.mxu0 0.0
  %2473 = vmatpush1.msra.mxu0 0.0
  %2474 = vmatprep.subr.mxu0 0.0
  %2475 = vmatpush1.msra.mxu0 0.0
  %2476 = vmatprep.subr.mxu0 0.0
  %2477 = vmatpush1.msra.mxu0 0.0
  %2478 = vmatprep.subr.mxu0 0.0
  %2479 = vmatpush1.msra.mxu0 0.0
  %2480 = vmatprep.mubr.f32.mxu0 0.0
  %2481 = vmatmul.mubr.f32.gmra.mrb[0].mxu0 %v2414
  %v2482 = vpop.f32.mrb[0].mxu0
  %v2483 = vadd.f32 0.0, %v2482
  %v2484 = vpop.f32.mrb[0].mxu0
  %2485 = vdwg.mxu0
  %2487 = vrot.lane.b32.xlu0 %v2410, 32
  %v2488 = vpop.permute.xlu0 %2487
  %v2489 = vsel %vm734, %v2488, 0
  %2491 = vmatprep.subr.mxu0 0.0
  %2492 = vmatpush1.msra.mxu0 %v1202
  %2493 = vmatprep.subr.mxu0 0.0
  %2494 = vmatpush1.msra.mxu0 %v1203
  %2495 = vmatprep.subr.mxu0 0.0
  %2496 = vmatpush1.msra.mxu0 %v1204
  %2497 = vmatprep.subr.mxu0 0.0
  %2498 = vmatpush1.msra.mxu0 %v1205
  %2499 = vmatprep.subr.mxu0 0.0
  %2500 = vmatpush1.msra.mxu0 0.0
  %2501 = vmatprep.subr.mxu0 0.0
  %2502 = vmatpush1.msra.mxu0 0.0
  %2503 = vmatprep.subr.mxu0 0.0
  %2504 = vmatpush1.msra.mxu0 0.0
  %2505 = vmatprep.subr.mxu0 0.0
  %2506 = vmatpush1.msra.mxu0 0.0
  %2507 = vmatprep.subr.mxu0 0.0
  %2508 = vmatpush1.msra.mxu0 0.0
  %2509 = vmatprep.subr.mxu0 0.0
  %2510 = vmatpush1.msra.mxu0 0.0
  %2511 = vmatprep.subr.mxu0 0.0
  %2512 = vmatpush1.msra.mxu0 0.0
  %2513 = vmatprep.subr.mxu0 0.0
  %2514 = vmatpush1.msra.mxu0 0.0
  %2515 = vmatprep.subr.mxu0 0.0
  %2516 = vmatpush1.msra.mxu0 0.0
  %2517 = vmatprep.subr.mxu0 0.0
  %2518 = vmatpush1.msra.mxu0 0.0
  %2519 = vmatprep.subr.mxu0 0.0
  %2520 = vmatpush1.msra.mxu0 0.0
  %2521 = vmatprep.subr.mxu0 0.0
  %2522 = vmatpush1.msra.mxu0 0.0
  %2523 = vmatprep.subr.mxu0 0.0
  %2524 = vmatpush1.msra.mxu0 0.0
  %2525 = vmatprep.subr.mxu0 0.0
  %2526 = vmatpush1.msra.mxu0 0.0
  %2527 = vmatprep.subr.mxu0 0.0
  %2528 = vmatpush1.msra.mxu0 0.0
  %2529 = vmatprep.subr.mxu0 0.0
  %2530 = vmatpush1.msra.mxu0 0.0
  %2531 = vmatprep.subr.mxu0 0.0
  %2532 = vmatpush1.msra.mxu0 0.0
  %2533 = vmatprep.subr.mxu0 0.0
  %2534 = vmatpush1.msra.mxu0 0.0
  %2535 = vmatprep.subr.mxu0 0.0
  %2536 = vmatpush1.msra.mxu0 0.0
  %2537 = vmatprep.subr.mxu0 0.0
  %2538 = vmatpush1.msra.mxu0 0.0
  %2539 = vmatprep.subr.mxu0 0.0
  %2540 = vmatpush1.msra.mxu0 0.0
  %2541 = vmatprep.subr.mxu0 0.0
  %2542 = vmatpush1.msra.mxu0 0.0
  %2543 = vmatprep.subr.mxu0 0.0
  %2544 = vmatpush1.msra.mxu0 0.0
  %2545 = vmatprep.subr.mxu0 0.0
  %2546 = vmatpush1.msra.mxu0 0.0
  %2547 = vmatprep.subr.mxu0 0.0
  %2548 = vmatpush1.msra.mxu0 0.0
  %2549 = vmatprep.subr.mxu0 0.0
  %2550 = vmatpush1.msra.mxu0 0.0
  %2551 = vmatprep.subr.mxu0 0.0
  %2552 = vmatpush1.msra.mxu0 0.0
  %2553 = vmatprep.subr.mxu0 0.0
  %2554 = vmatpush1.msra.mxu0 0.0
  %2555 = vmatprep.mubr.f32.mxu0 0.0
  %2556 = vmatmul.mubr.f32.gmra.mrb[0].mxu0 %v2489
  %v2557 = vpop.f32.mrb[0].mxu0
  %v2558 = vadd.f32 0.0, %v2557
  %v2559 = vpop.f32.mrb[0].mxu0
  %2560 = vdwg.mxu0
  %v2561 = vadd.f32 %v1194, %v2483
  %v2562 = vadd.f32 %v1185, %v2558
  %v2563 = vtanh.pop %v2561
  %v2564 = vxor.u32 %v2561, 2147483648
  %v2565 = vmul.f32 %v2564, 1.442695
  %v2566 = vpow.pop %v2565
  %v2567 = vadd.f32 %v2566, 1.0
  %v2568 = vrcp.pop %v2567
  %v2569 = vmul.f32 1.0, %v2568
  %v2570 = vsel %vm717, %v2563, %v2569
  %v2571 = vtanh.pop %v2562
  %v2572 = vxor.u32 %v2562, 2147483648
  %v2573 = vmul.f32 %v2572, 1.442695
  %v2574 = vpow.pop %v2573
  %v2575 = vadd.f32 %v2574, 1.0
  %v2576 = vrcp.pop %v2575
  %v2577 = vmul.f32 1.0, %v2576
  %v2578 = vsel %vm717, %v2571, %v2577
  %v2579 = vmul.f32 %v2570, %v2387
  %2581 = vrot.lane.b32.xlu0 %v2570, 64
  %v2582 = vpop.permute.xlu0 %2581
  %v2584 = vmul.f32 %v2570, %v2582
  %2586 = vrot.lane.b32.xlu0 %v2584, 32
  %v2587 = vpop.permute.xlu0 %2586
  %v2589 = vadd.f32 %v2579, %v2587
  %v2590 = vmul.f32 %v2578, %v2398
  %2592 = vrot.lane.b32.xlu0 %v2578, 64
  %v2593 = vpop.permute.xlu0 %2592
  %v2595 = vmul.f32 %v2578, %v2593
  %2597 = vrot.lane.b32.xlu0 %v2595, 32
  %v2598 = vpop.permute.xlu0 %2597
  %v2600 = vadd.f32 %v2590, %v2598
  %v2601 = vtanh.pop %v2589
  %2603 = vrot.lane.b32.xlu0 %v2601, 64
  %v2604 = vpop.permute.xlu0 %2603
  %v2606 = vmul.f32 %v2570, %v2604
  %v2607 = vtanh.pop %v2600
  %2609 = vrot.lane.b32.xlu0 %v2607, 64
  %v2610 = vpop.permute.xlu0 %2609
  %v2612 = vmul.f32 %v2578, %v2610
  %2614 = vrot.lane.b32.xlu0 %v2606, 32
  %v2615 = vpop.permute.xlu0 %2614
  %v2616 = vsel %vm734, %v2615, 0
  %2618 = vmatprep.subr.mxu0 0.0
  %2619 = vmatpush1.msra.mxu0 %v1198
  %2620 = vmatprep.subr.mxu0 0.0
  %2621 = vmatpush1.msra.mxu0 %v1199
  %2622 = vmatprep.subr.mxu0 0.0
  %2623 = vmatpush1.msra.mxu0 %v1200
  %2624 = vmatprep.subr.mxu0 0.0
  %2625 = vmatpush1.msra.mxu0 %v1201
  %2626 = vmatprep.subr.mxu0 0.0
  %2627 = vmatpush1.msra.mxu0 0.0
  %2628 = vmatprep.subr.mxu0 0.0
  %2629 = vmatpush1.msra.mxu0 0.0
  %2630 = vmatprep.subr.mxu0 0.0
  %2631 = vmatpush1.msra.mxu0 0.0
  %2632 = vmatprep.subr.mxu0 0.0
  %2633 = vmatpush1.msra.mxu0 0.0
  %2634 = vmatprep.subr.mxu0 0.0
  %2635 = vmatpush1.msra.mxu0 0.0
  %2636 = vmatprep.subr.mxu0 0.0
  %2637 = vmatpush1.msra.mxu0 0.0
  %2638 = vmatprep.subr.mxu0 0.0
  %2639 = vmatpush1.msra.mxu0 0.0
  %2640 = vmatprep.subr.mxu0 0.0
  %2641 = vmatpush1.msra.mxu0 0.0
  %2642 = vmatprep.subr.mxu0 0.0
  %2643 = vmatpush1.msra.mxu0 0.0
  %2644 = vmatprep.subr.mxu0 0.0
  %2645 = vmatpush1.msra.mxu0 0.0
  %2646 = vmatprep.subr.mxu0 0.0
  %2647 = vmatpush1.msra.mxu0 0.0
  %2648 = vmatprep.subr.mxu0 0.0
  %2649 = vmatpush1.msra.mxu0 0.0
  %2650 = vmatprep.subr.mxu0 0.0
  %2651 = vmatpush1.msra.mxu0 0.0
  %2652 = vmatprep.subr.mxu0 0.0
  %2653 = vmatpush1.msra.mxu0 0.0
  %2654 = vmatprep.subr.mxu0 0.0
  %2655 = vmatpush1.msra.mxu0 0.0
  %2656 = vmatprep.subr.mxu0 0.0
  %2657 = vmatpush1.msra.mxu0 0.0
  %2658 = vmatprep.subr.mxu0 0.0
  %2659 = vmatpush1.msra.mxu0 0.0
  %2660 = vmatprep.subr.mxu0 0.0
  %2661 = vmatpush1.msra.mxu0 0.0
  %2662 = vmatprep.subr.mxu0 0.0
  %2663 = vmatpush1.msra.mxu0 0.0
  %2664 = vmatprep.subr.mxu0 0.0
  %2665 = vmatpush1.msra.mxu0 0.0
  %2666 = vmatprep.subr.mxu0 0.0
  %2667 = vmatpush1.msra.mxu0 0.0
  %2668 = vmatprep.subr.mxu0 0.0
  %2669 = vmatpush1.msra.mxu0 0.0
  %2670 = vmatprep.subr.mxu0 0.0
  %2671 = vmatpush1.msra.mxu0 0.0
  %2672 = vmatprep.subr.mxu0 0.0
  %2673 = vmatpush1.msra.mxu0 0.0
  %2674 = vmatprep.subr.mxu0 0.0
  %2675 = vmatpush1.msra.mxu0 0.0
  %2676 = vmatprep.subr.mxu0 0.0
  %2677 = vmatpush1.msra.mxu0 0.0
  %2678 = vmatprep.subr.mxu0 0.0
  %2679 = vmatpush1.msra.mxu0 0.0
  %2680 = vmatprep.subr.mxu0 0.0
  %2681 = vmatpush1.msra.mxu0 0.0
  %2682 = vmatprep.mubr.f32.mxu0 0.0
  %2683 = vmatmul.mubr.f32.gmra.mrb[0].mxu0 %v2616
  %v2684 = vpop.f32.mrb[0].mxu0
  %v2685 = vadd.f32 0.0, %v2684
  %v2686 = vpop.f32.mrb[0].mxu0
  %2687 = vdwg.mxu0
  %2689 = vrot.lane.b32.xlu0 %v2612, 32
  %v2690 = vpop.permute.xlu0 %2689
  %v2691 = vsel %vm734, %v2690, 0
  %2693 = vmatprep.subr.mxu0 0.0
  %2694 = vmatpush1.msra.mxu0 %v1202
  %2695 = vmatprep.subr.mxu0 0.0
  %2696 = vmatpush1.msra.mxu0 %v1203
  %2697 = vmatprep.subr.mxu0 0.0
  %2698 = vmatpush1.msra.mxu0 %v1204
  %2699 = vmatprep.subr.mxu0 0.0
  %2700 = vmatpush1.msra.mxu0 %v1205
  %2701 = vmatprep.subr.mxu0 0.0
  %2702 = vmatpush1.msra.mxu0 0.0
  %2703 = vmatprep.subr.mxu0 0.0
  %2704 = vmatpush1.msra.mxu0 0.0
  %2705 = vmatprep.subr.mxu0 0.0
  %2706 = vmatpush1.msra.mxu0 0.0
  %2707 = vmatprep.subr.mxu0 0.0
  %2708 = vmatpush1.msra.mxu0 0.0
  %2709 = vmatprep.subr.mxu0 0.0
  %2710 = vmatpush1.msra.mxu0 0.0
  %2711 = vmatprep.subr.mxu0 0.0
  %2712 = vmatpush1.msra.mxu0 0.0
  %2713 = vmatprep.subr.mxu0 0.0
  %2714 = vmatpush1.msra.mxu0 0.0
  %2715 = vmatprep.subr.mxu0 0.0
  %2716 = vmatpush1.msra.mxu0 0.0
  %2717 = vmatprep.subr.mxu0 0.0
  %2718 = vmatpush1.msra.mxu0 0.0
  %2719 = vmatprep.subr.mxu0 0.0
  %2720 = vmatpush1.msra.mxu0 0.0
  %2721 = vmatprep.subr.mxu0 0.0
  %2722 = vmatpush1.msra.mxu0 0.0
  %2723 = vmatprep.subr.mxu0 0.0
  %2724 = vmatpush1.msra.mxu0 0.0
  %2725 = vmatprep.subr.mxu0 0.0
  %2726 = vmatpush1.msra.mxu0 0.0
  %2727 = vmatprep.subr.mxu0 0.0
  %2728 = vmatpush1.msra.mxu0 0.0
  %2729 = vmatprep.subr.mxu0 0.0
  %2730 = vmatpush1.msra.mxu0 0.0
  %2731 = vmatprep.subr.mxu0 0.0
  %2732 = vmatpush1.msra.mxu0 0.0
  %2733 = vmatprep.subr.mxu0 0.0
  %2734 = vmatpush1.msra.mxu0 0.0
  %2735 = vmatprep.subr.mxu0 0.0
  %2736 = vmatpush1.msra.mxu0 0.0
  %2737 = vmatprep.subr.mxu0 0.0
  %2738 = vmatpush1.msra.mxu0 0.0
  %2739 = vmatprep.subr.mxu0 0.0
  %2740 = vmatpush1.msra.mxu0 0.0
  %2741 = vmatprep.subr.mxu0 0.0
  %2742 = vmatpush1.msra.mxu0 0.0
  %2743 = vmatprep.subr.mxu0 0.0
  %2744 = vmatpush1.msra.mxu0 0.0
  %2745 = vmatprep.subr.mxu0 0.0
  %2746 = vmatpush1.msra.mxu0 0.0
  %2747 = vmatprep.subr.mxu0 0.0
  %2748 = vmatpush1.msra.mxu0 0.0
  %2749 = vmatprep.subr.mxu0 0.0
  %2750 = vmatpush1.msra.mxu0 0.0
  %2751 = vmatprep.subr.mxu0 0.0
  %2752 = vmatpush1.msra.mxu0 0.0
  %2753 = vmatprep.subr.mxu0 0.0
  %2754 = vmatpush1.msra.mxu0 0.0
  %2755 = vmatprep.subr.mxu0 0.0
  %2756 = vmatpush1.msra.mxu0 0.0
  %2757 = vmatprep.mubr.f32.mxu0 0.0
  %2758 = vmatmul.mubr.f32.gmra.mrb[0].mxu0 %v2691
  %v2759 = vpop.f32.mrb[0].mxu0
  %v2760 = vadd.f32 0.0, %v2759
  %v2761 = vpop.f32.mrb[0].mxu0
  %2762 = vdwg.mxu0
  %v2763 = vadd.f32 %v1196, %v2685
  %v2764 = vadd.f32 %v1183, %v2760
  %v2765 = vtanh.pop %v2763
  %v2766 = vxor.u32 %v2763, 2147483648
  %v2767 = vmul.f32 %v2766, 1.442695
  %v2768 = vpow.pop %v2767
  %v2769 = vadd.f32 %v2768, 1.0
  %v2770 = vrcp.pop %v2769
  %v2771 = vmul.f32 1.0, %v2770
  %v2772 = vsel %vm717, %v2765, %v2771
  %v2773 = vtanh.pop %v2764
  %v2774 = vxor.u32 %v2764, 2147483648
  %v2775 = vmul.f32 %v2774, 1.442695
  %v2776 = vpow.pop %v2775
  %v2777 = vadd.f32 %v2776, 1.0
  %v2778 = vrcp.pop %v2777
  %v2779 = vmul.f32 1.0, %v2778
  %v2780 = vsel %vm717, %v2773, %v2779
  %v2781 = vmul.f32 %v2772, %v2589
  %2783 = vrot.lane.b32.xlu0 %v2772, 64
  %v2784 = vpop.permute.xlu0 %2783
  %v2786 = vmul.f32 %v2772, %v2784
  %2788 = vrot.lane.b32.xlu0 %v2786, 32
  %v2789 = vpop.permute.xlu0 %2788
  %v2791 = vadd.f32 %v2781, %v2789
  %v2792 = vmul.f32 %v2780, %v2600
  %2794 = vrot.lane.b32.xlu0 %v2780, 64
  %v2795 = vpop.permute.xlu0 %2794
  %v2797 = vmul.f32 %v2780, %v2795
  %2799 = vrot.lane.b32.xlu0 %v2797, 32
  %v2800 = vpop.permute.xlu0 %2799
  %v2802 = vadd.f32 %v2792, %v2800
  %v2803 = vtanh.pop %v2791
  %2805 = vrot.lane.b32.xlu0 %v2803, 64
  %v2806 = vpop.permute.xlu0 %2805
  %v2808 = vmul.f32 %v2772, %v2806
  %v2809 = vtanh.pop %v2802
  %2811 = vrot.lane.b32.xlu0 %v2809, 64
  %v2812 = vpop.permute.xlu0 %2811
  %v2814 = vmul.f32 %v2780, %v2812
  %v2815 = vld [vmem:[%s11] sm:$0xff]
  %v2816 = vld [vmem:[%s11 + $0x8] sm:$0xff]
  %v2817 = vld [vmem:[%s11 + $0x10] sm:$0xff]
  %v2818 = vld [vmem:[%s11 + $0x18] sm:$0xff]
  %v2819 = vld [vmem:[%s11 + $0x20] sm:$0xff]
  %v2820 = vld [vmem:[%s11 + $0x28] sm:$0xff]
  %v2821 = vld [vmem:[%s11 + $0x30] sm:$0xff]
  %v2822 = vld [vmem:[%s11 + $0x38] sm:$0xff]
  %v2823 = vld [vmem:[%s11 + $0x40] sm:$0xff]
  %v2824 = vld [vmem:[%s11 + $0x48] sm:$0xff]
  %v2825 = vld [vmem:[%s11 + $0x50] sm:$0xff]
  %v2826 = vld [vmem:[%s11 + $0x58] sm:$0xff]
  %v2827 = vld [vmem:[%s11 + $0x60] sm:$0xff]
  %v2828 = vld [vmem:[%s11 + $0x68] sm:$0xff]
  %v2829 = vld [vmem:[%s11 + $0x70] sm:$0xff]
  %v2830 = vld [vmem:[%s11 + $0x78] sm:$0xff]
  %2832 = vrot.lane.b32.xlu0 %v2814, 32
  %v2833 = vpop.permute.xlu0 %2832
  %v2834 = vsel %vm734, %v2833, 0
  %2836 = vmatprep.subr.mxu0 %v2824
  %2837 = vmatpush1.msra.mxu0 %v2823
  %2838 = vmatprep.subr.mxu0 %v2826
  %2839 = vmatpush1.msra.mxu0 %v2825
  %2840 = vmatprep.subr.mxu0 %v2828
  %2841 = vmatpush1.msra.mxu0 %v2827
  %2842 = vmatprep.subr.mxu0 %v2830
  %2843 = vmatpush1.msra.mxu0 %v2829
  %2844 = vmatprep.subr.mxu0 0.0
  %2845 = vmatpush1.msra.mxu0 0.0
  %2846 = vmatprep.subr.mxu0 0.0
  %2847 = vmatpush1.msra.mxu0 0.0
  %2848 = vmatprep.subr.mxu0 0.0
  %2849 = vmatpush1.msra.mxu0 0.0
  %2850 = vmatprep.subr.mxu0 0.0
  %2851 = vmatpush1.msra.mxu0 0.0
  %2852 = vmatprep.subr.mxu0 0.0
  %2853 = vmatpush1.msra.mxu0 0.0
  %2854 = vmatprep.subr.mxu0 0.0
  %2855 = vmatpush1.msra.mxu0 0.0
  %2856 = vmatprep.subr.mxu0 0.0
  %2857 = vmatpush1.msra.mxu0 0.0
  %2858 = vmatprep.subr.mxu0 0.0
  %2859 = vmatpush1.msra.mxu0 0.0
  %2860 = vmatprep.subr.mxu0 0.0
  %2861 = vmatpush1.msra.mxu0 0.0
  %2862 = vmatprep.subr.mxu0 0.0
  %2863 = vmatpush1.msra.mxu0 0.0
  %2864 = vmatprep.subr.mxu0 0.0
  %2865 = vmatpush1.msra.mxu0 0.0
  %2866 = vmatprep.subr.mxu0 0.0
  %2867 = vmatpush1.msra.mxu0 0.0
  %2868 = vmatprep.subr.mxu0 0.0
  %2869 = vmatpush1.msra.mxu0 0.0
  %2870 = vmatprep.subr.mxu0 0.0
  %2871 = vmatpush1.msra.mxu0 0.0
  %2872 = vmatprep.subr.mxu0 0.0
  %2873 = vmatpush1.msra.mxu0 0.0
  %2874 = vmatprep.subr.mxu0 0.0
  %2875 = vmatpush1.msra.mxu0 0.0
  %2876 = vmatprep.subr.mxu0 0.0
  %2877 = vmatpush1.msra.mxu0 0.0
  %2878 = vmatprep.subr.mxu0 0.0
  %2879 = vmatpush1.msra.mxu0 0.0
  %2880 = vmatprep.subr.mxu0 0.0
  %2881 = vmatpush1.msra.mxu0 0.0
  %2882 = vmatprep.subr.mxu0 0.0
  %2883 = vmatpush1.msra.mxu0 0.0
  %2884 = vmatprep.subr.mxu0 0.0
  %2885 = vmatpush1.msra.mxu0 0.0
  %2886 = vmatprep.subr.mxu0 0.0
  %2887 = vmatpush1.msra.mxu0 0.0
  %2888 = vmatprep.subr.mxu0 0.0
  %2889 = vmatpush1.msra.mxu0 0.0
  %2890 = vmatprep.subr.mxu0 0.0
  %2891 = vmatpush1.msra.mxu0 0.0
  %2892 = vmatprep.subr.mxu0 0.0
  %2893 = vmatpush1.msra.mxu0 0.0
  %2894 = vmatprep.subr.mxu0 0.0
  %2895 = vmatpush1.msra.mxu0 0.0
  %2896 = vmatprep.subr.mxu0 0.0
  %2897 = vmatpush1.msra.mxu0 0.0
  %2898 = vmatprep.subr.mxu0 0.0
  %2899 = vmatpush1.msra.mxu0 0.0
  %2900 = vmatprep.mubr.f32.mxu0 0.0
  %2901 = vmatmul.mubr.f32.gmra.mrb[0].mxu0 %v2834
  %v2902 = vpop.f32.mrb[0].mxu0
  %v2903 = vadd.f32 0.0, %v2902
  %v2904 = vpop.f32.mrb[0].mxu0
  %v2905 = vadd.f32 0.0, %v2904
  %2906 = vmatprep.mubr.f32.mxu0 0.0
  %2907 = vmatmul.mubr.f32.gmra.mrb[0].mxu0 %v2691
  %v2908 = vpop.f32.mrb[0].mxu0
  %v2909 = vadd.f32 0.0, %v2908
  %v2910 = vpop.f32.mrb[0].mxu0
  %v2911 = vadd.f32 0.0, %v2910
  %2912 = vmatprep.mubr.f32.mxu0 0.0
  %2913 = vmatmul.mubr.f32.gmra.mrb[0].mxu0 %v2489
  %v2914 = vpop.f32.mrb[0].mxu0
  %v2915 = vadd.f32 0.0, %v2914
  %v2916 = vpop.f32.mrb[0].mxu0
  %v2917 = vadd.f32 0.0, %v2916
  %2918 = vmatprep.mubr.f32.mxu0 0.0
  %2919 = vmatmul.mubr.f32.gmra.mrb[0].mxu0 %v2287
  %v2920 = vpop.f32.mrb[0].mxu0
  %v2921 = vadd.f32 0.0, %v2920
  %v2922 = vpop.f32.mrb[0].mxu0
  %v2923 = vadd.f32 0.0, %v2922
  %2924 = vmatprep.mubr.f32.mxu0 0.0
  %2925 = vmatmul.mubr.f32.gmra.mrb[0].mxu0 %v2085
  %v2926 = vpop.f32.mrb[0].mxu0
  %v2927 = vadd.f32 0.0, %v2926
  %v2928 = vpop.f32.mrb[0].mxu0
  %v2929 = vadd.f32 0.0, %v2928
  %2930 = vmatprep.mubr.f32.mxu0 0.0
  %2931 = vmatmul.mubr.f32.gmra.mrb[0].mxu0 %v1883
  %v2932 = vpop.f32.mrb[0].mxu0
  %v2933 = vadd.f32 0.0, %v2932
  %v2934 = vpop.f32.mrb[0].mxu0
  %v2935 = vadd.f32 0.0, %v2934
  %2936 = vmatprep.mubr.f32.mxu0 0.0
  %2937 = vmatmul.mubr.f32.gmra.mrb[0].mxu0 %v1681
  %v2938 = vpop.f32.mrb[0].mxu0
  %v2939 = vadd.f32 0.0, %v2938
  %v2940 = vpop.f32.mrb[0].mxu0
  %v2941 = vadd.f32 0.0, %v2940
  %2942 = vmatprep.mubr.f32.mxu0 0.0
  %2943 = vmatmul.mubr.f32.gmra.mrb[0].mxu0 %v1479
  %v2944 = vpop.f32.mrb[0].mxu0
  %v2945 = vadd.f32 0.0, %v2944
  %v2946 = vpop.f32.mrb[0].mxu0
  %v2947 = vadd.f32 0.0, %v2946
  %2948 = vdwg.mxu0
  %2950 = vrot.lane.b32.xlu0 %v2808, 32
  %v2951 = vpop.permute.xlu0 %2950
  %v2952 = vsel %vm734, %v2951, 0
  %2954 = vmatprep.subr.mxu0 %v2816
  %2955 = vmatpush1.msra.mxu0 %v2815
  %2956 = vmatprep.subr.mxu0 %v2818
  %2957 = vmatpush1.msra.mxu0 %v2817
  %2958 = vmatprep.subr.mxu0 %v2820
  %2959 = vmatpush1.msra.mxu0 %v2819
  %2960 = vmatprep.subr.mxu0 %v2822
  %2961 = vmatpush1.msra.mxu0 %v2821
  %2962 = vmatprep.subr.mxu0 0.0
  %2963 = vmatpush1.msra.mxu0 0.0
  %2964 = vmatprep.subr.mxu0 0.0
  %2965 = vmatpush1.msra.mxu0 0.0
  %2966 = vmatprep.subr.mxu0 0.0
  %2967 = vmatpush1.msra.mxu0 0.0
  %2968 = vmatprep.subr.mxu0 0.0
  %2969 = vmatpush1.msra.mxu0 0.0
  %2970 = vmatprep.subr.mxu0 0.0
  %2971 = vmatpush1.msra.mxu0 0.0
  %2972 = vmatprep.subr.mxu0 0.0
  %2973 = vmatpush1.msra.mxu0 0.0
  %2974 = vmatprep.subr.mxu0 0.0
  %2975 = vmatpush1.msra.mxu0 0.0
  %2976 = vmatprep.subr.mxu0 0.0
  %2977 = vmatpush1.msra.mxu0 0.0
  %2978 = vmatprep.subr.mxu0 0.0
  %2979 = vmatpush1.msra.mxu0 0.0
  %2980 = vmatprep.subr.mxu0 0.0
  %2981 = vmatpush1.msra.mxu0 0.0
  %2982 = vmatprep.subr.mxu0 0.0
  %2983 = vmatpush1.msra.mxu0 0.0
  %2984 = vmatprep.subr.mxu0 0.0
  %2985 = vmatpush1.msra.mxu0 0.0
  %2986 = vmatprep.subr.mxu0 0.0
  %2987 = vmatpush1.msra.mxu0 0.0
  %2988 = vmatprep.subr.mxu0 0.0
  %2989 = vmatpush1.msra.mxu0 0.0
  %2990 = vmatprep.subr.mxu0 0.0
  %2991 = vmatpush1.msra.mxu0 0.0
  %2992 = vmatprep.subr.mxu0 0.0
  %2993 = vmatpush1.msra.mxu0 0.0
  %2994 = vmatprep.subr.mxu0 0.0
  %2995 = vmatpush1.msra.mxu0 0.0
  %2996 = vmatprep.subr.mxu0 0.0
  %2997 = vmatpush1.msra.mxu0 0.0
  %2998 = vmatprep.subr.mxu0 0.0
  %2999 = vmatpush1.msra.mxu0 0.0
  %3000 = vmatprep.subr.mxu0 0.0
  %3001 = vmatpush1.msra.mxu0 0.0
  %3002 = vmatprep.subr.mxu0 0.0
  %3003 = vmatpush1.msra.mxu0 0.0
  %3004 = vmatprep.subr.mxu0 0.0
  %3005 = vmatpush1.msra.mxu0 0.0
  %3006 = vmatprep.subr.mxu0 0.0
  %3007 = vmatpush1.msra.mxu0 0.0
  %3008 = vmatprep.subr.mxu0 0.0
  %3009 = vmatpush1.msra.mxu0 0.0
  %3010 = vmatprep.subr.mxu0 0.0
  %3011 = vmatpush1.msra.mxu0 0.0
  %3012 = vmatprep.subr.mxu0 0.0
  %3013 = vmatpush1.msra.mxu0 0.0
  %3014 = vmatprep.subr.mxu0 0.0
  %3015 = vmatpush1.msra.mxu0 0.0
  %3016 = vmatprep.subr.mxu0 0.0
  %3017 = vmatpush1.msra.mxu0 0.0
  %3018 = vmatprep.mubr.f32.mxu0 0.0
  %3019 = vmatmul.mubr.f32.gmra.mrb[0].mxu0 %v1404
  %v3020 = vpop.f32.mrb[0].mxu0
  %v3021 = vadd.f32 %v2903, %v3020
  %v3022 = vpop.f32.mrb[0].mxu0
  %v3023 = vadd.f32 %v2905, %v3022
  %3024 = vmatprep.mubr.f32.mxu0 0.0
  %3025 = vmatmul.mubr.f32.gmra.mrb[0].mxu0 %v1606
  %v3026 = vpop.f32.mrb[0].mxu0
  %v3027 = vadd.f32 %v2909, %v3026
  %v3028 = vpop.f32.mrb[0].mxu0
  %v3029 = vadd.f32 %v2911, %v3028
  %3030 = vmatprep.mubr.f32.mxu0 0.0
  %3031 = vmatmul.mubr.f32.gmra.mrb[0].mxu0 %v1808
  %v3032 = vpop.f32.mrb[0].mxu0
  %v3033 = vadd.f32 %v2915, %v3032
  %v3034 = vpop.f32.mrb[0].mxu0
  %v3035 = vadd.f32 %v2917, %v3034
  %3036 = vmatprep.mubr.f32.mxu0 0.0
  %3037 = vmatmul.mubr.f32.gmra.mrb[0].mxu0 %v2010
  %v3038 = vpop.f32.mrb[0].mxu0
  %v3039 = vadd.f32 %v2921, %v3038
  %v3040 = vpop.f32.mrb[0].mxu0
  %v3041 = vadd.f32 %v2923, %v3040
  %3042 = vmatprep.mubr.f32.mxu0 0.0
  %3043 = vmatmul.mubr.f32.gmra.mrb[0].mxu0 %v2212
  %v3044 = vpop.f32.mrb[0].mxu0
  %v3045 = vadd.f32 %v2927, %v3044
  %v3046 = vpop.f32.mrb[0].mxu0
  %v3047 = vadd.f32 %v2929, %v3046
  %3048 = vmatprep.mubr.f32.mxu0 0.0
  %3049 = vmatmul.mubr.f32.gmra.mrb[0].mxu0 %v2414
  %v3050 = vpop.f32.mrb[0].mxu0
  %v3051 = vadd.f32 %v2933, %v3050
  %v3052 = vpop.f32.mrb[0].mxu0
  %v3053 = vadd.f32 %v2935, %v3052
  %3054 = vmatprep.mubr.f32.mxu0 0.0
  %3055 = vmatmul.mubr.f32.gmra.mrb[0].mxu0 %v2616
  %v3056 = vpop.f32.mrb[0].mxu0
  %v3057 = vadd.f32 %v2939, %v3056
  %v3058 = vpop.f32.mrb[0].mxu0
  %v3059 = vadd.f32 %v2941, %v3058
  %3060 = vmatprep.mubr.f32.mxu0 0.0
  %3061 = vmatmul.mubr.f32.gmra.mrb[0].mxu0 %v2952
  %v3062 = vpop.f32.mrb[0].mxu0
  %v3063 = vadd.f32 %v2945, %v3062
  %v3064 = vpop.f32.mrb[0].mxu0
  %v3065 = vadd.f32 %v2947, %v3064
  %3066 = vdwg.mxu0
  %v3067 = vld [vmem:[%s12] sm:$0x3]
  %v3069 = vlaneseq
  %v3070 = vshrl.u32 %v3069, 7
  %v3071 = vsub.s32 0, %v3070
  %v3072 = vrot.slane %v3067, %v3071
  %v3073 = vlaneseq
  %v3074 = vshrl.u32 %v3073, 7
  %v3075 = vsub.s32 1, %v3074
  %v3076 = vrot.slane %v3067, %v3075
  %v3079 = vadd.f32 %v3021, %v3072
  %v3080 = vadd.f32 %v3023, %v3076
  %v3081 = vadd.f32 %v3027, %v3072
  %v3082 = vadd.f32 %v3029, %v3076
  %v3083 = vadd.f32 %v3033, %v3072
  %v3084 = vadd.f32 %v3035, %v3076
  %v3085 = vadd.f32 %v3039, %v3072
  %v3086 = vadd.f32 %v3041, %v3076
  %v3087 = vadd.f32 %v3045, %v3072
  %v3088 = vadd.f32 %v3047, %v3076
  %v3089 = vadd.f32 %v3051, %v3072
  %v3090 = vadd.f32 %v3053, %v3076
  %v3091 = vadd.f32 %v3057, %v3072
  %v3092 = vadd.f32 %v3059, %v3076
  %v3093 = vadd.f32 %v3063, %v3072
  %v3094 = vadd.f32 %v3065, %v3076
  %v3095 = vld [vmem:[%s13] sm:$0xff]
  %v3096 = vld [vmem:[%s13 + $0x8] sm:$0xff]
  %v3097 = vld [vmem:[%s13 + $0x10] sm:$0xff]
  %v3098 = vld [vmem:[%s13 + $0x18] sm:$0xff]
  %v3099 = vld [vmem:[%s14] sm:$0xff]
  %v3100 = vld [vmem:[%s14 + $0x8] sm:$0xff]
  %v3101 = vld [vmem:[%s14 + $0x10] sm:$0xff]
  %v3102 = vld [vmem:[%s14 + $0x18] sm:$0xff]
  %3103 = vmatprep.subr.mxu0 0.0
  %3104 = vmatpush1.msra.mxu0 %v3095
  %3105 = vmatprep.subr.mxu0 0.0
  %3106 = vmatpush1.msra.mxu0 %v3096
  %3107 = vmatprep.subr.mxu0 0.0
  %3108 = vmatpush1.msra.mxu0 %v3097
  %3109 = vmatprep.subr.mxu0 0.0
  %3110 = vmatpush1.msra.mxu0 %v3098
  %3111 = vmatprep.subr.mxu0 0.0
  %3112 = vmatpush1.msra.mxu0 0.0
  %3113 = vmatprep.subr.mxu0 0.0
  %3114 = vmatpush1.msra.mxu0 0.0
  %3115 = vmatprep.subr.mxu0 0.0
  %3116 = vmatpush1.msra.mxu0 0.0
  %3117 = vmatprep.subr.mxu0 0.0
  %3118 = vmatpush1.msra.mxu0 0.0
  %3119 = vmatprep.subr.mxu0 0.0
  %3120 = vmatpush1.msra.mxu0 0.0
  %3121 = vmatprep.subr.mxu0 0.0
  %3122 = vmatpush1.msra.mxu0 0.0
  %3123 = vmatprep.subr.mxu0 0.0
  %3124 = vmatpush1.msra.mxu0 0.0
  %3125 = vmatprep.subr.mxu0 0.0
  %3126 = vmatpush1.msra.mxu0 0.0
  %3127 = vmatprep.subr.mxu0 0.0
  %3128 = vmatpush1.msra.mxu0 0.0
  %3129 = vmatprep.subr.mxu0 0.0
  %3130 = vmatpush1.msra.mxu0 0.0
  %3131 = vmatprep.subr.mxu0 0.0
  %3132 = vmatpush1.msra.mxu0 0.0
  %3133 = vmatprep.subr.mxu0 0.0
  %3134 = vmatpush1.msra.mxu0 0.0
  %3135 = vmatprep.subr.mxu0 0.0
  %3136 = vmatpush1.msra.mxu0 0.0
  %3137 = vmatprep.subr.mxu0 0.0
  %3138 = vmatpush1.msra.mxu0 0.0
  %3139 = vmatprep.subr.mxu0 0.0
  %3140 = vmatpush1.msra.mxu0 0.0
  %3141 = vmatprep.subr.mxu0 0.0
  %3142 = vmatpush1.msra.mxu0 0.0
  %3143 = vmatprep.subr.mxu0 0.0
  %3144 = vmatpush1.msra.mxu0 0.0
  %3145 = vmatprep.subr.mxu0 0.0
  %3146 = vmatpush1.msra.mxu0 0.0
  %3147 = vmatprep.subr.mxu0 0.0
  %3148 = vmatpush1.msra.mxu0 0.0
  %3149 = vmatprep.subr.mxu0 0.0
  %3150 = vmatpush1.msra.mxu0 0.0
  %3151 = vmatprep.subr.mxu0 0.0
  %3152 = vmatpush1.msra.mxu0 0.0
  %3153 = vmatprep.subr.mxu0 0.0
  %3154 = vmatpush1.msra.mxu0 0.0
  %3155 = vmatprep.subr.mxu0 0.0
  %3156 = vmatpush1.msra.mxu0 0.0
  %3157 = vmatprep.subr.mxu0 0.0
  %3158 = vmatpush1.msra.mxu0 0.0
  %3159 = vmatprep.subr.mxu0 0.0
  %3160 = vmatpush1.msra.mxu0 0.0
  %3161 = vmatprep.subr.mxu0 0.0
  %3162 = vmatpush1.msra.mxu0 0.0
  %3163 = vmatprep.subr.mxu0 0.0
  %3164 = vmatpush1.msra.mxu0 0.0
  %3165 = vmatprep.subr.mxu0 0.0
  %3166 = vmatpush1.msra.mxu0 0.0
  %3167 = vmatprep.mubr.f32.mxu0 0.0
  %3168 = vmatmul.mubr.f32.gmra.mrb[0].mxu0 %v1207
  %v3169 = vpop.f32.mrb[0].mxu0
  %v3170 = vadd.f32 0.0, %v3169
  %v3171 = vpop.f32.mrb[0].mxu0
  %3172 = vdwg.mxu0
  %3173 = vmatprep.subr.mxu0 0.0
  %3174 = vmatpush1.msra.mxu0 %v3099
  %3175 = vmatprep.subr.mxu0 0.0
  %3176 = vmatpush1.msra.mxu0 %v3100
  %3177 = vmatprep.subr.mxu0 0.0
  %3178 = vmatpush1.msra.mxu0 %v3101
  %3179 = vmatprep.subr.mxu0 0.0
  %3180 = vmatpush1.msra.mxu0 %v3102
  %3181 = vmatprep.subr.mxu0 0.0
  %3182 = vmatpush1.msra.mxu0 0.0
  %3183 = vmatprep.subr.mxu0 0.0
  %3184 = vmatpush1.msra.mxu0 0.0
  %3185 = vmatprep.subr.mxu0 0.0
  %3186 = vmatpush1.msra.mxu0 0.0
  %3187 = vmatprep.subr.mxu0 0.0
  %3188 = vmatpush1.msra.mxu0 0.0
  %3189 = vmatprep.subr.mxu0 0.0
  %3190 = vmatpush1.msra.mxu0 0.0
  %3191 = vmatprep.subr.mxu0 0.0
  %3192 = vmatpush1.msra.mxu0 0.0
  %3193 = vmatprep.subr.mxu0 0.0
  %3194 = vmatpush1.msra.mxu0 0.0
  %3195 = vmatprep.subr.mxu0 0.0
  %3196 = vmatpush1.msra.mxu0 0.0
  %3197 = vmatprep.subr.mxu0 0.0
  %3198 = vmatpush1.msra.mxu0 0.0
  %3199 = vmatprep.subr.mxu0 0.0
  %3200 = vmatpush1.msra.mxu0 0.0
  %3201 = vmatprep.subr.mxu0 0.0
  %3202 = vmatpush1.msra.mxu0 0.0
  %3203 = vmatprep.subr.mxu0 0.0
  %3204 = vmatpush1.msra.mxu0 0.0
  %3205 = vmatprep.subr.mxu0 0.0
  %3206 = vmatpush1.msra.mxu0 0.0
  %3207 = vmatprep.subr.mxu0 0.0
  %3208 = vmatpush1.msra.mxu0 0.0
  %3209 = vmatprep.subr.mxu0 0.0
  %3210 = vmatpush1.msra.mxu0 0.0
  %3211 = vmatprep.subr.mxu0 0.0
  %3212 = vmatpush1.msra.mxu0 0.0
  %3213 = vmatprep.subr.mxu0 0.0
  %3214 = vmatpush1.msra.mxu0 0.0
  %3215 = vmatprep.subr.mxu0 0.0
  %3216 = vmatpush1.msra.mxu0 0.0
  %3217 = vmatprep.subr.mxu0 0.0
  %3218 = vmatpush1.msra.mxu0 0.0
  %3219 = vmatprep.subr.mxu0 0.0
  %3220 = vmatpush1.msra.mxu0 0.0
  %3221 = vmatprep.subr.mxu0 0.0
  %3222 = vmatpush1.msra.mxu0 0.0
  %3223 = vmatprep.subr.mxu0 0.0
  %3224 = vmatpush1.msra.mxu0 0.0
  %3225 = vmatprep.subr.mxu0 0.0
  %3226 = vmatpush1.msra.mxu0 0.0
  %3227 = vmatprep.subr.mxu0 0.0
  %3228 = vmatpush1.msra.mxu0 0.0
  %3229 = vmatprep.subr.mxu0 0.0
  %3230 = vmatpush1.msra.mxu0 0.0
  %3231 = vmatprep.subr.mxu0 0.0
  %3232 = vmatpush1.msra.mxu0 0.0
  %3233 = vmatprep.subr.mxu0 0.0
  %3234 = vmatpush1.msra.mxu0 0.0
  %3235 = vmatprep.subr.mxu0 0.0
  %3236 = vmatpush1.msra.mxu0 0.0
  %3237 = vmatprep.mubr.f32.mxu0 0.0
  %3238 = vmatmul.mubr.f32.gmra.mrb[0].mxu0 %v1207
  %v3239 = vpop.f32.mrb[0].mxu0
  %v3240 = vadd.f32 0.0, %v3239
  %v3241 = vpop.f32.mrb[0].mxu0
  %3242 = vdwg.mxu0
  %v3243 = vadd.f32 %v3079, %v3170
  %v3244 = vadd.f32 %v3094, %v3240
  %v3245 = vtanh.pop %v3243
  %v3246 = vxor.u32 %v3243, 2147483648
  %v3247 = vmul.f32 %v3246, 1.442695
  %v3248 = vpow.pop %v3247
  %v3249 = vadd.f32 %v3248, 1.0
  %v3250 = vrcp.pop %v3249
  %v3251 = vmul.f32 1.0, %v3250
  %v3252 = vsel %vm717, %v3245, %v3251
  %v3253 = vtanh.pop %v3244
  %v3254 = vxor.u32 %v3244, 2147483648
  %v3255 = vmul.f32 %v3254, 1.442695
  %v3256 = vpow.pop %v3255
  %v3257 = vadd.f32 %v3256, 1.0
  %v3258 = vrcp.pop %v3257
  %v3259 = vmul.f32 1.0, %v3258
  %v3260 = vsel %vm717, %v3253, %v3259
  %v3261 = vmul.f32 %v3252, 0.0
  %3263 = vrot.lane.b32.xlu0 %v3252, 64
  %v3264 = vpop.permute.xlu0 %3263
  %v3266 = vmul.f32 %v3252, %v3264
  %3268 = vrot.lane.b32.xlu0 %v3266, 32
  %v3269 = vpop.permute.xlu0 %3268
  %v3271 = vadd.f32 %v3261, %v3269
  %v3272 = vmul.f32 %v3260, 0.0
  %3274 = vrot.lane.b32.xlu0 %v3260, 64
  %v3275 = vpop.permute.xlu0 %3274
  %v3277 = vmul.f32 %v3260, %v3275
  %3279 = vrot.lane.b32.xlu0 %v3277, 32
  %v3280 = vpop.permute.xlu0 %3279
  %v3282 = vadd.f32 %v3272, %v3280
  %v3283 = vtanh.pop %v3271
  %3285 = vrot.lane.b32.xlu0 %v3283, 64
  %v3286 = vpop.permute.xlu0 %3285
  %v3288 = vmul.f32 %v3252, %v3286
  %v3289 = vtanh.pop %v3282
  %3291 = vrot.lane.b32.xlu0 %v3289, 64
  %v3292 = vpop.permute.xlu0 %3291
  %v3294 = vmul.f32 %v3260, %v3292
  %3296 = vrot.lane.b32.xlu0 %v3288, 32
  %v3297 = vpop.permute.xlu0 %3296
  %v3298 = vsel %vm734, %v3297, 0
  %3300 = vmatprep.subr.mxu0 0.0
  %3301 = vmatpush1.msra.mxu0 %v3095
  %3302 = vmatprep.subr.mxu0 0.0
  %3303 = vmatpush1.msra.mxu0 %v3096
  %3304 = vmatprep.subr.mxu0 0.0
  %3305 = vmatpush1.msra.mxu0 %v3097
  %3306 = vmatprep.subr.mxu0 0.0
  %3307 = vmatpush1.msra.mxu0 %v3098
  %3308 = vmatprep.subr.mxu0 0.0
  %3309 = vmatpush1.msra.mxu0 0.0
  %3310 = vmatprep.subr.mxu0 0.0
  %3311 = vmatpush1.msra.mxu0 0.0
  %3312 = vmatprep.subr.mxu0 0.0
  %3313 = vmatpush1.msra.mxu0 0.0
  %3314 = vmatprep.subr.mxu0 0.0
  %3315 = vmatpush1.msra.mxu0 0.0
  %3316 = vmatprep.subr.mxu0 0.0
  %3317 = vmatpush1.msra.mxu0 0.0
  %3318 = vmatprep.subr.mxu0 0.0
  %3319 = vmatpush1.msra.mxu0 0.0
  %3320 = vmatprep.subr.mxu0 0.0
  %3321 = vmatpush1.msra.mxu0 0.0
  %3322 = vmatprep.subr.mxu0 0.0
  %3323 = vmatpush1.msra.mxu0 0.0
  %3324 = vmatprep.subr.mxu0 0.0
  %3325 = vmatpush1.msra.mxu0 0.0
  %3326 = vmatprep.subr.mxu0 0.0
  %3327 = vmatpush1.msra.mxu0 0.0
  %3328 = vmatprep.subr.mxu0 0.0
  %3329 = vmatpush1.msra.mxu0 0.0
  %3330 = vmatprep.subr.mxu0 0.0
  %3331 = vmatpush1.msra.mxu0 0.0
  %3332 = vmatprep.subr.mxu0 0.0
  %3333 = vmatpush1.msra.mxu0 0.0
  %3334 = vmatprep.subr.mxu0 0.0
  %3335 = vmatpush1.msra.mxu0 0.0
  %3336 = vmatprep.subr.mxu0 0.0
  %3337 = vmatpush1.msra.mxu0 0.0
  %3338 = vmatprep.subr.mxu0 0.0
  %3339 = vmatpush1.msra.mxu0 0.0
  %3340 = vmatprep.subr.mxu0 0.0
  %3341 = vmatpush1.msra.mxu0 0.0
  %3342 = vmatprep.subr.mxu0 0.0
  %3343 = vmatpush1.msra.mxu0 0.0
  %3344 = vmatprep.subr.mxu0 0.0
  %3345 = vmatpush1.msra.mxu0 0.0
  %3346 = vmatprep.subr.mxu0 0.0
  %3347 = vmatpush1.msra.mxu0 0.0
  %3348 = vmatprep.subr.mxu0 0.0
  %3349 = vmatpush1.msra.mxu0 0.0
  %3350 = vmatprep.subr.mxu0 0.0
  %3351 = vmatpush1.msra.mxu0 0.0
  %3352 = vmatprep.subr.mxu0 0.0
  %3353 = vmatpush1.msra.mxu0 0.0
  %3354 = vmatprep.subr.mxu0 0.0
  %3355 = vmatpush1.msra.mxu0 0.0
  %3356 = vmatprep.subr.mxu0 0.0
  %3357 = vmatpush1.msra.mxu0 0.0
  %3358 = vmatprep.subr.mxu0 0.0
  %3359 = vmatpush1.msra.mxu0 0.0
  %3360 = vmatprep.subr.mxu0 0.0
  %3361 = vmatpush1.msra.mxu0 0.0
  %3362 = vmatprep.subr.mxu0 0.0
  %3363 = vmatpush1.msra.mxu0 0.0
  %3364 = vmatprep.mubr.f32.mxu0 0.0
  %3365 = vmatmul.mubr.f32.gmra.mrb[0].mxu0 %v3298
  %v3366 = vpop.f32.mrb[0].mxu0
  %v3367 = vadd.f32 0.0, %v3366
  %v3368 = vpop.f32.mrb[0].mxu0
  %3369 = vdwg.mxu0
  %3371 = vrot.lane.b32.xlu0 %v3294, 32
  %v3372 = vpop.permute.xlu0 %3371
  %v3373 = vsel %vm734, %v3372, 0
  %3375 = vmatprep.subr.mxu0 0.0
  %3376 = vmatpush1.msra.mxu0 %v3099
  %3377 = vmatprep.subr.mxu0 0.0
  %3378 = vmatpush1.msra.mxu0 %v3100
  %3379 = vmatprep.subr.mxu0 0.0
  %3380 = vmatpush1.msra.mxu0 %v3101
  %3381 = vmatprep.subr.mxu0 0.0
  %3382 = vmatpush1.msra.mxu0 %v3102
  %3383 = vmatprep.subr.mxu0 0.0
  %3384 = vmatpush1.msra.mxu0 0.0
  %3385 = vmatprep.subr.mxu0 0.0
  %3386 = vmatpush1.msra.mxu0 0.0
  %3387 = vmatprep.subr.mxu0 0.0
  %3388 = vmatpush1.msra.mxu0 0.0
  %3389 = vmatprep.subr.mxu0 0.0
  %3390 = vmatpush1.msra.mxu0 0.0
  %3391 = vmatprep.subr.mxu0 0.0
  %3392 = vmatpush1.msra.mxu0 0.0
  %3393 = vmatprep.subr.mxu0 0.0
  %3394 = vmatpush1.msra.mxu0 0.0
  %3395 = vmatprep.subr.mxu0 0.0
  %3396 = vmatpush1.msra.mxu0 0.0
  %3397 = vmatprep.subr.mxu0 0.0
  %3398 = vmatpush1.msra.mxu0 0.0
  %3399 = vmatprep.subr.mxu0 0.0
  %3400 = vmatpush1.msra.mxu0 0.0
  %3401 = vmatprep.subr.mxu0 0.0
  %3402 = vmatpush1.msra.mxu0 0.0
  %3403 = vmatprep.subr.mxu0 0.0
  %3404 = vmatpush1.msra.mxu0 0.0
  %3405 = vmatprep.subr.mxu0 0.0
  %3406 = vmatpush1.msra.mxu0 0.0
  %3407 = vmatprep.subr.mxu0 0.0
  %3408 = vmatpush1.msra.mxu0 0.0
  %3409 = vmatprep.subr.mxu0 0.0
  %3410 = vmatpush1.msra.mxu0 0.0
  %3411 = vmatprep.subr.mxu0 0.0
  %3412 = vmatpush1.msra.mxu0 0.0
  %3413 = vmatprep.subr.mxu0 0.0
  %3414 = vmatpush1.msra.mxu0 0.0
  %3415 = vmatprep.subr.mxu0 0.0
  %3416 = vmatpush1.msra.mxu0 0.0
  %3417 = vmatprep.subr.mxu0 0.0
  %3418 = vmatpush1.msra.mxu0 0.0
  %3419 = vmatprep.subr.mxu0 0.0
  %3420 = vmatpush1.msra.mxu0 0.0
  %3421 = vmatprep.subr.mxu0 0.0
  %3422 = vmatpush1.msra.mxu0 0.0
  %3423 = vmatprep.subr.mxu0 0.0
  %3424 = vmatpush1.msra.mxu0 0.0
  %3425 = vmatprep.subr.mxu0 0.0
  %3426 = vmatpush1.msra.mxu0 0.0
  %3427 = vmatprep.subr.mxu0 0.0
  %3428 = vmatpush1.msra.mxu0 0.0
  %3429 = vmatprep.subr.mxu0 0.0
  %3430 = vmatpush1.msra.mxu0 0.0
  %3431 = vmatprep.subr.mxu0 0.0
  %3432 = vmatpush1.msra.mxu0 0.0
  %3433 = vmatprep.subr.mxu0 0.0
  %3434 = vmatpush1.msra.mxu0 0.0
  %3435 = vmatprep.subr.mxu0 0.0
  %3436 = vmatpush1.msra.mxu0 0.0
  %3437 = vmatprep.subr.mxu0 0.0
  %3438 = vmatpush1.msra.mxu0 0.0
  %3439 = vmatprep.mubr.f32.mxu0 0.0
  %3440 = vmatmul.mubr.f32.gmra.mrb[0].mxu0 %v3373
  %v3441 = vpop.f32.mrb[0].mxu0
  %v3442 = vadd.f32 0.0, %v3441
  %v3443 = vpop.f32.mrb[0].mxu0
  %3444 = vdwg.mxu0
  %v3445 = vadd.f32 %v3081, %v3367
  %v3446 = vadd.f32 %v3092, %v3442
  %v3447 = vtanh.pop %v3445
  %v3448 = vxor.u32 %v3445, 2147483648
  %v3449 = vmul.f32 %v3448, 1.442695
  %v3450 = vpow.pop %v3449
  %v3451 = vadd.f32 %v3450, 1.0
  %v3452 = vrcp.pop %v3451
  %v3453 = vmul.f32 1.0, %v3452
  %v3454 = vsel %vm717, %v3447, %v3453
  %v3455 = vtanh.pop %v3446
  %v3456 = vxor.u32 %v3446, 2147483648
  %v3457 = vmul.f32 %v3456, 1.442695
  %v3458 = vpow.pop %v3457
  %v3459 = vadd.f32 %v3458, 1.0
  %v3460 = vrcp.pop %v3459
  %v3461 = vmul.f32 1.0, %v3460
  %v3462 = vsel %vm717, %v3455, %v3461
  %v3463 = vmul.f32 %v3454, %v3271
  %3465 = vrot.lane.b32.xlu0 %v3454, 64
  %v3466 = vpop.permute.xlu0 %3465
  %v3468 = vmul.f32 %v3454, %v3466
  %3470 = vrot.lane.b32.xlu0 %v3468, 32
  %v3471 = vpop.permute.xlu0 %3470
  %v3473 = vadd.f32 %v3463, %v3471
  %v3474 = vmul.f32 %v3462, %v3282
  %3476 = vrot.lane.b32.xlu0 %v3462, 64
  %v3477 = vpop.permute.xlu0 %3476
  %v3479 = vmul.f32 %v3462, %v3477
  %3481 = vrot.lane.b32.xlu0 %v3479, 32
  %v3482 = vpop.permute.xlu0 %3481
  %v3484 = vadd.f32 %v3474, %v3482
  %v3485 = vtanh.pop %v3473
  %3487 = vrot.lane.b32.xlu0 %v3485, 64
  %v3488 = vpop.permute.xlu0 %3487
  %v3490 = vmul.f32 %v3454, %v3488
  %v3491 = vtanh.pop %v3484
  %3493 = vrot.lane.b32.xlu0 %v3491, 64
  %v3494 = vpop.permute.xlu0 %3493
  %v3496 = vmul.f32 %v3462, %v3494
  %3498 = vrot.lane.b32.xlu0 %v3490, 32
  %v3499 = vpop.permute.xlu0 %3498
  %v3500 = vsel %vm734, %v3499, 0
  %3502 = vmatprep.subr.mxu0 0.0
  %3503 = vmatpush1.msra.mxu0 %v3095
  %3504 = vmatprep.subr.mxu0 0.0
  %3505 = vmatpush1.msra.mxu0 %v3096
  %3506 = vmatprep.subr.mxu0 0.0
  %3507 = vmatpush1.msra.mxu0 %v3097
  %3508 = vmatprep.subr.mxu0 0.0
  %3509 = vmatpush1.msra.mxu0 %v3098
  %3510 = vmatprep.subr.mxu0 0.0
  %3511 = vmatpush1.msra.mxu0 0.0
  %3512 = vmatprep.subr.mxu0 0.0
  %3513 = vmatpush1.msra.mxu0 0.0
  %3514 = vmatprep.subr.mxu0 0.0
  %3515 = vmatpush1.msra.mxu0 0.0
  %3516 = vmatprep.subr.mxu0 0.0
  %3517 = vmatpush1.msra.mxu0 0.0
  %3518 = vmatprep.subr.mxu0 0.0
  %3519 = vmatpush1.msra.mxu0 0.0
  %3520 = vmatprep.subr.mxu0 0.0
  %3521 = vmatpush1.msra.mxu0 0.0
  %3522 = vmatprep.subr.mxu0 0.0
  %3523 = vmatpush1.msra.mxu0 0.0
  %3524 = vmatprep.subr.mxu0 0.0
  %3525 = vmatpush1.msra.mxu0 0.0
  %3526 = vmatprep.subr.mxu0 0.0
  %3527 = vmatpush1.msra.mxu0 0.0
  %3528 = vmatprep.subr.mxu0 0.0
  %3529 = vmatpush1.msra.mxu0 0.0
  %3530 = vmatprep.subr.mxu0 0.0
  %3531 = vmatpush1.msra.mxu0 0.0
  %3532 = vmatprep.subr.mxu0 0.0
  %3533 = vmatpush1.msra.mxu0 0.0
  %3534 = vmatprep.subr.mxu0 0.0
  %3535 = vmatpush1.msra.mxu0 0.0
  %3536 = vmatprep.subr.mxu0 0.0
  %3537 = vmatpush1.msra.mxu0 0.0
  %3538 = vmatprep.subr.mxu0 0.0
  %3539 = vmatpush1.msra.mxu0 0.0
  %3540 = vmatprep.subr.mxu0 0.0
  %3541 = vmatpush1.msra.mxu0 0.0
  %3542 = vmatprep.subr.mxu0 0.0
  %3543 = vmatpush1.msra.mxu0 0.0
  %3544 = vmatprep.subr.mxu0 0.0
  %3545 = vmatpush1.msra.mxu0 0.0
  %3546 = vmatprep.subr.mxu0 0.0
  %3547 = vmatpush1.msra.mxu0 0.0
  %3548 = vmatprep.subr.mxu0 0.0
  %3549 = vmatpush1.msra.mxu0 0.0
  %3550 = vmatprep.subr.mxu0 0.0
  %3551 = vmatpush1.msra.mxu0 0.0
  %3552 = vmatprep.subr.mxu0 0.0
  %3553 = vmatpush1.msra.mxu0 0.0
  %3554 = vmatprep.subr.mxu0 0.0
  %3555 = vmatpush1.msra.mxu0 0.0
  %3556 = vmatprep.subr.mxu0 0.0
  %3557 = vmatpush1.msra.mxu0 0.0
  %3558 = vmatprep.subr.mxu0 0.0
  %3559 = vmatpush1.msra.mxu0 0.0
  %3560 = vmatprep.subr.mxu0 0.0
  %3561 = vmatpush1.msra.mxu0 0.0
  %3562 = vmatprep.subr.mxu0 0.0
  %3563 = vmatpush1.msra.mxu0 0.0
  %3564 = vmatprep.subr.mxu0 0.0
  %3565 = vmatpush1.msra.mxu0 0.0
  %3566 = vmatprep.mubr.f32.mxu0 0.0
  %3567 = vmatmul.mubr.f32.gmra.mrb[0].mxu0 %v3500
  %v3568 = vpop.f32.mrb[0].mxu0
  %v3569 = vadd.f32 0.0, %v3568
  %v3570 = vpop.f32.mrb[0].mxu0
  %3571 = vdwg.mxu0
  %3573 = vrot.lane.b32.xlu0 %v3496, 32
  %v3574 = vpop.permute.xlu0 %3573
  %v3575 = vsel %vm734, %v3574, 0
  %3577 = vmatprep.subr.mxu0 0.0
  %3578 = vmatpush1.msra.mxu0 %v3099
  %3579 = vmatprep.subr.mxu0 0.0
  %3580 = vmatpush1.msra.mxu0 %v3100
  %3581 = vmatprep.subr.mxu0 0.0
  %3582 = vmatpush1.msra.mxu0 %v3101
  %3583 = vmatprep.subr.mxu0 0.0
  %3584 = vmatpush1.msra.mxu0 %v3102
  %3585 = vmatprep.subr.mxu0 0.0
  %3586 = vmatpush1.msra.mxu0 0.0
  %3587 = vmatprep.subr.mxu0 0.0
  %3588 = vmatpush1.msra.mxu0 0.0
  %3589 = vmatprep.subr.mxu0 0.0
  %3590 = vmatpush1.msra.mxu0 0.0
  %3591 = vmatprep.subr.mxu0 0.0
  %3592 = vmatpush1.msra.mxu0 0.0
  %3593 = vmatprep.subr.mxu0 0.0
  %3594 = vmatpush1.msra.mxu0 0.0
  %3595 = vmatprep.subr.mxu0 0.0
  %3596 = vmatpush1.msra.mxu0 0.0
  %3597 = vmatprep.subr.mxu0 0.0
  %3598 = vmatpush1.msra.mxu0 0.0
  %3599 = vmatprep.subr.mxu0 0.0
  %3600 = vmatpush1.msra.mxu0 0.0
  %3601 = vmatprep.subr.mxu0 0.0
  %3602 = vmatpush1.msra.mxu0 0.0
  %3603 = vmatprep.subr.mxu0 0.0
  %3604 = vmatpush1.msra.mxu0 0.0
  %3605 = vmatprep.subr.mxu0 0.0
  %3606 = vmatpush1.msra.mxu0 0.0
  %3607 = vmatprep.subr.mxu0 0.0
  %3608 = vmatpush1.msra.mxu0 0.0
  %3609 = vmatprep.subr.mxu0 0.0
  %3610 = vmatpush1.msra.mxu0 0.0
  %3611 = vmatprep.subr.mxu0 0.0
  %3612 = vmatpush1.msra.mxu0 0.0
  %3613 = vmatprep.subr.mxu0 0.0
  %3614 = vmatpush1.msra.mxu0 0.0
  %3615 = vmatprep.subr.mxu0 0.0
  %3616 = vmatpush1.msra.mxu0 0.0
  %3617 = vmatprep.subr.mxu0 0.0
  %3618 = vmatpush1.msra.mxu0 0.0
  %3619 = vmatprep.subr.mxu0 0.0
  %3620 = vmatpush1.msra.mxu0 0.0
  %3621 = vmatprep.subr.mxu0 0.0
  %3622 = vmatpush1.msra.mxu0 0.0
  %3623 = vmatprep.subr.mxu0 0.0
  %3624 = vmatpush1.msra.mxu0 0.0
  %3625 = vmatprep.subr.mxu0 0.0
  %3626 = vmatpush1.msra.mxu0 0.0
  %3627 = vmatprep.subr.mxu0 0.0
  %3628 = vmatpush1.msra.mxu0 0.0
  %3629 = vmatprep.subr.mxu0 0.0
  %3630 = vmatpush1.msra.mxu0 0.0
  %3631 = vmatprep.subr.mxu0 0.0
  %3632 = vmatpush1.msra.mxu0 0.0
  %3633 = vmatprep.subr.mxu0 0.0
  %3634 = vmatpush1.msra.mxu0 0.0
  %3635 = vmatprep.subr.mxu0 0.0
  %3636 = vmatpush1.msra.mxu0 0.0
  %3637 = vmatprep.subr.mxu0 0.0
  %3638 = vmatpush1.msra.mxu0 0.0
  %3639 = vmatprep.subr.mxu0 0.0
  %3640 = vmatpush1.msra.mxu0 0.0
  %3641 = vmatprep.mubr.f32.mxu0 0.0
  %3642 = vmatmul.mubr.f32.gmra.mrb[0].mxu0 %v3575
  %v3643 = vpop.f32.mrb[0].mxu0
  %v3644 = vadd.f32 0.0, %v3643
  %v3645 = vpop.f32.mrb[0].mxu0
  %3646 = vdwg.mxu0
  %v3647 = vadd.f32 %v3083, %v3569
  %v3648 = vadd.f32 %v3090, %v3644
  %v3649 = vtanh.pop %v3647
  %v3650 = vxor.u32 %v3647, 2147483648
  %v3651 = vmul.f32 %v3650, 1.442695
  %v3652 = vpow.pop %v3651
  %v3653 = vadd.f32 %v3652, 1.0
  %v3654 = vrcp.pop %v3653
  %v3655 = vmul.f32 1.0, %v3654
  %v3656 = vsel %vm717, %v3649, %v3655
  %v3657 = vtanh.pop %v3648
  %v3658 = vxor.u32 %v3648, 2147483648
  %v3659 = vmul.f32 %v3658, 1.442695
  %v3660 = vpow.pop %v3659
  %v3661 = vadd.f32 %v3660, 1.0
  %v3662 = vrcp.pop %v3661
  %v3663 = vmul.f32 1.0, %v3662
  %v3664 = vsel %vm717, %v3657, %v3663
  %v3665 = vmul.f32 %v3656, %v3473
  %3667 = vrot.lane.b32.xlu0 %v3656, 64
  %v3668 = vpop.permute.xlu0 %3667
  %v3670 = vmul.f32 %v3656, %v3668
  %3672 = vrot.lane.b32.xlu0 %v3670, 32
  %v3673 = vpop.permute.xlu0 %3672
  %v3675 = vadd.f32 %v3665, %v3673
  %v3676 = vmul.f32 %v3664, %v3484
  %3678 = vrot.lane.b32.xlu0 %v3664, 64
  %v3679 = vpop.permute.xlu0 %3678
  %v3681 = vmul.f32 %v3664, %v3679
  %3683 = vrot.lane.b32.xlu0 %v3681, 32
  %v3684 = vpop.permute.xlu0 %3683
  %v3686 = vadd.f32 %v3676, %v3684
  %v3687 = vtanh.pop %v3675
  %3689 = vrot.lane.b32.xlu0 %v3687, 64
  %v3690 = vpop.permute.xlu0 %3689
  %v3692 = vmul.f32 %v3656, %v3690
  %v3693 = vtanh.pop %v3686
  %3695 = vrot.lane.b32.xlu0 %v3693, 64
  %v3696 = vpop.permute.xlu0 %3695
  %v3698 = vmul.f32 %v3664, %v3696
  %3700 = vrot.lane.b32.xlu0 %v3692, 32
  %v3701 = vpop.permute.xlu0 %3700
  %v3702 = vsel %vm734, %v3701, 0
  %3704 = vmatprep.subr.mxu0 0.0
  %3705 = vmatpush1.msra.mxu0 %v3095
  %3706 = vmatprep.subr.mxu0 0.0
  %3707 = vmatpush1.msra.mxu0 %v3096
  %3708 = vmatprep.subr.mxu0 0.0
  %3709 = vmatpush1.msra.mxu0 %v3097
  %3710 = vmatprep.subr.mxu0 0.0
  %3711 = vmatpush1.msra.mxu0 %v3098
  %3712 = vmatprep.subr.mxu0 0.0
  %3713 = vmatpush1.msra.mxu0 0.0
  %3714 = vmatprep.subr.mxu0 0.0
  %3715 = vmatpush1.msra.mxu0 0.0
  %3716 = vmatprep.subr.mxu0 0.0
  %3717 = vmatpush1.msra.mxu0 0.0
  %3718 = vmatprep.subr.mxu0 0.0
  %3719 = vmatpush1.msra.mxu0 0.0
  %3720 = vmatprep.subr.mxu0 0.0
  %3721 = vmatpush1.msra.mxu0 0.0
  %3722 = vmatprep.subr.mxu0 0.0
  %3723 = vmatpush1.msra.mxu0 0.0
  %3724 = vmatprep.subr.mxu0 0.0
  %3725 = vmatpush1.msra.mxu0 0.0
  %3726 = vmatprep.subr.mxu0 0.0
  %3727 = vmatpush1.msra.mxu0 0.0
  %3728 = vmatprep.subr.mxu0 0.0
  %3729 = vmatpush1.msra.mxu0 0.0
  %3730 = vmatprep.subr.mxu0 0.0
  %3731 = vmatpush1.msra.mxu0 0.0
  %3732 = vmatprep.subr.mxu0 0.0
  %3733 = vmatpush1.msra.mxu0 0.0
  %3734 = vmatprep.subr.mxu0 0.0
  %3735 = vmatpush1.msra.mxu0 0.0
  %3736 = vmatprep.subr.mxu0 0.0
  %3737 = vmatpush1.msra.mxu0 0.0
  %3738 = vmatprep.subr.mxu0 0.0
  %3739 = vmatpush1.msra.mxu0 0.0
  %3740 = vmatprep.subr.mxu0 0.0
  %3741 = vmatpush1.msra.mxu0 0.0
  %3742 = vmatprep.subr.mxu0 0.0
  %3743 = vmatpush1.msra.mxu0 0.0
  %3744 = vmatprep.subr.mxu0 0.0
  %3745 = vmatpush1.msra.mxu0 0.0
  %3746 = vmatprep.subr.mxu0 0.0
  %3747 = vmatpush1.msra.mxu0 0.0
  %3748 = vmatprep.subr.mxu0 0.0
  %3749 = vmatpush1.msra.mxu0 0.0
  %3750 = vmatprep.subr.mxu0 0.0
  %3751 = vmatpush1.msra.mxu0 0.0
  %3752 = vmatprep.subr.mxu0 0.0
  %3753 = vmatpush1.msra.mxu0 0.0
  %3754 = vmatprep.subr.mxu0 0.0
  %3755 = vmatpush1.msra.mxu0 0.0
  %3756 = vmatprep.subr.mxu0 0.0
  %3757 = vmatpush1.msra.mxu0 0.0
  %3758 = vmatprep.subr.mxu0 0.0
  %3759 = vmatpush1.msra.mxu0 0.0
  %3760 = vmatprep.subr.mxu0 0.0
  %3761 = vmatpush1.msra.mxu0 0.0
  %3762 = vmatprep.subr.mxu0 0.0
  %3763 = vmatpush1.msra.mxu0 0.0
  %3764 = vmatprep.subr.mxu0 0.0
  %3765 = vmatpush1.msra.mxu0 0.0
  %3766 = vmatprep.subr.mxu0 0.0
  %3767 = vmatpush1.msra.mxu0 0.0
  %3768 = vmatprep.mubr.f32.mxu0 0.0
  %3769 = vmatmul.mubr.f32.gmra.mrb[0].mxu0 %v3702
  %v3770 = vpop.f32.mrb[0].mxu0
  %v3771 = vadd.f32 0.0, %v3770
  %v3772 = vpop.f32.mrb[0].mxu0
  %3773 = vdwg.mxu0
  %3775 = vrot.lane.b32.xlu0 %v3698, 32
  %v3776 = vpop.permute.xlu0 %3775
  %v3777 = vsel %vm734, %v3776, 0
  %3779 = vmatprep.subr.mxu0 0.0
  %3780 = vmatpush1.msra.mxu0 %v3099
  %3781 = vmatprep.subr.mxu0 0.0
  %3782 = vmatpush1.msra.mxu0 %v3100
  %3783 = vmatprep.subr.mxu0 0.0
  %3784 = vmatpush1.msra.mxu0 %v3101
  %3785 = vmatprep.subr.mxu0 0.0
  %3786 = vmatpush1.msra.mxu0 %v3102
  %3787 = vmatprep.subr.mxu0 0.0
  %3788 = vmatpush1.msra.mxu0 0.0
  %3789 = vmatprep.subr.mxu0 0.0
  %3790 = vmatpush1.msra.mxu0 0.0
  %3791 = vmatprep.subr.mxu0 0.0
  %3792 = vmatpush1.msra.mxu0 0.0
  %3793 = vmatprep.subr.mxu0 0.0
  %3794 = vmatpush1.msra.mxu0 0.0
  %3795 = vmatprep.subr.mxu0 0.0
  %3796 = vmatpush1.msra.mxu0 0.0
  %3797 = vmatprep.subr.mxu0 0.0
  %3798 = vmatpush1.msra.mxu0 0.0
  %3799 = vmatprep.subr.mxu0 0.0
  %3800 = vmatpush1.msra.mxu0 0.0
  %3801 = vmatprep.subr.mxu0 0.0
  %3802 = vmatpush1.msra.mxu0 0.0
  %3803 = vmatprep.subr.mxu0 0.0
  %3804 = vmatpush1.msra.mxu0 0.0
  %3805 = vmatprep.subr.mxu0 0.0
  %3806 = vmatpush1.msra.mxu0 0.0
  %3807 = vmatprep.subr.mxu0 0.0
  %3808 = vmatpush1.msra.mxu0 0.0
  %3809 = vmatprep.subr.mxu0 0.0
  %3810 = vmatpush1.msra.mxu0 0.0
  %3811 = vmatprep.subr.mxu0 0.0
  %3812 = vmatpush1.msra.mxu0 0.0
  %3813 = vmatprep.subr.mxu0 0.0
  %3814 = vmatpush1.msra.mxu0 0.0
  %3815 = vmatprep.subr.mxu0 0.0
  %3816 = vmatpush1.msra.mxu0 0.0
  %3817 = vmatprep.subr.mxu0 0.0
  %3818 = vmatpush1.msra.mxu0 0.0
  %3819 = vmatprep.subr.mxu0 0.0
  %3820 = vmatpush1.msra.mxu0 0.0
  %3821 = vmatprep.subr.mxu0 0.0
  %3822 = vmatpush1.msra.mxu0 0.0
  %3823 = vmatprep.subr.mxu0 0.0
  %3824 = vmatpush1.msra.mxu0 0.0
  %3825 = vmatprep.subr.mxu0 0.0
  %3826 = vmatpush1.msra.mxu0 0.0
  %3827 = vmatprep.subr.mxu0 0.0
  %3828 = vmatpush1.msra.mxu0 0.0
  %3829 = vmatprep.subr.mxu0 0.0
  %3830 = vmatpush1.msra.mxu0 0.0
  %3831 = vmatprep.subr.mxu0 0.0
  %3832 = vmatpush1.msra.mxu0 0.0
  %3833 = vmatprep.subr.mxu0 0.0
  %3834 = vmatpush1.msra.mxu0 0.0
  %3835 = vmatprep.subr.mxu0 0.0
  %3836 = vmatpush1.msra.mxu0 0.0
  %3837 = vmatprep.subr.mxu0 0.0
  %3838 = vmatpush1.msra.mxu0 0.0
  %3839 = vmatprep.subr.mxu0 0.0
  %3840 = vmatpush1.msra.mxu0 0.0
  %3841 = vmatprep.subr.mxu0 0.0
  %3842 = vmatpush1.msra.mxu0 0.0
  %3843 = vmatprep.mubr.f32.mxu0 0.0
  %3844 = vmatmul.mubr.f32.gmra.mrb[0].mxu0 %v3777
  %v3845 = vpop.f32.mrb[0].mxu0
  %v3846 = vadd.f32 0.0, %v3845
  %v3847 = vpop.f32.mrb[0].mxu0
  %3848 = vdwg.mxu0
  %v3849 = vadd.f32 %v3085, %v3771
  %v3850 = vadd.f32 %v3088, %v3846
  %v3851 = vtanh.pop %v3849
  %v3852 = vxor.u32 %v3849, 2147483648
  %v3853 = vmul.f32 %v3852, 1.442695
  %v3854 = vpow.pop %v3853
  %v3855 = vadd.f32 %v3854, 1.0
  %v3856 = vrcp.pop %v3855
  %v3857 = vmul.f32 1.0, %v3856
  %v3858 = vsel %vm717, %v3851, %v3857
  %v3859 = vtanh.pop %v3850
  %v3860 = vxor.u32 %v3850, 2147483648
  %v3861 = vmul.f32 %v3860, 1.442695
  %v3862 = vpow.pop %v3861
  %v3863 = vadd.f32 %v3862, 1.0
  %v3864 = vrcp.pop %v3863
  %v3865 = vmul.f32 1.0, %v3864
  %v3866 = vsel %vm717, %v3859, %v3865
  %v3867 = vmul.f32 %v3858, %v3675
  %3869 = vrot.lane.b32.xlu0 %v3858, 64
  %v3870 = vpop.permute.xlu0 %3869
  %v3872 = vmul.f32 %v3858, %v3870
  %3874 = vrot.lane.b32.xlu0 %v3872, 32
  %v3875 = vpop.permute.xlu0 %3874
  %v3877 = vadd.f32 %v3867, %v3875
  %v3878 = vmul.f32 %v3866, %v3686
  %3880 = vrot.lane.b32.xlu0 %v3866, 64
  %v3881 = vpop.permute.xlu0 %3880
  %v3883 = vmul.f32 %v3866, %v3881
  %3885 = vrot.lane.b32.xlu0 %v3883, 32
  %v3886 = vpop.permute.xlu0 %3885
  %v3888 = vadd.f32 %v3878, %v3886
  %v3889 = vtanh.pop %v3877
  %3891 = vrot.lane.b32.xlu0 %v3889, 64
  %v3892 = vpop.permute.xlu0 %3891
  %v3894 = vmul.f32 %v3858, %v3892
  %v3895 = vtanh.pop %v3888
  %3897 = vrot.lane.b32.xlu0 %v3895, 64
  %v3898 = vpop.permute.xlu0 %3897
  %v3900 = vmul.f32 %v3866, %v3898
  %3902 = vrot.lane.b32.xlu0 %v3894, 32
  %v3903 = vpop.permute.xlu0 %3902
  %v3904 = vsel %vm734, %v3903, 0
  %3906 = vmatprep.subr.mxu0 0.0
  %3907 = vmatpush1.msra.mxu0 %v3095
  %3908 = vmatprep.subr.mxu0 0.0
  %3909 = vmatpush1.msra.mxu0 %v3096
  %3910 = vmatprep.subr.mxu0 0.0
  %3911 = vmatpush1.msra.mxu0 %v3097
  %3912 = vmatprep.subr.mxu0 0.0
  %3913 = vmatpush1.msra.mxu0 %v3098
  %3914 = vmatprep.subr.mxu0 0.0
  %3915 = vmatpush1.msra.mxu0 0.0
  %3916 = vmatprep.subr.mxu0 0.0
  %3917 = vmatpush1.msra.mxu0 0.0
  %3918 = vmatprep.subr.mxu0 0.0
  %3919 = vmatpush1.msra.mxu0 0.0
  %3920 = vmatprep.subr.mxu0 0.0
  %3921 = vmatpush1.msra.mxu0 0.0
  %3922 = vmatprep.subr.mxu0 0.0
  %3923 = vmatpush1.msra.mxu0 0.0
  %3924 = vmatprep.subr.mxu0 0.0
  %3925 = vmatpush1.msra.mxu0 0.0
  %3926 = vmatprep.subr.mxu0 0.0
  %3927 = vmatpush1.msra.mxu0 0.0
  %3928 = vmatprep.subr.mxu0 0.0
  %3929 = vmatpush1.msra.mxu0 0.0
  %3930 = vmatprep.subr.mxu0 0.0
  %3931 = vmatpush1.msra.mxu0 0.0
  %3932 = vmatprep.subr.mxu0 0.0
  %3933 = vmatpush1.msra.mxu0 0.0
  %3934 = vmatprep.subr.mxu0 0.0
  %3935 = vmatpush1.msra.mxu0 0.0
  %3936 = vmatprep.subr.mxu0 0.0
  %3937 = vmatpush1.msra.mxu0 0.0
  %3938 = vmatprep.subr.mxu0 0.0
  %3939 = vmatpush1.msra.mxu0 0.0
  %3940 = vmatprep.subr.mxu0 0.0
  %3941 = vmatpush1.msra.mxu0 0.0
  %3942 = vmatprep.subr.mxu0 0.0
  %3943 = vmatpush1.msra.mxu0 0.0
  %3944 = vmatprep.subr.mxu0 0.0
  %3945 = vmatpush1.msra.mxu0 0.0
  %3946 = vmatprep.subr.mxu0 0.0
  %3947 = vmatpush1.msra.mxu0 0.0
  %3948 = vmatprep.subr.mxu0 0.0
  %3949 = vmatpush1.msra.mxu0 0.0
  %3950 = vmatprep.subr.mxu0 0.0
  %3951 = vmatpush1.msra.mxu0 0.0
  %3952 = vmatprep.subr.mxu0 0.0
  %3953 = vmatpush1.msra.mxu0 0.0
  %3954 = vmatprep.subr.mxu0 0.0
  %3955 = vmatpush1.msra.mxu0 0.0
  %3956 = vmatprep.subr.mxu0 0.0
  %3957 = vmatpush1.msra.mxu0 0.0
  %3958 = vmatprep.subr.mxu0 0.0
  %3959 = vmatpush1.msra.mxu0 0.0
  %3960 = vmatprep.subr.mxu0 0.0
  %3961 = vmatpush1.msra.mxu0 0.0
  %3962 = vmatprep.subr.mxu0 0.0
  %3963 = vmatpush1.msra.mxu0 0.0
  %3964 = vmatprep.subr.mxu0 0.0
  %3965 = vmatpush1.msra.mxu0 0.0
  %3966 = vmatprep.subr.mxu0 0.0
  %3967 = vmatpush1.msra.mxu0 0.0
  %3968 = vmatprep.subr.mxu0 0.0
  %3969 = vmatpush1.msra.mxu0 0.0
  %3970 = vmatprep.mubr.f32.mxu0 0.0
  %3971 = vmatmul.mubr.f32.gmra.mrb[0].mxu0 %v3904
  %v3972 = vpop.f32.mrb[0].mxu0
  %v3973 = vadd.f32 0.0, %v3972
  %v3974 = vpop.f32.mrb[0].mxu0
  %3975 = vdwg.mxu0
  %3977 = vrot.lane.b32.xlu0 %v3900, 32
  %v3978 = vpop.permute.xlu0 %3977
  %v3979 = vsel %vm734, %v3978, 0
  %3981 = vmatprep.subr.mxu0 0.0
  %3982 = vmatpush1.msra.mxu0 %v3099
  %3983 = vmatprep.subr.mxu0 0.0
  %3984 = vmatpush1.msra.mxu0 %v3100
  %3985 = vmatprep.subr.mxu0 0.0
  %3986 = vmatpush1.msra.mxu0 %v3101
  %3987 = vmatprep.subr.mxu0 0.0
  %3988 = vmatpush1.msra.mxu0 %v3102
  %3989 = vmatprep.subr.mxu0 0.0
  %3990 = vmatpush1.msra.mxu0 0.0
  %3991 = vmatprep.subr.mxu0 0.0
  %3992 = vmatpush1.msra.mxu0 0.0
  %3993 = vmatprep.subr.mxu0 0.0
  %3994 = vmatpush1.msra.mxu0 0.0
  %3995 = vmatprep.subr.mxu0 0.0
  %3996 = vmatpush1.msra.mxu0 0.0
  %3997 = vmatprep.subr.mxu0 0.0
  %3998 = vmatpush1.msra.mxu0 0.0
  %3999 = vmatprep.subr.mxu0 0.0
  %4000 = vmatpush1.msra.mxu0 0.0
  %4001 = vmatprep.subr.mxu0 0.0
  %4002 = vmatpush1.msra.mxu0 0.0
  %4003 = vmatprep.subr.mxu0 0.0
  %4004 = vmatpush1.msra.mxu0 0.0
  %4005 = vmatprep.subr.mxu0 0.0
  %4006 = vmatpush1.msra.mxu0 0.0
  %4007 = vmatprep.subr.mxu0 0.0
  %4008 = vmatpush1.msra.mxu0 0.0
  %4009 = vmatprep.subr.mxu0 0.0
  %4010 = vmatpush1.msra.mxu0 0.0
  %4011 = vmatprep.subr.mxu0 0.0
  %4012 = vmatpush1.msra.mxu0 0.0
  %4013 = vmatprep.subr.mxu0 0.0
  %4014 = vmatpush1.msra.mxu0 0.0
  %4015 = vmatprep.subr.mxu0 0.0
  %4016 = vmatpush1.msra.mxu0 0.0
  %4017 = vmatprep.subr.mxu0 0.0
  %4018 = vmatpush1.msra.mxu0 0.0
  %4019 = vmatprep.subr.mxu0 0.0
  %4020 = vmatpush1.msra.mxu0 0.0
  %4021 = vmatprep.subr.mxu0 0.0
  %4022 = vmatpush1.msra.mxu0 0.0
  %4023 = vmatprep.subr.mxu0 0.0
  %4024 = vmatpush1.msra.mxu0 0.0
  %4025 = vmatprep.subr.mxu0 0.0
  %4026 = vmatpush1.msra.mxu0 0.0
  %4027 = vmatprep.subr.mxu0 0.0
  %4028 = vmatpush1.msra.mxu0 0.0
  %4029 = vmatprep.subr.mxu0 0.0
  %4030 = vmatpush1.msra.mxu0 0.0
  %4031 = vmatprep.subr.mxu0 0.0
  %4032 = vmatpush1.msra.mxu0 0.0
  %4033 = vmatprep.subr.mxu0 0.0
  %4034 = vmatpush1.msra.mxu0 0.0
  %4035 = vmatprep.subr.mxu0 0.0
  %4036 = vmatpush1.msra.mxu0 0.0
  %4037 = vmatprep.subr.mxu0 0.0
  %4038 = vmatpush1.msra.mxu0 0.0
  %4039 = vmatprep.subr.mxu0 0.0
  %4040 = vmatpush1.msra.mxu0 0.0
  %4041 = vmatprep.subr.mxu0 0.0
  %4042 = vmatpush1.msra.mxu0 0.0
  %4043 = vmatprep.subr.mxu0 0.0
  %4044 = vmatpush1.msra.mxu0 0.0
  %4045 = vmatprep.mubr.f32.mxu0 0.0
  %4046 = vmatmul.mubr.f32.gmra.mrb[0].mxu0 %v3979
  %v4047 = vpop.f32.mrb[0].mxu0
  %v4048 = vadd.f32 0.0, %v4047
  %v4049 = vpop.f32.mrb[0].mxu0
  %4050 = vdwg.mxu0
  %v4051 = vadd.f32 %v3087, %v3973
  %v4052 = vadd.f32 %v3086, %v4048
  %v4053 = vtanh.pop %v4051
  %v4054 = vxor.u32 %v4051, 2147483648
  %v4055 = vmul.f32 %v4054, 1.442695
  %v4056 = vpow.pop %v4055
  %v4057 = vadd.f32 %v4056, 1.0
  %v4058 = vrcp.pop %v4057
  %v4059 = vmul.f32 1.0, %v4058
  %v4060 = vsel %vm717, %v4053, %v4059
  %v4061 = vtanh.pop %v4052
  %v4062 = vxor.u32 %v4052, 2147483648
  %v4063 = vmul.f32 %v4062, 1.442695
  %v4064 = vpow.pop %v4063
  %v4065 = vadd.f32 %v4064, 1.0
  %v4066 = vrcp.pop %v4065
  %v4067 = vmul.f32 1.0, %v4066
  %v4068 = vsel %vm717, %v4061, %v4067
  %v4069 = vmul.f32 %v4060, %v3877
  %4071 = vrot.lane.b32.xlu0 %v4060, 64
  %v4072 = vpop.permute.xlu0 %4071
  %v4074 = vmul.f32 %v4060, %v4072
  %4076 = vrot.lane.b32.xlu0 %v4074, 32
  %v4077 = vpop.permute.xlu0 %4076
  %v4079 = vadd.f32 %v4069, %v4077
  %v4080 = vmul.f32 %v4068, %v3888
  %4082 = vrot.lane.b32.xlu0 %v4068, 64
  %v4083 = vpop.permute.xlu0 %4082
  %v4085 = vmul.f32 %v4068, %v4083
  %4087 = vrot.lane.b32.xlu0 %v4085, 32
  %v4088 = vpop.permute.xlu0 %4087
  %v4090 = vadd.f32 %v4080, %v4088
  %v4091 = vtanh.pop %v4079
  %4093 = vrot.lane.b32.xlu0 %v4091, 64
  %v4094 = vpop.permute.xlu0 %4093
  %v4096 = vmul.f32 %v4060, %v4094
  %v4097 = vtanh.pop %v4090
  %4099 = vrot.lane.b32.xlu0 %v4097, 64
  %v4100 = vpop.permute.xlu0 %4099
  %v4102 = vmul.f32 %v4068, %v4100
  %4104 = vrot.lane.b32.xlu0 %v4096, 32
  %v4105 = vpop.permute.xlu0 %4104
  %v4106 = vsel %vm734, %v4105, 0
  %4108 = vmatprep.subr.mxu0 0.0
  %4109 = vmatpush1.msra.mxu0 %v3095
  %4110 = vmatprep.subr.mxu0 0.0
  %4111 = vmatpush1.msra.mxu0 %v3096
  %4112 = vmatprep.subr.mxu0 0.0
  %4113 = vmatpush1.msra.mxu0 %v3097
  %4114 = vmatprep.subr.mxu0 0.0
  %4115 = vmatpush1.msra.mxu0 %v3098
  %4116 = vmatprep.subr.mxu0 0.0
  %4117 = vmatpush1.msra.mxu0 0.0
  %4118 = vmatprep.subr.mxu0 0.0
  %4119 = vmatpush1.msra.mxu0 0.0
  %4120 = vmatprep.subr.mxu0 0.0
  %4121 = vmatpush1.msra.mxu0 0.0
  %4122 = vmatprep.subr.mxu0 0.0
  %4123 = vmatpush1.msra.mxu0 0.0
  %4124 = vmatprep.subr.mxu0 0.0
  %4125 = vmatpush1.msra.mxu0 0.0
  %4126 = vmatprep.subr.mxu0 0.0
  %4127 = vmatpush1.msra.mxu0 0.0
  %4128 = vmatprep.subr.mxu0 0.0
  %4129 = vmatpush1.msra.mxu0 0.0
  %4130 = vmatprep.subr.mxu0 0.0
  %4131 = vmatpush1.msra.mxu0 0.0
  %4132 = vmatprep.subr.mxu0 0.0
  %4133 = vmatpush1.msra.mxu0 0.0
  %4134 = vmatprep.subr.mxu0 0.0
  %4135 = vmatpush1.msra.mxu0 0.0
  %4136 = vmatprep.subr.mxu0 0.0
  %4137 = vmatpush1.msra.mxu0 0.0
  %4138 = vmatprep.subr.mxu0 0.0
  %4139 = vmatpush1.msra.mxu0 0.0
  %4140 = vmatprep.subr.mxu0 0.0
  %4141 = vmatpush1.msra.mxu0 0.0
  %4142 = vmatprep.subr.mxu0 0.0
  %4143 = vmatpush1.msra.mxu0 0.0
  %4144 = vmatprep.subr.mxu0 0.0
  %4145 = vmatpush1.msra.mxu0 0.0
  %4146 = vmatprep.subr.mxu0 0.0
  %4147 = vmatpush1.msra.mxu0 0.0
  %4148 = vmatprep.subr.mxu0 0.0
  %4149 = vmatpush1.msra.mxu0 0.0
  %4150 = vmatprep.subr.mxu0 0.0
  %4151 = vmatpush1.msra.mxu0 0.0
  %4152 = vmatprep.subr.mxu0 0.0
  %4153 = vmatpush1.msra.mxu0 0.0
  %4154 = vmatprep.subr.mxu0 0.0
  %4155 = vmatpush1.msra.mxu0 0.0
  %4156 = vmatprep.subr.mxu0 0.0
  %4157 = vmatpush1.msra.mxu0 0.0
  %4158 = vmatprep.subr.mxu0 0.0
  %4159 = vmatpush1.msra.mxu0 0.0
  %4160 = vmatprep.subr.mxu0 0.0
  %4161 = vmatpush1.msra.mxu0 0.0
  %4162 = vmatprep.subr.mxu0 0.0
  %4163 = vmatpush1.msra.mxu0 0.0
  %4164 = vmatprep.subr.mxu0 0.0
  %4165 = vmatpush1.msra.mxu0 0.0
  %4166 = vmatprep.subr.mxu0 0.0
  %4167 = vmatpush1.msra.mxu0 0.0
  %4168 = vmatprep.subr.mxu0 0.0
  %4169 = vmatpush1.msra.mxu0 0.0
  %4170 = vmatprep.subr.mxu0 0.0
  %4171 = vmatpush1.msra.mxu0 0.0
  %4172 = vmatprep.mubr.f32.mxu0 0.0
  %4173 = vmatmul.mubr.f32.gmra.mrb[0].mxu0 %v4106
  %v4174 = vpop.f32.mrb[0].mxu0
  %v4175 = vadd.f32 0.0, %v4174
  %v4176 = vpop.f32.mrb[0].mxu0
  %4177 = vdwg.mxu0
  %4179 = vrot.lane.b32.xlu0 %v4102, 32
  %v4180 = vpop.permute.xlu0 %4179
  %v4181 = vsel %vm734, %v4180, 0
  %4183 = vmatprep.subr.mxu0 0.0
  %4184 = vmatpush1.msra.mxu0 %v3099
  %4185 = vmatprep.subr.mxu0 0.0
  %4186 = vmatpush1.msra.mxu0 %v3100
  %4187 = vmatprep.subr.mxu0 0.0
  %4188 = vmatpush1.msra.mxu0 %v3101
  %4189 = vmatprep.subr.mxu0 0.0
  %4190 = vmatpush1.msra.mxu0 %v3102
  %4191 = vmatprep.subr.mxu0 0.0
  %4192 = vmatpush1.msra.mxu0 0.0
  %4193 = vmatprep.subr.mxu0 0.0
  %4194 = vmatpush1.msra.mxu0 0.0
  %4195 = vmatprep.subr.mxu0 0.0
  %4196 = vmatpush1.msra.mxu0 0.0
  %4197 = vmatprep.subr.mxu0 0.0
  %4198 = vmatpush1.msra.mxu0 0.0
  %4199 = vmatprep.subr.mxu0 0.0
  %4200 = vmatpush1.msra.mxu0 0.0
  %4201 = vmatprep.subr.mxu0 0.0
  %4202 = vmatpush1.msra.mxu0 0.0
  %4203 = vmatprep.subr.mxu0 0.0
  %4204 = vmatpush1.msra.mxu0 0.0
  %4205 = vmatprep.subr.mxu0 0.0
  %4206 = vmatpush1.msra.mxu0 0.0
  %4207 = vmatprep.subr.mxu0 0.0
  %4208 = vmatpush1.msra.mxu0 0.0
  %4209 = vmatprep.subr.mxu0 0.0
  %4210 = vmatpush1.msra.mxu0 0.0
  %4211 = vmatprep.subr.mxu0 0.0
  %4212 = vmatpush1.msra.mxu0 0.0
  %4213 = vmatprep.subr.mxu0 0.0
  %4214 = vmatpush1.msra.mxu0 0.0
  %4215 = vmatprep.subr.mxu0 0.0
  %4216 = vmatpush1.msra.mxu0 0.0
  %4217 = vmatprep.subr.mxu0 0.0
  %4218 = vmatpush1.msra.mxu0 0.0
  %4219 = vmatprep.subr.mxu0 0.0
  %4220 = vmatpush1.msra.mxu0 0.0
  %4221 = vmatprep.subr.mxu0 0.0
  %4222 = vmatpush1.msra.mxu0 0.0
  %4223 = vmatprep.subr.mxu0 0.0
  %4224 = vmatpush1.msra.mxu0 0.0
  %4225 = vmatprep.subr.mxu0 0.0
  %4226 = vmatpush1.msra.mxu0 0.0
  %4227 = vmatprep.subr.mxu0 0.0
  %4228 = vmatpush1.msra.mxu0 0.0
  %4229 = vmatprep.subr.mxu0 0.0
  %4230 = vmatpush1.msra.mxu0 0.0
  %4231 = vmatprep.subr.mxu0 0.0
  %4232 = vmatpush1.msra.mxu0 0.0
  %4233 = vmatprep.subr.mxu0 0.0
  %4234 = vmatpush1.msra.mxu0 0.0
  %4235 = vmatprep.subr.mxu0 0.0
  %4236 = vmatpush1.msra.mxu0 0.0
  %4237 = vmatprep.subr.mxu0 0.0
  %4238 = vmatpush1.msra.mxu0 0.0
  %4239 = vmatprep.subr.mxu0 0.0
  %4240 = vmatpush1.msra.mxu0 0.0
  %4241 = vmatprep.subr.mxu0 0.0
  %4242 = vmatpush1.msra.mxu0 0.0
  %4243 = vmatprep.subr.mxu0 0.0
  %4244 = vmatpush1.msra.mxu0 0.0
  %4245 = vmatprep.subr.mxu0 0.0
  %4246 = vmatpush1.msra.mxu0 0.0
  %4247 = vmatprep.mubr.f32.mxu0 0.0
  %4248 = vmatmul.mubr.f32.gmra.mrb[0].mxu0 %v4181
  %v4249 = vpop.f32.mrb[0].mxu0
  %v4250 = vadd.f32 0.0, %v4249
  %v4251 = vpop.f32.mrb[0].mxu0
  %4252 = vdwg.mxu0
  %v4253 = vadd.f32 %v3089, %v4175
  %v4254 = vadd.f32 %v3084, %v4250
  %v4255 = vtanh.pop %v4253
  %v4256 = vxor.u32 %v4253, 2147483648
  %v4257 = vmul.f32 %v4256, 1.442695
  %v4258 = vpow.pop %v4257
  %v4259 = vadd.f32 %v4258, 1.0
  %v4260 = vrcp.pop %v4259
  %v4261 = vmul.f32 1.0, %v4260
  %v4262 = vsel %vm717, %v4255, %v4261
  %v4263 = vtanh.pop %v4254
  %v4264 = vxor.u32 %v4254, 2147483648
  %v4265 = vmul.f32 %v4264, 1.442695
  %v4266 = vpow.pop %v4265
  %v4267 = vadd.f32 %v4266, 1.0
  %v4268 = vrcp.pop %v4267
  %v4269 = vmul.f32 1.0, %v4268
  %v4270 = vsel %vm717, %v4263, %v4269
  %v4271 = vmul.f32 %v4262, %v4079
  %4273 = vrot.lane.b32.xlu0 %v4262, 64
  %v4274 = vpop.permute.xlu0 %4273
  %v4276 = vmul.f32 %v4262, %v4274
  %4278 = vrot.lane.b32.xlu0 %v4276, 32
  %v4279 = vpop.permute.xlu0 %4278
  %v4281 = vadd.f32 %v4271, %v4279
  %v4282 = vmul.f32 %v4270, %v4090
  %4284 = vrot.lane.b32.xlu0 %v4270, 64
  %v4285 = vpop.permute.xlu0 %4284
  %v4287 = vmul.f32 %v4270, %v4285
  %4289 = vrot.lane.b32.xlu0 %v4287, 32
  %v4290 = vpop.permute.xlu0 %4289
  %v4292 = vadd.f32 %v4282, %v4290
  %v4293 = vtanh.pop %v4281
  %4295 = vrot.lane.b32.xlu0 %v4293, 64
  %v4296 = vpop.permute.xlu0 %4295
  %v4298 = vmul.f32 %v4262, %v4296
  %v4299 = vtanh.pop %v4292
  %4301 = vrot.lane.b32.xlu0 %v4299, 64
  %v4302 = vpop.permute.xlu0 %4301
  %v4304 = vmul.f32 %v4270, %v4302
  %4306 = vrot.lane.b32.xlu0 %v4298, 32
  %v4307 = vpop.permute.xlu0 %4306
  %v4308 = vsel %vm734, %v4307, 0
  %4310 = vmatprep.subr.mxu0 0.0
  %4311 = vmatpush1.msra.mxu0 %v3095
  %4312 = vmatprep.subr.mxu0 0.0
  %4313 = vmatpush1.msra.mxu0 %v3096
  %4314 = vmatprep.subr.mxu0 0.0
  %4315 = vmatpush1.msra.mxu0 %v3097
  %4316 = vmatprep.subr.mxu0 0.0
  %4317 = vmatpush1.msra.mxu0 %v3098
  %4318 = vmatprep.subr.mxu0 0.0
  %4319 = vmatpush1.msra.mxu0 0.0
  %4320 = vmatprep.subr.mxu0 0.0
  %4321 = vmatpush1.msra.mxu0 0.0
  %4322 = vmatprep.subr.mxu0 0.0
  %4323 = vmatpush1.msra.mxu0 0.0
  %4324 = vmatprep.subr.mxu0 0.0
  %4325 = vmatpush1.msra.mxu0 0.0
  %4326 = vmatprep.subr.mxu0 0.0
  %4327 = vmatpush1.msra.mxu0 0.0
  %4328 = vmatprep.subr.mxu0 0.0
  %4329 = vmatpush1.msra.mxu0 0.0
  %4330 = vmatprep.subr.mxu0 0.0
  %4331 = vmatpush1.msra.mxu0 0.0
  %4332 = vmatprep.subr.mxu0 0.0
  %4333 = vmatpush1.msra.mxu0 0.0
  %4334 = vmatprep.subr.mxu0 0.0
  %4335 = vmatpush1.msra.mxu0 0.0
  %4336 = vmatprep.subr.mxu0 0.0
  %4337 = vmatpush1.msra.mxu0 0.0
  %4338 = vmatprep.subr.mxu0 0.0
  %4339 = vmatpush1.msra.mxu0 0.0
  %4340 = vmatprep.subr.mxu0 0.0
  %4341 = vmatpush1.msra.mxu0 0.0
  %4342 = vmatprep.subr.mxu0 0.0
  %4343 = vmatpush1.msra.mxu0 0.0
  %4344 = vmatprep.subr.mxu0 0.0
  %4345 = vmatpush1.msra.mxu0 0.0
  %4346 = vmatprep.subr.mxu0 0.0
  %4347 = vmatpush1.msra.mxu0 0.0
  %4348 = vmatprep.subr.mxu0 0.0
  %4349 = vmatpush1.msra.mxu0 0.0
  %4350 = vmatprep.subr.mxu0 0.0
  %4351 = vmatpush1.msra.mxu0 0.0
  %4352 = vmatprep.subr.mxu0 0.0
  %4353 = vmatpush1.msra.mxu0 0.0
  %4354 = vmatprep.subr.mxu0 0.0
  %4355 = vmatpush1.msra.mxu0 0.0
  %4356 = vmatprep.subr.mxu0 0.0
  %4357 = vmatpush1.msra.mxu0 0.0
  %4358 = vmatprep.subr.mxu0 0.0
  %4359 = vmatpush1.msra.mxu0 0.0
  %4360 = vmatprep.subr.mxu0 0.0
  %4361 = vmatpush1.msra.mxu0 0.0
  %4362 = vmatprep.subr.mxu0 0.0
  %4363 = vmatpush1.msra.mxu0 0.0
  %4364 = vmatprep.subr.mxu0 0.0
  %4365 = vmatpush1.msra.mxu0 0.0
  %4366 = vmatprep.subr.mxu0 0.0
  %4367 = vmatpush1.msra.mxu0 0.0
  %4368 = vmatprep.subr.mxu0 0.0
  %4369 = vmatpush1.msra.mxu0 0.0
  %4370 = vmatprep.subr.mxu0 0.0
  %4371 = vmatpush1.msra.mxu0 0.0
  %4372 = vmatprep.subr.mxu0 0.0
  %4373 = vmatpush1.msra.mxu0 0.0
  %4374 = vmatprep.mubr.f32.mxu0 0.0
  %4375 = vmatmul.mubr.f32.gmra.mrb[0].mxu0 %v4308
  %v4376 = vpop.f32.mrb[0].mxu0
  %v4377 = vadd.f32 0.0, %v4376
  %v4378 = vpop.f32.mrb[0].mxu0
  %4379 = vdwg.mxu0
  %4381 = vrot.lane.b32.xlu0 %v4304, 32
  %v4382 = vpop.permute.xlu0 %4381
  %v4383 = vsel %vm734, %v4382, 0
  %4385 = vmatprep.subr.mxu0 0.0
  %4386 = vmatpush1.msra.mxu0 %v3099
  %4387 = vmatprep.subr.mxu0 0.0
  %4388 = vmatpush1.msra.mxu0 %v3100
  %4389 = vmatprep.subr.mxu0 0.0
  %4390 = vmatpush1.msra.mxu0 %v3101
  %4391 = vmatprep.subr.mxu0 0.0
  %4392 = vmatpush1.msra.mxu0 %v3102
  %4393 = vmatprep.subr.mxu0 0.0
  %4394 = vmatpush1.msra.mxu0 0.0
  %4395 = vmatprep.subr.mxu0 0.0
  %4396 = vmatpush1.msra.mxu0 0.0
  %4397 = vmatprep.subr.mxu0 0.0
  %4398 = vmatpush1.msra.mxu0 0.0
  %4399 = vmatprep.subr.mxu0 0.0
  %4400 = vmatpush1.msra.mxu0 0.0
  %4401 = vmatprep.subr.mxu0 0.0
  %4402 = vmatpush1.msra.mxu0 0.0
  %4403 = vmatprep.subr.mxu0 0.0
  %4404 = vmatpush1.msra.mxu0 0.0
  %4405 = vmatprep.subr.mxu0 0.0
  %4406 = vmatpush1.msra.mxu0 0.0
  %4407 = vmatprep.subr.mxu0 0.0
  %4408 = vmatpush1.msra.mxu0 0.0
  %4409 = vmatprep.subr.mxu0 0.0
  %4410 = vmatpush1.msra.mxu0 0.0
  %4411 = vmatprep.subr.mxu0 0.0
  %4412 = vmatpush1.msra.mxu0 0.0
  %4413 = vmatprep.subr.mxu0 0.0
  %4414 = vmatpush1.msra.mxu0 0.0
  %4415 = vmatprep.subr.mxu0 0.0
  %4416 = vmatpush1.msra.mxu0 0.0
  %4417 = vmatprep.subr.mxu0 0.0
  %4418 = vmatpush1.msra.mxu0 0.0
  %4419 = vmatprep.subr.mxu0 0.0
  %4420 = vmatpush1.msra.mxu0 0.0
  %4421 = vmatprep.subr.mxu0 0.0
  %4422 = vmatpush1.msra.mxu0 0.0
  %4423 = vmatprep.subr.mxu0 0.0
  %4424 = vmatpush1.msra.mxu0 0.0
  %4425 = vmatprep.subr.mxu0 0.0
  %4426 = vmatpush1.msra.mxu0 0.0
  %4427 = vmatprep.subr.mxu0 0.0
  %4428 = vmatpush1.msra.mxu0 0.0
  %4429 = vmatprep.subr.mxu0 0.0
  %4430 = vmatpush1.msra.mxu0 0.0
  %4431 = vmatprep.subr.mxu0 0.0
  %4432 = vmatpush1.msra.mxu0 0.0
  %4433 = vmatprep.subr.mxu0 0.0
  %4434 = vmatpush1.msra.mxu0 0.0
  %4435 = vmatprep.subr.mxu0 0.0
  %4436 = vmatpush1.msra.mxu0 0.0
  %4437 = vmatprep.subr.mxu0 0.0
  %4438 = vmatpush1.msra.mxu0 0.0
  %4439 = vmatprep.subr.mxu0 0.0
  %4440 = vmatpush1.msra.mxu0 0.0
  %4441 = vmatprep.subr.mxu0 0.0
  %4442 = vmatpush1.msra.mxu0 0.0
  %4443 = vmatprep.subr.mxu0 0.0
  %4444 = vmatpush1.msra.mxu0 0.0
  %4445 = vmatprep.subr.mxu0 0.0
  %4446 = vmatpush1.msra.mxu0 0.0
  %4447 = vmatprep.subr.mxu0 0.0
  %4448 = vmatpush1.msra.mxu0 0.0
  %4449 = vmatprep.mubr.f32.mxu0 0.0
  %4450 = vmatmul.mubr.f32.gmra.mrb[0].mxu0 %v4383
  %v4451 = vpop.f32.mrb[0].mxu0
  %v4452 = vadd.f32 0.0, %v4451
  %v4453 = vpop.f32.mrb[0].mxu0
  %4454 = vdwg.mxu0
  %v4455 = vadd.f32 %v3091, %v4377
  %v4456 = vadd.f32 %v3082, %v4452
  %v4457 = vtanh.pop %v4455
  %v4458 = vxor.u32 %v4455, 2147483648
  %v4459 = vmul.f32 %v4458, 1.442695
  %v4460 = vpow.pop %v4459
  %v4461 = vadd.f32 %v4460, 1.0
  %v4462 = vrcp.pop %v4461
  %v4463 = vmul.f32 1.0, %v4462
  %v4464 = vsel %vm717, %v4457, %v4463
  %v4465 = vtanh.pop %v4456
  %v4466 = vxor.u32 %v4456, 2147483648
  %v4467 = vmul.f32 %v4466, 1.442695
  %v4468 = vpow.pop %v4467
  %v4469 = vadd.f32 %v4468, 1.0
  %v4470 = vrcp.pop %v4469
  %v4471 = vmul.f32 1.0, %v4470
  %v4472 = vsel %vm717, %v4465, %v4471
  %v4473 = vmul.f32 %v4464, %v4281
  %4475 = vrot.lane.b32.xlu0 %v4464, 64
  %v4476 = vpop.permute.xlu0 %4475
  %v4478 = vmul.f32 %v4464, %v4476
  %4480 = vrot.lane.b32.xlu0 %v4478, 32
  %v4481 = vpop.permute.xlu0 %4480
  %v4483 = vadd.f32 %v4473, %v4481
  %v4484 = vmul.f32 %v4472, %v4292
  %4486 = vrot.lane.b32.xlu0 %v4472, 64
  %v4487 = vpop.permute.xlu0 %4486
  %v4489 = vmul.f32 %v4472, %v4487
  %4491 = vrot.lane.b32.xlu0 %v4489, 32
  %v4492 = vpop.permute.xlu0 %4491
  %v4494 = vadd.f32 %v4484, %v4492
  %v4495 = vtanh.pop %v4483
  %4497 = vrot.lane.b32.xlu0 %v4495, 64
  %v4498 = vpop.permute.xlu0 %4497
  %v4500 = vmul.f32 %v4464, %v4498
  %v4501 = vtanh.pop %v4494
  %4503 = vrot.lane.b32.xlu0 %v4501, 64
  %v4504 = vpop.permute.xlu0 %4503
  %v4506 = vmul.f32 %v4472, %v4504
  %4508 = vrot.lane.b32.xlu0 %v4500, 32
  %v4509 = vpop.permute.xlu0 %4508
  %v4510 = vsel %vm734, %v4509, 0
  %4512 = vmatprep.subr.mxu0 0.0
  %4513 = vmatpush1.msra.mxu0 %v3095
  %4514 = vmatprep.subr.mxu0 0.0
  %4515 = vmatpush1.msra.mxu0 %v3096
  %4516 = vmatprep.subr.mxu0 0.0
  %4517 = vmatpush1.msra.mxu0 %v3097
  %4518 = vmatprep.subr.mxu0 0.0
  %4519 = vmatpush1.msra.mxu0 %v3098
  %4520 = vmatprep.subr.mxu0 0.0
  %4521 = vmatpush1.msra.mxu0 0.0
  %4522 = vmatprep.subr.mxu0 0.0
  %4523 = vmatpush1.msra.mxu0 0.0
  %4524 = vmatprep.subr.mxu0 0.0
  %4525 = vmatpush1.msra.mxu0 0.0
  %4526 = vmatprep.subr.mxu0 0.0
  %4527 = vmatpush1.msra.mxu0 0.0
  %4528 = vmatprep.subr.mxu0 0.0
  %4529 = vmatpush1.msra.mxu0 0.0
  %4530 = vmatprep.subr.mxu0 0.0
  %4531 = vmatpush1.msra.mxu0 0.0
  %4532 = vmatprep.subr.mxu0 0.0
  %4533 = vmatpush1.msra.mxu0 0.0
  %4534 = vmatprep.subr.mxu0 0.0
  %4535 = vmatpush1.msra.mxu0 0.0
  %4536 = vmatprep.subr.mxu0 0.0
  %4537 = vmatpush1.msra.mxu0 0.0
  %4538 = vmatprep.subr.mxu0 0.0
  %4539 = vmatpush1.msra.mxu0 0.0
  %4540 = vmatprep.subr.mxu0 0.0
  %4541 = vmatpush1.msra.mxu0 0.0
  %4542 = vmatprep.subr.mxu0 0.0
  %4543 = vmatpush1.msra.mxu0 0.0
  %4544 = vmatprep.subr.mxu0 0.0
  %4545 = vmatpush1.msra.mxu0 0.0
  %4546 = vmatprep.subr.mxu0 0.0
  %4547 = vmatpush1.msra.mxu0 0.0
  %4548 = vmatprep.subr.mxu0 0.0
  %4549 = vmatpush1.msra.mxu0 0.0
  %4550 = vmatprep.subr.mxu0 0.0
  %4551 = vmatpush1.msra.mxu0 0.0
  %4552 = vmatprep.subr.mxu0 0.0
  %4553 = vmatpush1.msra.mxu0 0.0
  %4554 = vmatprep.subr.mxu0 0.0
  %4555 = vmatpush1.msra.mxu0 0.0
  %4556 = vmatprep.subr.mxu0 0.0
  %4557 = vmatpush1.msra.mxu0 0.0
  %4558 = vmatprep.subr.mxu0 0.0
  %4559 = vmatpush1.msra.mxu0 0.0
  %4560 = vmatprep.subr.mxu0 0.0
  %4561 = vmatpush1.msra.mxu0 0.0
  %4562 = vmatprep.subr.mxu0 0.0
  %4563 = vmatpush1.msra.mxu0 0.0
  %4564 = vmatprep.subr.mxu0 0.0
  %4565 = vmatpush1.msra.mxu0 0.0
  %4566 = vmatprep.subr.mxu0 0.0
  %4567 = vmatpush1.msra.mxu0 0.0
  %4568 = vmatprep.subr.mxu0 0.0
  %4569 = vmatpush1.msra.mxu0 0.0
  %4570 = vmatprep.subr.mxu0 0.0
  %4571 = vmatpush1.msra.mxu0 0.0
  %4572 = vmatprep.subr.mxu0 0.0
  %4573 = vmatpush1.msra.mxu0 0.0
  %4574 = vmatprep.subr.mxu0 0.0
  %4575 = vmatpush1.msra.mxu0 0.0
  %4576 = vmatprep.mubr.f32.mxu0 0.0
  %4577 = vmatmul.mubr.f32.gmra.mrb[0].mxu0 %v4510
  %v4578 = vpop.f32.mrb[0].mxu0
  %v4579 = vadd.f32 0.0, %v4578
  %v4580 = vpop.f32.mrb[0].mxu0
  %4581 = vdwg.mxu0
  %4583 = vrot.lane.b32.xlu0 %v4506, 32
  %v4584 = vpop.permute.xlu0 %4583
  %v4585 = vsel %vm734, %v4584, 0
  %4587 = vmatprep.subr.mxu0 0.0
  %4588 = vmatpush1.msra.mxu0 %v3099
  %4589 = vmatprep.subr.mxu0 0.0
  %4590 = vmatpush1.msra.mxu0 %v3100
  %4591 = vmatprep.subr.mxu0 0.0
  %4592 = vmatpush1.msra.mxu0 %v3101
  %4593 = vmatprep.subr.mxu0 0.0
  %4594 = vmatpush1.msra.mxu0 %v3102
  %4595 = vmatprep.subr.mxu0 0.0
  %4596 = vmatpush1.msra.mxu0 0.0
  %4597 = vmatprep.subr.mxu0 0.0
  %4598 = vmatpush1.msra.mxu0 0.0
  %4599 = vmatprep.subr.mxu0 0.0
  %4600 = vmatpush1.msra.mxu0 0.0
  %4601 = vmatprep.subr.mxu0 0.0
  %4602 = vmatpush1.msra.mxu0 0.0
  %4603 = vmatprep.subr.mxu0 0.0
  %4604 = vmatpush1.msra.mxu0 0.0
  %4605 = vmatprep.subr.mxu0 0.0
  %4606 = vmatpush1.msra.mxu0 0.0
  %4607 = vmatprep.subr.mxu0 0.0
  %4608 = vmatpush1.msra.mxu0 0.0
  %4609 = vmatprep.subr.mxu0 0.0
  %4610 = vmatpush1.msra.mxu0 0.0
  %4611 = vmatprep.subr.mxu0 0.0
  %4612 = vmatpush1.msra.mxu0 0.0
  %4613 = vmatprep.subr.mxu0 0.0
  %4614 = vmatpush1.msra.mxu0 0.0
  %4615 = vmatprep.subr.mxu0 0.0
  %4616 = vmatpush1.msra.mxu0 0.0
  %4617 = vmatprep.subr.mxu0 0.0
  %4618 = vmatpush1.msra.mxu0 0.0
  %4619 = vmatprep.subr.mxu0 0.0
  %4620 = vmatpush1.msra.mxu0 0.0
  %4621 = vmatprep.subr.mxu0 0.0
  %4622 = vmatpush1.msra.mxu0 0.0
  %4623 = vmatprep.subr.mxu0 0.0
  %4624 = vmatpush1.msra.mxu0 0.0
  %4625 = vmatprep.subr.mxu0 0.0
  %4626 = vmatpush1.msra.mxu0 0.0
  %4627 = vmatprep.subr.mxu0 0.0
  %4628 = vmatpush1.msra.mxu0 0.0
  %4629 = vmatprep.subr.mxu0 0.0
  %4630 = vmatpush1.msra.mxu0 0.0
  %4631 = vmatprep.subr.mxu0 0.0
  %4632 = vmatpush1.msra.mxu0 0.0
  %4633 = vmatprep.subr.mxu0 0.0
  %4634 = vmatpush1.msra.mxu0 0.0
  %4635 = vmatprep.subr.mxu0 0.0
  %4636 = vmatpush1.msra.mxu0 0.0
  %4637 = vmatprep.subr.mxu0 0.0
  %4638 = vmatpush1.msra.mxu0 0.0
  %4639 = vmatprep.subr.mxu0 0.0
  %4640 = vmatpush1.msra.mxu0 0.0
  %4641 = vmatprep.subr.mxu0 0.0
  %4642 = vmatpush1.msra.mxu0 0.0
  %4643 = vmatprep.subr.mxu0 0.0
  %4644 = vmatpush1.msra.mxu0 0.0
  %4645 = vmatprep.subr.mxu0 0.0
  %4646 = vmatpush1.msra.mxu0 0.0
  %4647 = vmatprep.subr.mxu0 0.0
  %4648 = vmatpush1.msra.mxu0 0.0
  %4649 = vmatprep.subr.mxu0 0.0
  %4650 = vmatpush1.msra.mxu0 0.0
  %4651 = vmatprep.mubr.f32.mxu0 0.0
  %4652 = vmatmul.mubr.f32.gmra.mrb[0].mxu0 %v4585
  %v4653 = vpop.f32.mrb[0].mxu0
  %v4654 = vadd.f32 0.0, %v4653
  %v4655 = vpop.f32.mrb[0].mxu0
  %4656 = vdwg.mxu0
  %v4657 = vadd.f32 %v3093, %v4579
  %v4658 = vadd.f32 %v3080, %v4654
  %v4659 = vtanh.pop %v4657
  %v4660 = vxor.u32 %v4657, 2147483648
  %v4661 = vmul.f32 %v4660, 1.442695
  %v4662 = vpow.pop %v4661
  %v4663 = vadd.f32 %v4662, 1.0
  %v4664 = vrcp.pop %v4663
  %v4665 = vmul.f32 1.0, %v4664
  %v4666 = vsel %vm717, %v4659, %v4665
  %v4667 = vtanh.pop %v4658
  %v4668 = vxor.u32 %v4658, 2147483648
  %v4669 = vmul.f32 %v4668, 1.442695
  %v4670 = vpow.pop %v4669
  %v4671 = vadd.f32 %v4670, 1.0
  %v4672 = vrcp.pop %v4671
  %v4673 = vmul.f32 1.0, %v4672
  %v4674 = vsel %vm717, %v4667, %v4673
  %v4675 = vmul.f32 %v4666, %v4483
  %4677 = vrot.lane.b32.xlu0 %v4666, 64
  %v4678 = vpop.permute.xlu0 %4677
  %v4680 = vmul.f32 %v4666, %v4678
  %4682 = vrot.lane.b32.xlu0 %v4680, 32
  %v4683 = vpop.permute.xlu0 %4682
  %v4685 = vadd.f32 %v4675, %v4683
  %v4686 = vmul.f32 %v4674, %v4494
  %4688 = vrot.lane.b32.xlu0 %v4674, 64
  %v4689 = vpop.permute.xlu0 %4688
  %v4691 = vmul.f32 %v4674, %v4689
  %4693 = vrot.lane.b32.xlu0 %v4691, 32
  %v4694 = vpop.permute.xlu0 %4693
  %v4696 = vadd.f32 %v4686, %v4694
  %v4697 = vtanh.pop %v4685
  %4699 = vrot.lane.b32.xlu0 %v4697, 64
  %v4700 = vpop.permute.xlu0 %4699
  %v4702 = vmul.f32 %v4666, %v4700
  %v4703 = vtanh.pop %v4696
  %4705 = vrot.lane.b32.xlu0 %v4703, 64
  %v4706 = vpop.permute.xlu0 %4705
  %v4708 = vmul.f32 %v4674, %v4706
  %v4709 = vld [vmem:[%s15] sm:$0xff]
  %v4710 = vld [vmem:[%s15 + $0x8] sm:$0xff]
  %v4711 = vld [vmem:[%s15 + $0x10] sm:$0xff]
  %v4712 = vld [vmem:[%s15 + $0x18] sm:$0xff]
  %v4713 = vld [vmem:[%s15 + $0x20] sm:$0xff]
  %v4714 = vld [vmem:[%s15 + $0x28] sm:$0xff]
  %v4715 = vld [vmem:[%s15 + $0x30] sm:$0xff]
  %v4716 = vld [vmem:[%s15 + $0x38] sm:$0xff]
  %v4717 = vld [vmem:[%s15 + $0x40] sm:$0xff]
  %v4718 = vld [vmem:[%s15 + $0x48] sm:$0xff]
  %v4719 = vld [vmem:[%s15 + $0x50] sm:$0xff]
  %v4720 = vld [vmem:[%s15 + $0x58] sm:$0xff]
  %v4721 = vld [vmem:[%s15 + $0x60] sm:$0xff]
  %v4722 = vld [vmem:[%s15 + $0x68] sm:$0xff]
  %v4723 = vld [vmem:[%s15 + $0x70] sm:$0xff]
  %v4724 = vld [vmem:[%s15 + $0x78] sm:$0xff]
  %4726 = vrot.lane.b32.xlu0 %v4708, 32
  %v4727 = vpop.permute.xlu0 %4726
  %v4728 = vsel %vm734, %v4727, 0
  %4730 = vmatprep.subr.mxu0 %v4718
  %4731 = vmatpush1.msra.mxu0 %v4717
  %4732 = vmatprep.subr.mxu0 %v4720
  %4733 = vmatpush1.msra.mxu0 %v4719
  %4734 = vmatprep.subr.mxu0 %v4722
  %4735 = vmatpush1.msra.mxu0 %v4721
  %4736 = vmatprep.subr.mxu0 %v4724
  %4737 = vmatpush1.msra.mxu0 %v4723
  %4738 = vmatprep.subr.mxu0 0.0
  %4739 = vmatpush1.msra.mxu0 0.0
  %4740 = vmatprep.subr.mxu0 0.0
  %4741 = vmatpush1.msra.mxu0 0.0
  %4742 = vmatprep.subr.mxu0 0.0
  %4743 = vmatpush1.msra.mxu0 0.0
  %4744 = vmatprep.subr.mxu0 0.0
  %4745 = vmatpush1.msra.mxu0 0.0
  %4746 = vmatprep.subr.mxu0 0.0
  %4747 = vmatpush1.msra.mxu0 0.0
  %4748 = vmatprep.subr.mxu0 0.0
  %4749 = vmatpush1.msra.mxu0 0.0
  %4750 = vmatprep.subr.mxu0 0.0
  %4751 = vmatpush1.msra.mxu0 0.0
  %4752 = vmatprep.subr.mxu0 0.0
  %4753 = vmatpush1.msra.mxu0 0.0
  %4754 = vmatprep.subr.mxu0 0.0
  %4755 = vmatpush1.msra.mxu0 0.0
  %4756 = vmatprep.subr.mxu0 0.0
  %4757 = vmatpush1.msra.mxu0 0.0
  %4758 = vmatprep.subr.mxu0 0.0
  %4759 = vmatpush1.msra.mxu0 0.0
  %4760 = vmatprep.subr.mxu0 0.0
  %4761 = vmatpush1.msra.mxu0 0.0
  %4762 = vmatprep.subr.mxu0 0.0
  %4763 = vmatpush1.msra.mxu0 0.0
  %4764 = vmatprep.subr.mxu0 0.0
  %4765 = vmatpush1.msra.mxu0 0.0
  %4766 = vmatprep.subr.mxu0 0.0
  %4767 = vmatpush1.msra.mxu0 0.0
  %4768 = vmatprep.subr.mxu0 0.0
  %4769 = vmatpush1.msra.mxu0 0.0
  %4770 = vmatprep.subr.mxu0 0.0
  %4771 = vmatpush1.msra.mxu0 0.0
  %4772 = vmatprep.subr.mxu0 0.0
  %4773 = vmatpush1.msra.mxu0 0.0
  %4774 = vmatprep.subr.mxu0 0.0
  %4775 = vmatpush1.msra.mxu0 0.0
  %4776 = vmatprep.subr.mxu0 0.0
  %4777 = vmatpush1.msra.mxu0 0.0
  %4778 = vmatprep.subr.mxu0 0.0
  %4779 = vmatpush1.msra.mxu0 0.0
  %4780 = vmatprep.subr.mxu0 0.0
  %4781 = vmatpush1.msra.mxu0 0.0
  %4782 = vmatprep.subr.mxu0 0.0
  %4783 = vmatpush1.msra.mxu0 0.0
  %4784 = vmatprep.subr.mxu0 0.0
  %4785 = vmatpush1.msra.mxu0 0.0
  %4786 = vmatprep.subr.mxu0 0.0
  %4787 = vmatpush1.msra.mxu0 0.0
  %4788 = vmatprep.subr.mxu0 0.0
  %4789 = vmatpush1.msra.mxu0 0.0
  %4790 = vmatprep.subr.mxu0 0.0
  %4791 = vmatpush1.msra.mxu0 0.0
  %4792 = vmatprep.subr.mxu0 0.0
  %4793 = vmatpush1.msra.mxu0 0.0
  %4794 = vmatprep.mubr.f32.mxu0 0.0
  %4795 = vmatmul.mubr.f32.gmra.mrb[0].mxu0 %v4728
  %v4796 = vpop.f32.mrb[0].mxu0
  %v4797 = vadd.f32 0.0, %v4796
  %v4798 = vpop.f32.mrb[0].mxu0
  %v4799 = vadd.f32 0.0, %v4798
  %4800 = vmatprep.mubr.f32.mxu0 0.0
  %4801 = vmatmul.mubr.f32.gmra.mrb[0].mxu0 %v4585
  %v4802 = vpop.f32.mrb[0].mxu0
  %v4803 = vadd.f32 0.0, %v4802
  %v4804 = vpop.f32.mrb[0].mxu0
  %v4805 = vadd.f32 0.0, %v4804
  %4806 = vmatprep.mubr.f32.mxu0 0.0
  %4807 = vmatmul.mubr.f32.gmra.mrb[0].mxu0 %v4383
  %v4808 = vpop.f32.mrb[0].mxu0
  %v4809 = vadd.f32 0.0, %v4808
  %v4810 = vpop.f32.mrb[0].mxu0
  %v4811 = vadd.f32 0.0, %v4810
  %4812 = vmatprep.mubr.f32.mxu0 0.0
  %4813 = vmatmul.mubr.f32.gmra.mrb[0].mxu0 %v4181
  %v4814 = vpop.f32.mrb[0].mxu0
  %v4815 = vadd.f32 0.0, %v4814
  %v4816 = vpop.f32.mrb[0].mxu0
  %v4817 = vadd.f32 0.0, %v4816
  %4818 = vmatprep.mubr.f32.mxu0 0.0
  %4819 = vmatmul.mubr.f32.gmra.mrb[0].mxu0 %v3979
  %v4820 = vpop.f32.mrb[0].mxu0
  %v4821 = vadd.f32 0.0, %v4820
  %v4822 = vpop.f32.mrb[0].mxu0
  %v4823 = vadd.f32 0.0, %v4822
  %4824 = vmatprep.mubr.f32.mxu0 0.0
  %4825 = vmatmul.mubr.f32.gmra.mrb[0].mxu0 %v3777
  %v4826 = vpop.f32.mrb[0].mxu0
  %v4827 = vadd.f32 0.0, %v4826
  %v4828 = vpop.f32.mrb[0].mxu0
  %v4829 = vadd.f32 0.0, %v4828
  %4830 = vmatprep.mubr.f32.mxu0 0.0
  %4831 = vmatmul.mubr.f32.gmra.mrb[0].mxu0 %v3575
  %v4832 = vpop.f32.mrb[0].mxu0
  %v4833 = vadd.f32 0.0, %v4832
  %v4834 = vpop.f32.mrb[0].mxu0
  %v4835 = vadd.f32 0.0, %v4834
  %4836 = vmatprep.mubr.f32.mxu0 0.0
  %4837 = vmatmul.mubr.f32.gmra.mrb[0].mxu0 %v3373
  %v4838 = vpop.f32.mrb[0].mxu0
  %v4839 = vadd.f32 0.0, %v4838
  %v4840 = vpop.f32.mrb[0].mxu0
  %v4841 = vadd.f32 0.0, %v4840
  %4842 = vdwg.mxu0
  %4844 = vrot.lane.b32.xlu0 %v4702, 32
  %v4845 = vpop.permute.xlu0 %4844
  %v4846 = vsel %vm734, %v4845, 0
  %4848 = vmatprep.subr.mxu0 %v4710
  %4849 = vmatpush1.msra.mxu0 %v4709
  %4850 = vmatprep.subr.mxu0 %v4712
  %4851 = vmatpush1.msra.mxu0 %v4711
  %4852 = vmatprep.subr.mxu0 %v4714
  %4853 = vmatpush1.msra.mxu0 %v4713
  %4854 = vmatprep.subr.mxu0 %v4716
  %4855 = vmatpush1.msra.mxu0 %v4715
  %4856 = vmatprep.subr.mxu0 0.0
  %4857 = vmatpush1.msra.mxu0 0.0
  %4858 = vmatprep.subr.mxu0 0.0
  %4859 = vmatpush1.msra.mxu0 0.0
  %4860 = vmatprep.subr.mxu0 0.0
  %4861 = vmatpush1.msra.mxu0 0.0
  %4862 = vmatprep.subr.mxu0 0.0
  %4863 = vmatpush1.msra.mxu0 0.0
  %4864 = vmatprep.subr.mxu0 0.0
  %4865 = vmatpush1.msra.mxu0 0.0
  %4866 = vmatprep.subr.mxu0 0.0
  %4867 = vmatpush1.msra.mxu0 0.0
  %4868 = vmatprep.subr.mxu0 0.0
  %4869 = vmatpush1.msra.mxu0 0.0
  %4870 = vmatprep.subr.mxu0 0.0
  %4871 = vmatpush1.msra.mxu0 0.0
  %4872 = vmatprep.subr.mxu0 0.0
  %4873 = vmatpush1.msra.mxu0 0.0
  %4874 = vmatprep.subr.mxu0 0.0
  %4875 = vmatpush1.msra.mxu0 0.0
  %4876 = vmatprep.subr.mxu0 0.0
  %4877 = vmatpush1.msra.mxu0 0.0
  %4878 = vmatprep.subr.mxu0 0.0
  %4879 = vmatpush1.msra.mxu0 0.0
  %4880 = vmatprep.subr.mxu0 0.0
  %4881 = vmatpush1.msra.mxu0 0.0
  %4882 = vmatprep.subr.mxu0 0.0
  %4883 = vmatpush1.msra.mxu0 0.0
  %4884 = vmatprep.subr.mxu0 0.0
  %4885 = vmatpush1.msra.mxu0 0.0
  %4886 = vmatprep.subr.mxu0 0.0
  %4887 = vmatpush1.msra.mxu0 0.0
  %4888 = vmatprep.subr.mxu0 0.0
  %4889 = vmatpush1.msra.mxu0 0.0
  %4890 = vmatprep.subr.mxu0 0.0
  %4891 = vmatpush1.msra.mxu0 0.0
  %4892 = vmatprep.subr.mxu0 0.0
  %4893 = vmatpush1.msra.mxu0 0.0
  %4894 = vmatprep.subr.mxu0 0.0
  %4895 = vmatpush1.msra.mxu0 0.0
  %4896 = vmatprep.subr.mxu0 0.0
  %4897 = vmatpush1.msra.mxu0 0.0
  %4898 = vmatprep.subr.mxu0 0.0
  %4899 = vmatpush1.msra.mxu0 0.0
  %4900 = vmatprep.subr.mxu0 0.0
  %4901 = vmatpush1.msra.mxu0 0.0
  %4902 = vmatprep.subr.mxu0 0.0
  %4903 = vmatpush1.msra.mxu0 0.0
  %4904 = vmatprep.subr.mxu0 0.0
  %4905 = vmatpush1.msra.mxu0 0.0
  %4906 = vmatprep.subr.mxu0 0.0
  %4907 = vmatpush1.msra.mxu0 0.0
  %4908 = vmatprep.subr.mxu0 0.0
  %4909 = vmatpush1.msra.mxu0 0.0
  %4910 = vmatprep.subr.mxu0 0.0
  %4911 = vmatpush1.msra.mxu0 0.0
  %4912 = vmatprep.mubr.f32.mxu0 0.0
  %4913 = vmatmul.mubr.f32.gmra.mrb[0].mxu0 %v3298
  %v4914 = vpop.f32.mrb[0].mxu0
  %v4915 = vadd.f32 %v4797, %v4914
  %v4916 = vpop.f32.mrb[0].mxu0
  %v4917 = vadd.f32 %v4799, %v4916
  %4918 = vmatprep.mubr.f32.mxu0 0.0
  %4919 = vmatmul.mubr.f32.gmra.mrb[0].mxu0 %v3500
  %v4920 = vpop.f32.mrb[0].mxu0
  %v4921 = vadd.f32 %v4803, %v4920
  %v4922 = vpop.f32.mrb[0].mxu0
  %v4923 = vadd.f32 %v4805, %v4922
  %4924 = vmatprep.mubr.f32.mxu0 0.0
  %4925 = vmatmul.mubr.f32.gmra.mrb[0].mxu0 %v3702
  %v4926 = vpop.f32.mrb[0].mxu0
  %v4927 = vadd.f32 %v4809, %v4926
  %v4928 = vpop.f32.mrb[0].mxu0
  %v4929 = vadd.f32 %v4811, %v4928
  %4930 = vmatprep.mubr.f32.mxu0 0.0
  %4931 = vmatmul.mubr.f32.gmra.mrb[0].mxu0 %v3904
  %v4932 = vpop.f32.mrb[0].mxu0
  %v4933 = vadd.f32 %v4815, %v4932
  %v4934 = vpop.f32.mrb[0].mxu0
  %v4935 = vadd.f32 %v4817, %v4934
  %4936 = vmatprep.mubr.f32.mxu0 0.0
  %4937 = vmatmul.mubr.f32.gmra.mrb[0].mxu0 %v4106
  %v4938 = vpop.f32.mrb[0].mxu0
  %v4939 = vadd.f32 %v4821, %v4938
  %v4940 = vpop.f32.mrb[0].mxu0
  %v4941 = vadd.f32 %v4823, %v4940
  %4942 = vmatprep.mubr.f32.mxu0 0.0
  %4943 = vmatmul.mubr.f32.gmra.mrb[0].mxu0 %v4308
  %v4944 = vpop.f32.mrb[0].mxu0
  %v4945 = vadd.f32 %v4827, %v4944
  %v4946 = vpop.f32.mrb[0].mxu0
  %v4947 = vadd.f32 %v4829, %v4946
  %4948 = vmatprep.mubr.f32.mxu0 0.0
  %4949 = vmatmul.mubr.f32.gmra.mrb[0].mxu0 %v4510
  %v4950 = vpop.f32.mrb[0].mxu0
  %v4951 = vadd.f32 %v4833, %v4950
  %v4952 = vpop.f32.mrb[0].mxu0
  %v4953 = vadd.f32 %v4835, %v4952
  %4954 = vmatprep.mubr.f32.mxu0 0.0
  %4955 = vmatmul.mubr.f32.gmra.mrb[0].mxu0 %v4846
  %v4956 = vpop.f32.mrb[0].mxu0
  %v4957 = vadd.f32 %v4839, %v4956
  %v4958 = vpop.f32.mrb[0].mxu0
  %v4959 = vadd.f32 %v4841, %v4958
  %4960 = vdwg.mxu0
  %v4961 = vld [vmem:[%s16] sm:$0x3]
  %v4963 = vlaneseq
  %v4964 = vshrl.u32 %v4963, 7
  %v4965 = vsub.s32 0, %v4964
  %v4966 = vrot.slane %v4961, %v4965
  %v4967 = vlaneseq
  %v4968 = vshrl.u32 %v4967, 7
  %v4969 = vsub.s32 1, %v4968
  %v4970 = vrot.slane %v4961, %v4969
  %v4973 = vadd.f32 %v4915, %v4966
  %v4974 = vadd.f32 %v4917, %v4970
  %v4975 = vadd.f32 %v4921, %v4966
  %v4976 = vadd.f32 %v4923, %v4970
  %v4977 = vadd.f32 %v4927, %v4966
  %v4978 = vadd.f32 %v4929, %v4970
  %v4979 = vadd.f32 %v4933, %v4966
  %v4980 = vadd.f32 %v4935, %v4970
  %v4981 = vadd.f32 %v4939, %v4966
  %v4982 = vadd.f32 %v4941, %v4970
  %v4983 = vadd.f32 %v4945, %v4966
  %v4984 = vadd.f32 %v4947, %v4970
  %v4985 = vadd.f32 %v4951, %v4966
  %v4986 = vadd.f32 %v4953, %v4970
  %v4987 = vadd.f32 %v4957, %v4966
  %v4988 = vadd.f32 %v4959, %v4970
  %4989 = vst [vmem:[%s17] sm:$0xff] %v4973
  %4990 = vst [vmem:[%s17 + $0x8] sm:$0xff] %v4974
  %4991 = vst [vmem:[%s17 + $0x10] sm:$0xff] %v4975
  %4992 = vst [vmem:[%s17 + $0x18] sm:$0xff] %v4976
  %4993 = vst [vmem:[%s17 + $0x20] sm:$0xff] %v4977
  %4994 = vst [vmem:[%s17 + $0x28] sm:$0xff] %v4978
  %4995 = vst [vmem:[%s17 + $0x30] sm:$0xff] %v4979
  %4996 = vst [vmem:[%s17 + $0x38] sm:$0xff] %v4980
  %4997 = vst [vmem:[%s17 + $0x40] sm:$0xff] %v4981
  %4998 = vst [vmem:[%s17 + $0x48] sm:$0xff] %v4982
  %4999 = vst [vmem:[%s17 + $0x50] sm:$0xff] %v4983
  %5000 = vst [vmem:[%s17 + $0x58] sm:$0xff] %v4984
  %5001 = vst [vmem:[%s17 + $0x60] sm:$0xff] %v4985
  %5002 = vst [vmem:[%s17 + $0x68] sm:$0xff] %v4986
  %5003 = vst [vmem:[%s17 + $0x70] sm:$0xff] %v4987
  %5004 = vst [vmem:[%s17 + $0x78] sm:$0xff] %v4988
  // Predicated region
  $region70: #{forward_pallas.1} parent=0 // pred_check
    _
  $region71: #{forward_pallas.1} parent=0 // pred_check_branch
    %5006 = sbr.rel (0) target = $region73
  $region72: #{forward_pallas.1} parent=0 // pred_region
    _
  $region73: #{forward_pallas.1} parent=0 // pred_fallthru
    _
  // Predicated region
  $region74: #{forward_pallas.1} parent=0 // pred_check
    _
  $region75: #{forward_pallas.1} parent=0 // pred_check_branch
    %5008 = sbr.rel (0) target = $region77
  $region76: #{forward_pallas.1} parent=0 // pred_region
    _
  $region77: #{forward_pallas.1} parent=0 // pred_fallthru
    _

</llo_original>
